<compile_context>
chip_gen: v6e
topology: v6e:2x2x1
jax: 0.10.0
libtpu: 0.0.40
codegen_flags: <defaults>
</compile_context>

<pallas_src>
import math
import functools
import numpy as np
import jax
import jax.numpy as jnp
from jax import lax
from jax.experimental import pallas as pl
from jax.experimental.pallas import tpu as pltpu


def _cdiv(a, b):
    return (a + b - 1) // b


def _layer_norm(x, gamma, beta, eps=1e-5):
    mu = jnp.mean(x, axis=-1, keepdims=True)
    var = jnp.mean((x - mu) ** 2, axis=-1, keepdims=True)
    return (x - mu) * lax.rsqrt(var + eps) * gamma + beta


def _transformer_kernel(x_ref, pe_ref,
                        wq_ref, bq_ref, wk_ref, bk_ref, wv_ref, bv_ref,
                        wo_ref, bo_ref, g1_ref, be1_ref,
                        w1_ref, b1_ref, w2_ref, b2_ref, g2_ref, be2_ref,
                        wl_ref, bl_ref, out_ref,
                        *, num_layer, nhead, bt):
    S, D = pe_ref.shape
    hd = D // nhead
    M = bt * S
    bf16 = jnp.bfloat16

    # positional encoding (dropout == identity in eval mode)
    x = x_ref[...] + pe_ref[...][None]                  # [Bt, S, D] f32
    x2 = x.reshape(M, D)                                # flatten -> MXU-friendly M

    def layer_body(l, x2):
        # ---- multi-head self attention ----
        # weights pre-transposed (x @ W); 1/sqrt(hd) already folded into wq/bq
        xb = x2.astype(bf16)
        q = jnp.dot(xb, wq_ref[l], preferred_element_type=jnp.float32) + bq_ref[l]
        k = jnp.dot(xb, wk_ref[l], preferred_element_type=jnp.float32) + bk_ref[l]
        v = jnp.dot(xb, wv_ref[l], preferred_element_type=jnp.float32) + bv_ref[l]
        q3 = q.reshape(bt, S, D)
        k3 = k.reshape(bt, S, D)
        v3 = v.reshape(bt, S, D)

        heads = []
        for h in range(nhead):                          # static -> unrolled
            qh = q3[:, :, h * hd:(h + 1) * hd].astype(bf16)   # [Bt, S, hd]
            kh = k3[:, :, h * hd:(h + 1) * hd].astype(bf16)
            vh = v3[:, :, h * hd:(h + 1) * hd].astype(bf16)
            s = jnp.einsum('bqd,bkd->bqk', qh, kh,
                           preferred_element_type=jnp.float32)   # [Bt, S, S] f32
            s = s - jnp.max(s, axis=-1, keepdims=True)
            p = jnp.exp(s)
            p = p * pl.reciprocal(jnp.sum(p, axis=-1, keepdims=True), approx=True)
            heads.append(jnp.einsum('bqk,bkd->bqd', p.astype(bf16), vh,
                                    preferred_element_type=jnp.float32))
        attn = heads[0] if nhead == 1 else jnp.concatenate(heads, axis=-1)
        # one K=D output projection instead of H small K=hd matmuls
        attn2 = jnp.dot(attn.reshape(M, D).astype(bf16), wo_ref[l],
                        preferred_element_type=jnp.float32) + bo_ref[l]
        x2 = _layer_norm(x2 + attn2, g1_ref[l], be1_ref[l])

        # ---- ReLU feed-forward ----
        h1 = jnp.dot(x2.astype(bf16), w1_ref[l],
                     preferred_element_type=jnp.float32) + b1_ref[l]
        h1 = jnp.maximum(h1, 0.0)
        h2 = jnp.dot(h1.astype(bf16), w2_ref[l],
                     preferred_element_type=jnp.float32) + b2_ref[l]
        return _layer_norm(x2 + h2, g2_ref[l], be2_ref[l])

    x2 = lax.fori_loop(0, num_layer, layer_body, x2)

    # ---- sum over sequence + classification head ----
    pooled = jnp.sum(x2.reshape(bt, S, D), axis=1)                 # [Bt, D] f32
    logits = jnp.dot(pooled.astype(bf16), wl_ref[...],
                     preferred_element_type=jnp.float32) + bl_ref[...]
    out_ref[...] = logits[:, None, :]                              # (Bt, 1, OUT_pad)


def prepare_params(params, *, nhead):
    """PyTorch-layout params -> kernel layout (pre-transposed, scale-folded,
    q/k/v split, bf16 weights, [L,1,*] biases for dynamic layer indexing,
    lane-padded label head)."""
    pe, wqkv, bqkv, wo, bo, g1, be1, w1, b1, w2, b2, g2, be2, wl, bl = params
    L, _, D = wqkv.shape
    DFF = w1.shape[1]
    OUT = wl.shape[0]
    hd = D // nhead
    scale = 1.0 / math.sqrt(hd)
    bf16 = jnp.bfloat16

    wq = (jnp.transpose(wqkv[:, 0:D, :], (0, 2, 1)) * scale).astype(bf16)  # [L,D,D]
    wk = jnp.transpose(wqkv[:, D:2 * D, :], (0, 2, 1)).astype(bf16)
    wv = jnp.transpose(wqkv[:, 2 * D:3 * D, :], (0, 2, 1)).astype(bf16)
    bq = (bqkv[:, 0:D] * scale).reshape(L, 1, D)                           # f32
    bk = bqkv[:, D:2 * D].reshape(L, 1, D)
    bv = bqkv[:, 2 * D:3 * D].reshape(L, 1, D)
    wo_t = jnp.transpose(wo, (0, 2, 1)).astype(bf16)                       # [L,D,D]
    bo3 = bo.reshape(L, 1, D)
    w1t = jnp.transpose(w1, (0, 2, 1)).astype(bf16)                        # [L,D,DFF]
    b13 = b1.reshape(L, 1, DFF)
    w2t = jnp.transpose(w2, (0, 2, 1)).astype(bf16)                        # [L,DFF,D]
    b23 = b2.reshape(L, 1, D)
    g13, be13 = g1.reshape(L, 1, D), be1.reshape(L, 1, D)
    g23, be23 = g2.reshape(L, 1, D), be2.reshape(L, 1, D)

    out_pad = _cdiv(OUT, 128) * 128                                        # lane-dense head
    wlt = wl.T                                                             # [D, OUT]
    blp = bl
    if out_pad != OUT:
        wlt = jnp.pad(wlt, ((0, 0), (0, out_pad - OUT)))
        blp = jnp.pad(bl, (0, out_pad - OUT))
    wlt = wlt.astype(bf16)
    bl2 = blp.reshape(1, out_pad)                                          # f32
    prepped = (pe, wq, bq, wk, bk, wv, bv, wo_t, bo3, g13, be13,
               w1t, b13, w2t, b23, g23, be23, wlt, bl2)
    return prepped, OUT, out_pad


def _pick_bt(B, S, dff):
    """Batch tile: ~256 MXU rows/step, VMEM-aware, >= 2 grid steps if possible."""
    bt = max(1, 256 // S)
    budget = 8 << 20           # cap largest f32 intermediates (h1, scores) ~8 MiB
    while bt > 1 and max(bt * S * dff, bt * S * S) * 4 > budget:
        bt //= 2
    bt = min(bt, B)
    if B >= 2 and _cdiv(B, bt) < 2:      # keep both v7x TensorCores busy
        bt = max(1, (B + 1) // 2)
    return bt


def _const_spec(shape):
    """Full-array spec for grid-invariant inputs; single-buffered when supported."""
    n = len(shape)
    idx = lambda b, n=n: (0,) * n
    if hasattr(pl, "Buffered"):
        try:
            return pl.BlockSpec(shape, idx, pipeline_mode=pl.Buffered(1))
        except TypeError:
            pass
    return pl.BlockSpec(shape, idx)


def transformer_forward(x, params, *, nhead, num_layer):
    B, S, D = x.shape
    prepped, OUT, out_pad = prepare_params(params, nhead=nhead)
    (pe, wq, bq, wk, bk, wv, bv, wo_t, bo3, g13, be13,
     w1t, b13, w2t, b23, g23, be23, wlt, bl2) = prepped
    DFF = w1t.shape[2]

    bt = _pick_bt(B, S, DFF)
    b_pad = _cdiv(B, bt) * bt
    if b_pad != B:
        x = jnp.pad(x, ((0, b_pad - B), (0, 0), (0, 0)))

    # generation-aware VMEM limit (~48 MiB on v7x, ~96 MiB on v5e/v6e)
    try:
        vmem_cap = int(pltpu.get_tpu_info().vmem_capacity_bytes)
        if vmem_cap <= 0:
            vmem_cap = 128 << 20
    except Exception:
        vmem_cap = 128 << 20
    vmem_limit = int(min(vmem_cap * 3 // 4, 100 << 20))

    kernel = functools.partial(_transformer_kernel, num_layer=num_layer,
                               nhead=nhead, bt=bt)

    out = pl.pallas_call(
        kernel,
        out_shape=jax.ShapeDtypeStruct((b_pad, 1, out_pad), jnp.float32),
        grid=(b_pad // bt,),
        in_specs=[
            pl.BlockSpec((bt, S, D), lambda b: (b, 0, 0)),   # x: Bt batch rows / step
            _const_spec(pe.shape),
            _const_spec(wq.shape), _const_spec(bq.shape),
            _const_spec(wk.shape), _const_spec(bk.shape),
            _const_spec(wv.shape), _const_spec(bv.shape),
            _const_spec(wo_t.shape), _const_spec(bo3.shape),
            _const_spec(g13.shape), _const_spec(be13.shape),
            _const_spec(w1t.shape), _const_spec(b13.shape),
            _const_spec(w2t.shape), _const_spec(b23.shape),
            _const_spec(g23.shape), _const_spec(be23.shape),
            _const_spec(wlt.shape), _const_spec(bl2.shape),
        ],
        out_specs=pl.BlockSpec((bt, 1, out_pad), lambda b: (b, 0, 0)),
        compiler_params=pltpu.CompilerParams(
            dimension_semantics=("parallel",),   # batch tiles independent
            vmem_limit_bytes=vmem_limit,
        ),
    )(x, pe, wq, bq, wk, bk, wv, bv, wo_t, bo3, g13, be13,
      w1t, b13, w2t, b23, g23, be23, wlt, bl2)
    return out[:B, 0, :OUT]


def init_params(key, *, embed_dim, nhead, num_layer, sequence_length,
                output_size, dim_feedforward):
    """PyTorch-layout parameters (in_proj_weight, out_proj, linear1/2, label)."""
    D, L, S, DFF, OUT = embed_dim, num_layer, sequence_length, dim_feedforward, output_size
    keys = jax.random.split(key, 10)

    def w(k, shape, scale=0.02):
        return (scale * jax.random.normal(k, shape)).astype(jnp.float32)

    # sinusoidal positional encoding (matches PositionalEncoding buffer)
    position = jnp.arange(S, dtype=jnp.float32)[:, None]
    div_term = jnp.exp(jnp.arange(0, D, 2, dtype=jnp.float32) * (-math.log(10000.0) / D))
    pe = jnp.zeros((S, D), jnp.float32)
    pe = pe.at[:, 0::2].set(jnp.sin(position * div_term))
    pe = pe.at[:, 1::2].set(jnp.cos(position * div_term))

    wqkv = w(keys[0], (L, 3 * D, D))                  # in_proj_weight per layer
    bqkv = w(keys[1], (L, 3 * D), 0.01)
    wo = w(keys[2], (L, D, D))                        # out_proj
    bo = w(keys[3], (L, D), 0.01)
    g1 = jnp.ones((L, D), jnp.float32)
    be1 = jnp.zeros((L, D), jnp.float32)
    w1 = w(keys[4], (L, DFF, D))                      # linear1
    b1 = w(keys[5], (L, DFF), 0.01)
    w2 = w(keys[6], (L, D, DFF))                      # linear2
    b2 = w(keys[7], (L, D), 0.01)
    g2 = jnp.ones((L, D), jnp.float32)
    be2 = jnp.zeros((L, D), jnp.float32)
    wl = w(keys[8], (OUT, D))                         # label head
    bl = w(keys[9], (OUT,), 0.01)
    return (pe, wqkv, bqkv, wo, bo, g1, be1, w1, b1, w2, b2, g2, be2, wl, bl)


def reference_forward(x, params, *, nhead, num_layer):
    """Plain-JAX (f32) reference mirroring the PyTorch forward (eval mode)."""
    pe, wqkv, bqkv, wo, bo, g1, be1, w1, b1, w2, b2, g2, be2, wl, bl = params
    B, S, D = x.shape
    hd = D // nhead
    h = x + pe[None]
    for l in range(num_layer):
        qkv = h @ wqkv[l].T + bqkv[l]
        q, k, v = jnp.split(qkv, 3, axis=-1)
        q = q.reshape(B, S, nhead, hd).transpose(0, 2, 1, 3) / math.sqrt(hd)
        k = k.reshape(B, S, nhead, hd).transpose(0, 2, 1, 3)
        v = v.reshape(B, S, nhead, hd).transpose(0, 2, 1, 3)
        s = jnp.einsum("bhqd,bhkd->bhqk", q, k)
        p = jax.nn.softmax(s, axis=-1)
        a = jnp.einsum("bhqk,bhkd->bhqd", p, v).transpose(0, 2, 1, 3).reshape(B, S, D)
        a = a @ wo[l].T + bo[l]
        h = _layer_norm(h + a, g1[l], be1[l])
        f = jnp.maximum(h @ w1[l].T + b1[l], 0.0) @ w2[l].T + b2[l]
        h = _layer_norm(h + f, g2[l], be2[l])
    pooled = jnp.sum(h, axis=1)
    return pooled @ wl.T + bl


if __name__ == "__main__":
    # small, module-consistent shapes
    B, S, D, H, L, OUT = 2, 8, 32, 4, 2, 4
    DFF = 2048  # nn.TransformerEncoderLayer default dim_feedforward

    key = jax.random.PRNGKey(0)
    kx, kp = jax.random.split(key)
    x = jax.random.normal(kx, (B, S, D), dtype=jnp.float32)
    params = init_params(kp, embed_dim=D, nhead=H, num_layer=L,
                         sequence_length=S, output_size=OUT, dim_feedforward=DFF)

    out = transformer_forward(x, params, nhead=H, num_layer=L)
    out = jax.block_until_ready(out)

    ref = reference_forward(x, params, nhead=H, num_layer=L)
    assert out.shape == (B, OUT), out.shape
    err = float(np.max(np.abs(np.asarray(out) - np.asarray(ref))))
    assert np.allclose(np.asarray(out), np.asarray(ref), atol=5e-2, rtol=5e-2), err

    print("KERNEL_OK")
</pallas_src>

<mosaic_0001>
module attributes {stable_mosaic.version = 11 : i64} {
  func.func @_transformer_kernel(%arg0: i32, %arg1: memref<1x8x32xf32, #tpu.memory_space<vmem>>, %arg2: memref<8x32xf32, #tpu.memory_space<vmem>>, %arg3: memref<2x32x32xbf16, #tpu.memory_space<vmem>>, %arg4: memref<2x1x32xf32, #tpu.memory_space<vmem>>, %arg5: memref<2x32x32xbf16, #tpu.memory_space<vmem>>, %arg6: memref<2x1x32xf32, #tpu.memory_space<vmem>>, %arg7: memref<2x32x32xbf16, #tpu.memory_space<vmem>>, %arg8: memref<2x1x32xf32, #tpu.memory_space<vmem>>, %arg9: memref<2x32x32xbf16, #tpu.memory_space<vmem>>, %arg10: memref<2x1x32xf32, #tpu.memory_space<vmem>>, %arg11: memref<2x1x32xf32, #tpu.memory_space<vmem>>, %arg12: memref<2x1x32xf32, #tpu.memory_space<vmem>>, %arg13: memref<2x32x2048xbf16, #tpu.memory_space<vmem>>, %arg14: memref<2x1x2048xf32, #tpu.memory_space<vmem>>, %arg15: memref<2x2048x32xbf16, #tpu.memory_space<vmem>>, %arg16: memref<2x1x32xf32, #tpu.memory_space<vmem>>, %arg17: memref<2x1x32xf32, #tpu.memory_space<vmem>>, %arg18: memref<2x1x32xf32, #tpu.memory_space<vmem>>, %arg19: memref<32x128xbf16, #tpu.memory_space<vmem>>, %arg20: memref<1x128xf32, #tpu.memory_space<vmem>>, %arg21: memref<1x1x128xf32, #tpu.memory_space<vmem>>) attributes {dimension_semantics = [#tpu.dimension_semantics<parallel>], iteration_bounds = array<i64: 2>, scalar_prefetch = 0 : i64, scratch_operands = 0 : i64, tpu.core_type = #tpu.core_type<tc>, window_params = [{transform_indices = @transform_0, window_bounds = array<i64: 1, 8, 32>}, {pipeline_mode = #tpu.pipeline_mode<synchronous>, transform_indices = @transform_1, window_bounds = array<i64: 8, 32>}, {pipeline_mode = #tpu.pipeline_mode<synchronous>, transform_indices = @transform_2, window_bounds = array<i64: 2, 32, 32>}, {pipeline_mode = #tpu.pipeline_mode<synchronous>, transform_indices = @transform_3, window_bounds = array<i64: 2, 1, 32>}, {pipeline_mode = #tpu.pipeline_mode<synchronous>, transform_indices = @transform_4, window_bounds = array<i64: 2, 32, 32>}, {pipeline_mode = #tpu.pipeline_mode<synchronous>, transform_indices = @transform_5, window_bounds = array<i64: 2, 1, 32>}, {pipeline_mode = #tpu.pipeline_mode<synchronous>, transform_indices = @transform_6, window_bounds = array<i64: 2, 32, 32>}, {pipeline_mode = #tpu.pipeline_mode<synchronous>, transform_indices = @transform_7, window_bounds = array<i64: 2, 1, 32>}, {pipeline_mode = #tpu.pipeline_mode<synchronous>, transform_indices = @transform_8, window_bounds = array<i64: 2, 32, 32>}, {pipeline_mode = #tpu.pipeline_mode<synchronous>, transform_indices = @transform_9, window_bounds = array<i64: 2, 1, 32>}, {pipeline_mode = #tpu.pipeline_mode<synchronous>, transform_indices = @transform_10, window_bounds = array<i64: 2, 1, 32>}, {pipeline_mode = #tpu.pipeline_mode<synchronous>, transform_indices = @transform_11, window_bounds = array<i64: 2, 1, 32>}, {pipeline_mode = #tpu.pipeline_mode<synchronous>, transform_indices = @transform_12, window_bounds = array<i64: 2, 32, 2048>}, {pipeline_mode = #tpu.pipeline_mode<synchronous>, transform_indices = @transform_13, window_bounds = array<i64: 2, 1, 2048>}, {pipeline_mode = #tpu.pipeline_mode<synchronous>, transform_indices = @transform_14, window_bounds = array<i64: 2, 2048, 32>}, {pipeline_mode = #tpu.pipeline_mode<synchronous>, transform_indices = @transform_15, window_bounds = array<i64: 2, 1, 32>}, {pipeline_mode = #tpu.pipeline_mode<synchronous>, transform_indices = @transform_16, window_bounds = array<i64: 2, 1, 32>}, {pipeline_mode = #tpu.pipeline_mode<synchronous>, transform_indices = @transform_17, window_bounds = array<i64: 2, 1, 32>}, {pipeline_mode = #tpu.pipeline_mode<synchronous>, transform_indices = @transform_18, window_bounds = array<i64: 32, 128>}, {pipeline_mode = #tpu.pipeline_mode<synchronous>, transform_indices = @transform_19, window_bounds = array<i64: 1, 128>}, {transform_indices = @transform_20, window_bounds = array<i64: 1, 1, 128>}]} {
    %c0 = arith.constant 0 : index
    %c0_0 = arith.constant 0 : index
    %c0_1 = arith.constant 0 : index
    %0 = vector.load %arg1[%c0, %c0_0, %c0_1] : memref<1x8x32xf32, #tpu.memory_space<vmem>>, vector<1x8x32xf32>
    %c0_2 = arith.constant 0 : index
    %c0_3 = arith.constant 0 : index
    %1 = vector.load %arg2[%c0_2, %c0_3] : memref<8x32xf32, #tpu.memory_space<vmem>>, vector<8x32xf32>
    %2 = vector.shape_cast %1 : vector<8x32xf32> to vector<1x8x32xf32>
    %3 = arith.addf %0, %2 : vector<1x8x32xf32>
    %4 = vector.shape_cast %3 : vector<1x8x32xf32> to vector<8x32xf32>
    %c0_i32 = arith.constant 0 : i32
    %c2_i32 = arith.constant 2 : i32
    %5 = arith.addi %c0_i32, %c2_i32 : i32
    %c1_i32 = arith.constant 1 : i32
    %6 = scf.for %arg22 = %c0_i32 to %5 step %c1_i32 iter_args(%arg23 = %4) -> (vector<8x32xf32>)  : i32 {
      %16 = arith.truncf %arg23 : vector<8x32xf32> to vector<8x32xbf16>
      %17 = arith.index_cast %arg22 : i32 to index
      %c0_13 = arith.constant 0 : index
      %c0_14 = arith.constant 0 : index
      %18 = vector.load %arg3[%17, %c0_13, %c0_14] : memref<2x32x32xbf16, #tpu.memory_space<vmem>>, vector<1x32x32xbf16>
      %19 = vector.shape_cast %18 : vector<1x32x32xbf16> to vector<32x32xbf16>
      %cst_15 = arith.constant dense<0.000000e+00> : vector<8x32xf32>
      %20 = tpu.matmul %16, %19, %cst_15 {dimension_numbers = #tpu.dot_dimension_numbers<[1], [0], [0], [1], [0, 0, 1, 1], [], []>} : vector<8x32xbf16>, vector<32x32xbf16>, vector<8x32xf32> -> vector<8x32xf32>
      %21 = arith.index_cast %arg22 : i32 to index
      %c0_16 = arith.constant 0 : index
      %c0_17 = arith.constant 0 : index
      %22 = vector.load %arg4[%21, %c0_16, %c0_17] : memref<2x1x32xf32, #tpu.memory_space<vmem>>, vector<1x1x32xf32>
      %23 = vector.shape_cast %22 : vector<1x1x32xf32> to vector<1x32xf32>
      %24 = vector.broadcast %23 : vector<1x32xf32> to vector<8x32xf32>
      %25 = arith.addf %20, %24 : vector<8x32xf32>
      %26 = arith.index_cast %arg22 : i32 to index
      %c0_18 = arith.constant 0 : index
      %c0_19 = arith.constant 0 : index
      %27 = vector.load %arg5[%26, %c0_18, %c0_19] : memref<2x32x32xbf16, #tpu.memory_space<vmem>>, vector<1x32x32xbf16>
      %28 = vector.shape_cast %27 : vector<1x32x32xbf16> to vector<32x32xbf16>
      %cst_20 = arith.constant dense<0.000000e+00> : vector<8x32xf32>
      %29 = tpu.matmul %16, %28, %cst_20 {dimension_numbers = #tpu.dot_dimension_numbers<[1], [0], [0], [1], [0, 0, 1, 1], [], []>} : vector<8x32xbf16>, vector<32x32xbf16>, vector<8x32xf32> -> vector<8x32xf32>
      %30 = arith.index_cast %arg22 : i32 to index
      %c0_21 = arith.constant 0 : index
      %c0_22 = arith.constant 0 : index
      %31 = vector.load %arg6[%30, %c0_21, %c0_22] : memref<2x1x32xf32, #tpu.memory_space<vmem>>, vector<1x1x32xf32>
      %32 = vector.shape_cast %31 : vector<1x1x32xf32> to vector<1x32xf32>
      %33 = vector.broadcast %32 : vector<1x32xf32> to vector<8x32xf32>
      %34 = arith.addf %29, %33 : vector<8x32xf32>
      %35 = arith.index_cast %arg22 : i32 to index
      %c0_23 = arith.constant 0 : index
      %c0_24 = arith.constant 0 : index
      %36 = vector.load %arg7[%35, %c0_23, %c0_24] : memref<2x32x32xbf16, #tpu.memory_space<vmem>>, vector<1x32x32xbf16>
      %37 = vector.shape_cast %36 : vector<1x32x32xbf16> to vector<32x32xbf16>
      %cst_25 = arith.constant dense<0.000000e+00> : vector<8x32xf32>
      %38 = tpu.matmul %16, %37, %cst_25 {dimension_numbers = #tpu.dot_dimension_numbers<[1], [0], [0], [1], [0, 0, 1, 1], [], []>} : vector<8x32xbf16>, vector<32x32xbf16>, vector<8x32xf32> -> vector<8x32xf32>
      %39 = arith.index_cast %arg22 : i32 to index
      %c0_26 = arith.constant 0 : index
      %c0_27 = arith.constant 0 : index
      %40 = vector.load %arg8[%39, %c0_26, %c0_27] : memref<2x1x32xf32, #tpu.memory_space<vmem>>, vector<1x1x32xf32>
      %41 = vector.shape_cast %40 : vector<1x1x32xf32> to vector<1x32xf32>
      %42 = vector.broadcast %41 : vector<1x32xf32> to vector<8x32xf32>
      %43 = arith.addf %38, %42 : vector<8x32xf32>
      %44 = vector.shape_cast %25 : vector<8x32xf32> to vector<1x8x32xf32>
      %45 = vector.shape_cast %34 : vector<8x32xf32> to vector<1x8x32xf32>
      %46 = vector.shape_cast %43 : vector<8x32xf32> to vector<1x8x32xf32>
      %47 = vector.extract_strided_slice %44 {offsets = [0, 0, 0], sizes = [1, 8, 8], strides = [1, 1, 1]} : vector<1x8x32xf32> to vector<1x8x8xf32>
      %48 = arith.truncf %47 : vector<1x8x8xf32> to vector<1x8x8xbf16>
      %49 = vector.extract_strided_slice %45 {offsets = [0, 0, 0], sizes = [1, 8, 8], strides = [1, 1, 1]} : vector<1x8x32xf32> to vector<1x8x8xf32>
      %50 = arith.truncf %49 : vector<1x8x8xf32> to vector<1x8x8xbf16>
      %51 = vector.extract_strided_slice %46 {offsets = [0, 0, 0], sizes = [1, 8, 8], strides = [1, 1, 1]} : vector<1x8x32xf32> to vector<1x8x8xf32>
      %52 = arith.truncf %51 : vector<1x8x8xf32> to vector<1x8x8xbf16>
      "tpu.trace_start"() <{level = 10 : i32, message = "bqd,bkd->bqk"}> : () -> ()
      %cst_28 = arith.constant dense<0.000000e+00> : vector<1x8x8xf32>
      %53 = tpu.matmul %48, %50, %cst_28 {dimension_numbers = #tpu.dot_dimension_numbers<[2], [2], [1], [1], [0, 0, 0, 1, 1, 1], [0], [0]>} : vector<1x8x8xbf16>, vector<1x8x8xbf16>, vector<1x8x8xf32> -> vector<1x8x8xf32>
      "tpu.trace_stop"() : () -> ()
      %cst_29 = arith.constant dense<0xFF800000> : vector<1x8xf32>
      %54 = vector.multi_reduction <maximumf>, %53, %cst_29 [2] : vector<1x8x8xf32> to vector<1x8xf32>
      %55 = vector.shape_cast %54 : vector<1x8xf32> to vector<1x8x1xf32>
      %56 = vector.broadcast %55 : vector<1x8x1xf32> to vector<1x8x8xf32>
      %57 = arith.subf %53, %56 : vector<1x8x8xf32>
      %58 = math.exp %57 : vector<1x8x8xf32>
      %cst_30 = arith.constant dense<0.000000e+00> : vector<1x8xf32>
      %59 = vector.multi_reduction <add>, %58, %cst_30 [2] : vector<1x8x8xf32> to vector<1x8xf32>
      %60 = vector.shape_cast %59 : vector<1x8xf32> to vector<1x8x1xf32>
      %61 = tpu.reciprocal %60 {approx = true} : vector<1x8x1xf32> -> vector<1x8x1xf32>
      %62 = vector.broadcast %61 : vector<1x8x1xf32> to vector<1x8x8xf32>
      %63 = arith.mulf %58, %62 : vector<1x8x8xf32>
      %64 = arith.truncf %63 : vector<1x8x8xf32> to vector<1x8x8xbf16>
      "tpu.trace_start"() <{level = 10 : i32, message = "bqk,bkd->bqd"}> : () -> ()
      %cst_31 = arith.constant dense<0.000000e+00> : vector<1x8x8xf32>
      %65 = tpu.matmul %64, %52, %cst_31 {dimension_numbers = #tpu.dot_dimension_numbers<[2], [1], [1], [2], [0, 0, 0, 1, 1, 2], [0], [0]>} : vector<1x8x8xbf16>, vector<1x8x8xbf16>, vector<1x8x8xf32> -> vector<1x8x8xf32>
      "tpu.trace_stop"() : () -> ()
      %66 = vector.extract_strided_slice %44 {offsets = [0, 0, 8], sizes = [1, 8, 8], strides = [1, 1, 1]} : vector<1x8x32xf32> to vector<1x8x8xf32>
      %67 = arith.truncf %66 : vector<1x8x8xf32> to vector<1x8x8xbf16>
      %68 = vector.extract_strided_slice %45 {offsets = [0, 0, 8], sizes = [1, 8, 8], strides = [1, 1, 1]} : vector<1x8x32xf32> to vector<1x8x8xf32>
      %69 = arith.truncf %68 : vector<1x8x8xf32> to vector<1x8x8xbf16>
      %70 = vector.extract_strided_slice %46 {offsets = [0, 0, 8], sizes = [1, 8, 8], strides = [1, 1, 1]} : vector<1x8x32xf32> to vector<1x8x8xf32>
      %71 = arith.truncf %70 : vector<1x8x8xf32> to vector<1x8x8xbf16>
      "tpu.trace_start"() <{level = 10 : i32, message = "bqd,bkd->bqk"}> : () -> ()
      %cst_32 = arith.constant dense<0.000000e+00> : vector<1x8x8xf32>
      %72 = tpu.matmul %67, %69, %cst_32 {dimension_numbers = #tpu.dot_dimension_numbers<[2], [2], [1], [1], [0, 0, 0, 1, 1, 1], [0], [0]>} : vector<1x8x8xbf16>, vector<1x8x8xbf16>, vector<1x8x8xf32> -> vector<1x8x8xf32>
      "tpu.trace_stop"() : () -> ()
      %cst_33 = arith.constant dense<0xFF800000> : vector<1x8xf32>
      %73 = vector.multi_reduction <maximumf>, %72, %cst_33 [2] : vector<1x8x8xf32> to vector<1x8xf32>
      %74 = vector.shape_cast %73 : vector<1x8xf32> to vector<1x8x1xf32>
      %75 = vector.broadcast %74 : vector<1x8x1xf32> to vector<1x8x8xf32>
      %76 = arith.subf %72, %75 : vector<1x8x8xf32>
      %77 = math.exp %76 : vector<1x8x8xf32>
      %cst_34 = arith.constant dense<0.000000e+00> : vector<1x8xf32>
      %78 = vector.multi_reduction <add>, %77, %cst_34 [2] : vector<1x8x8xf32> to vector<1x8xf32>
      %79 = vector.shape_cast %78 : vector<1x8xf32> to vector<1x8x1xf32>
      %80 = tpu.reciprocal %79 {approx = true} : vector<1x8x1xf32> -> vector<1x8x1xf32>
      %81 = vector.broadcast %80 : vector<1x8x1xf32> to vector<1x8x8xf32>
      %82 = arith.mulf %77, %81 : vector<1x8x8xf32>
      %83 = arith.truncf %82 : vector<1x8x8xf32> to vector<1x8x8xbf16>
      "tpu.trace_start"() <{level = 10 : i32, message = "bqk,bkd->bqd"}> : () -> ()
      %cst_35 = arith.constant dense<0.000000e+00> : vector<1x8x8xf32>
      %84 = tpu.matmul %83, %71, %cst_35 {dimension_numbers = #tpu.dot_dimension_numbers<[2], [1], [1], [2], [0, 0, 0, 1, 1, 2], [0], [0]>} : vector<1x8x8xbf16>, vector<1x8x8xbf16>, vector<1x8x8xf32> -> vector<1x8x8xf32>
      "tpu.trace_stop"() : () -> ()
      %85 = vector.extract_strided_slice %44 {offsets = [0, 0, 16], sizes = [1, 8, 8], strides = [1, 1, 1]} : vector<1x8x32xf32> to vector<1x8x8xf32>
      %86 = arith.truncf %85 : vector<1x8x8xf32> to vector<1x8x8xbf16>
      %87 = vector.extract_strided_slice %45 {offsets = [0, 0, 16], sizes = [1, 8, 8], strides = [1, 1, 1]} : vector<1x8x32xf32> to vector<1x8x8xf32>
      %88 = arith.truncf %87 : vector<1x8x8xf32> to vector<1x8x8xbf16>
      %89 = vector.extract_strided_slice %46 {offsets = [0, 0, 16], sizes = [1, 8, 8], strides = [1, 1, 1]} : vector<1x8x32xf32> to vector<1x8x8xf32>
      %90 = arith.truncf %89 : vector<1x8x8xf32> to vector<1x8x8xbf16>
      "tpu.trace_start"() <{level = 10 : i32, message = "bqd,bkd->bqk"}> : () -> ()
      %cst_36 = arith.constant dense<0.000000e+00> : vector<1x8x8xf32>
      %91 = tpu.matmul %86, %88, %cst_36 {dimension_numbers = #tpu.dot_dimension_numbers<[2], [2], [1], [1], [0, 0, 0, 1, 1, 1], [0], [0]>} : vector<1x8x8xbf16>, vector<1x8x8xbf16>, vector<1x8x8xf32> -> vector<1x8x8xf32>
      "tpu.trace_stop"() : () -> ()
      %cst_37 = arith.constant dense<0xFF800000> : vector<1x8xf32>
      %92 = vector.multi_reduction <maximumf>, %91, %cst_37 [2] : vector<1x8x8xf32> to vector<1x8xf32>
      %93 = vector.shape_cast %92 : vector<1x8xf32> to vector<1x8x1xf32>
      %94 = vector.broadcast %93 : vector<1x8x1xf32> to vector<1x8x8xf32>
      %95 = arith.subf %91, %94 : vector<1x8x8xf32>
      %96 = math.exp %95 : vector<1x8x8xf32>
      %cst_38 = arith.constant dense<0.000000e+00> : vector<1x8xf32>
      %97 = vector.multi_reduction <add>, %96, %cst_38 [2] : vector<1x8x8xf32> to vector<1x8xf32>
      %98 = vector.shape_cast %97 : vector<1x8xf32> to vector<1x8x1xf32>
      %99 = tpu.reciprocal %98 {approx = true} : vector<1x8x1xf32> -> vector<1x8x1xf32>
      %100 = vector.broadcast %99 : vector<1x8x1xf32> to vector<1x8x8xf32>
      %101 = arith.mulf %96, %100 : vector<1x8x8xf32>
      %102 = arith.truncf %101 : vector<1x8x8xf32> to vector<1x8x8xbf16>
      "tpu.trace_start"() <{level = 10 : i32, message = "bqk,bkd->bqd"}> : () -> ()
      %cst_39 = arith.constant dense<0.000000e+00> : vector<1x8x8xf32>
      %103 = tpu.matmul %102, %90, %cst_39 {dimension_numbers = #tpu.dot_dimension_numbers<[2], [1], [1], [2], [0, 0, 0, 1, 1, 2], [0], [0]>} : vector<1x8x8xbf16>, vector<1x8x8xbf16>, vector<1x8x8xf32> -> vector<1x8x8xf32>
      "tpu.trace_stop"() : () -> ()
      %104 = vector.extract_strided_slice %44 {offsets = [0, 0, 24], sizes = [1, 8, 8], strides = [1, 1, 1]} : vector<1x8x32xf32> to vector<1x8x8xf32>
      %105 = arith.truncf %104 : vector<1x8x8xf32> to vector<1x8x8xbf16>
      %106 = vector.extract_strided_slice %45 {offsets = [0, 0, 24], sizes = [1, 8, 8], strides = [1, 1, 1]} : vector<1x8x32xf32> to vector<1x8x8xf32>
      %107 = arith.truncf %106 : vector<1x8x8xf32> to vector<1x8x8xbf16>
      %108 = vector.extract_strided_slice %46 {offsets = [0, 0, 24], sizes = [1, 8, 8], strides = [1, 1, 1]} : vector<1x8x32xf32> to vector<1x8x8xf32>
      %109 = arith.truncf %108 : vector<1x8x8xf32> to vector<1x8x8xbf16>
      "tpu.trace_start"() <{level = 10 : i32, message = "bqd,bkd->bqk"}> : () -> ()
      %cst_40 = arith.constant dense<0.000000e+00> : vector<1x8x8xf32>
      %110 = tpu.matmul %105, %107, %cst_40 {dimension_numbers = #tpu.dot_dimension_numbers<[2], [2], [1], [1], [0, 0, 0, 1, 1, 1], [0], [0]>} : vector<1x8x8xbf16>, vector<1x8x8xbf16>, vector<1x8x8xf32> -> vector<1x8x8xf32>
      "tpu.trace_stop"() : () -> ()
      %cst_41 = arith.constant dense<0xFF800000> : vector<1x8xf32>
      %111 = vector.multi_reduction <maximumf>, %110, %cst_41 [2] : vector<1x8x8xf32> to vector<1x8xf32>
      %112 = vector.shape_cast %111 : vector<1x8xf32> to vector<1x8x1xf32>
      %113 = vector.broadcast %112 : vector<1x8x1xf32> to vector<1x8x8xf32>
      %114 = arith.subf %110, %113 : vector<1x8x8xf32>
      %115 = math.exp %114 : vector<1x8x8xf32>
      %cst_42 = arith.constant dense<0.000000e+00> : vector<1x8xf32>
      %116 = vector.multi_reduction <add>, %115, %cst_42 [2] : vector<1x8x8xf32> to vector<1x8xf32>
      %117 = vector.shape_cast %116 : vector<1x8xf32> to vector<1x8x1xf32>
      %118 = tpu.reciprocal %117 {approx = true} : vector<1x8x1xf32> -> vector<1x8x1xf32>
      %119 = vector.broadcast %118 : vector<1x8x1xf32> to vector<1x8x8xf32>
      %120 = arith.mulf %115, %119 : vector<1x8x8xf32>
      %121 = arith.truncf %120 : vector<1x8x8xf32> to vector<1x8x8xbf16>
      "tpu.trace_start"() <{level = 10 : i32, message = "bqk,bkd->bqd"}> : () -> ()
      %cst_43 = arith.constant dense<0.000000e+00> : vector<1x8x8xf32>
      %122 = tpu.matmul %121, %109, %cst_43 {dimension_numbers = #tpu.dot_dimension_numbers<[2], [1], [1], [2], [0, 0, 0, 1, 1, 2], [0], [0]>} : vector<1x8x8xbf16>, vector<1x8x8xbf16>, vector<1x8x8xf32> -> vector<1x8x8xf32>
      "tpu.trace_stop"() : () -> ()
      %123 = tpu.concatenate %65, %84, %103, %122 in 2 : vector<1x8x8xf32>, vector<1x8x8xf32>, vector<1x8x8xf32>, vector<1x8x8xf32> -> vector<1x8x32xf32>
      %124 = vector.shape_cast %123 : vector<1x8x32xf32> to vector<8x32xf32>
      %125 = arith.truncf %124 : vector<8x32xf32> to vector<8x32xbf16>
      %126 = arith.index_cast %arg22 : i32 to index
      %c0_44 = arith.constant 0 : index
      %c0_45 = arith.constant 0 : index
      %127 = vector.load %arg9[%126, %c0_44, %c0_45] : memref<2x32x32xbf16, #tpu.memory_space<vmem>>, vector<1x32x32xbf16>
      %128 = vector.shape_cast %127 : vector<1x32x32xbf16> to vector<32x32xbf16>
      %cst_46 = arith.constant dense<0.000000e+00> : vector<8x32xf32>
      %129 = tpu.matmul %125, %128, %cst_46 {dimension_numbers = #tpu.dot_dimension_numbers<[1], [0], [0], [1], [0, 0, 1, 1], [], []>} : vector<8x32xbf16>, vector<32x32xbf16>, vector<8x32xf32> -> vector<8x32xf32>
      %130 = arith.index_cast %arg22 : i32 to index
      %c0_47 = arith.constant 0 : index
      %c0_48 = arith.constant 0 : index
      %131 = vector.load %arg10[%130, %c0_47, %c0_48] : memref<2x1x32xf32, #tpu.memory_space<vmem>>, vector<1x1x32xf32>
      %132 = vector.shape_cast %131 : vector<1x1x32xf32> to vector<1x32xf32>
      %133 = vector.broadcast %132 : vector<1x32xf32> to vector<8x32xf32>
      %134 = arith.addf %129, %133 : vector<8x32xf32>
      %135 = arith.addf %arg23, %134 : vector<8x32xf32>
      %136 = arith.index_cast %arg22 : i32 to index
      %c0_49 = arith.constant 0 : index
      %c0_50 = arith.constant 0 : index
      %137 = vector.load %arg11[%136, %c0_49, %c0_50] : memref<2x1x32xf32, #tpu.memory_space<vmem>>, vector<1x1x32xf32>
      %138 = vector.shape_cast %137 : vector<1x1x32xf32> to vector<1x32xf32>
      %139 = arith.index_cast %arg22 : i32 to index
      %c0_51 = arith.constant 0 : index
      %c0_52 = arith.constant 0 : index
      %140 = vector.load %arg12[%139, %c0_51, %c0_52] : memref<2x1x32xf32, #tpu.memory_space<vmem>>, vector<1x1x32xf32>
      %141 = vector.shape_cast %140 : vector<1x1x32xf32> to vector<1x32xf32>
      %cst_53 = arith.constant dense<0.000000e+00> : vector<8xf32>
      %142 = vector.multi_reduction <add>, %135, %cst_53 [1] : vector<8x32xf32> to vector<8xf32>
      %143 = vector.shape_cast %142 : vector<8xf32> to vector<8x1xf32>
      %cst_54 = arith.constant 3.200000e+01 : f32
      %144 = vector.broadcast %cst_54 : f32 to vector<8x1xf32>
      %145 = arith.divf %143, %144 : vector<8x1xf32>
      %146 = vector.broadcast %145 : vector<8x1xf32> to vector<8x32xf32>
      %147 = arith.subf %135, %146 : vector<8x32xf32>
      %148 = arith.mulf %147, %147 : vector<8x32xf32>
      %cst_55 = arith.constant dense<0.000000e+00> : vector<8xf32>
      %149 = vector.multi_reduction <add>, %148, %cst_55 [1] : vector<8x32xf32> to vector<8xf32>
      %150 = vector.shape_cast %149 : vector<8xf32> to vector<8x1xf32>
      %cst_56 = arith.constant 3.200000e+01 : f32
      %151 = vector.broadcast %cst_56 : f32 to vector<8x1xf32>
      %152 = arith.divf %150, %151 : vector<8x1xf32>
      %153 = vector.broadcast %145 : vector<8x1xf32> to vector<8x32xf32>
      %154 = arith.subf %135, %153 : vector<8x32xf32>
      %cst_57 = arith.constant 9.99999974E-6 : f32
      %155 = vector.broadcast %cst_57 : f32 to vector<8x1xf32>
      %156 = arith.addf %152, %155 : vector<8x1xf32>
      %157 = math.rsqrt %156 : vector<8x1xf32>
      %158 = vector.broadcast %157 : vector<8x1xf32> to vector<8x32xf32>
      %159 = arith.mulf %154, %158 : vector<8x32xf32>
      %160 = vector.broadcast %138 : vector<1x32xf32> to vector<8x32xf32>
      %161 = arith.mulf %159, %160 : vector<8x32xf32>
      %162 = vector.broadcast %141 : vector<1x32xf32> to vector<8x32xf32>
      %163 = arith.addf %161, %162 : vector<8x32xf32>
      %164 = arith.truncf %163 : vector<8x32xf32> to vector<8x32xbf16>
      %165 = arith.index_cast %arg22 : i32 to index
      %c0_58 = arith.constant 0 : index
      %c0_59 = arith.constant 0 : index
      %166 = vector.load %arg13[%165, %c0_58, %c0_59] : memref<2x32x2048xbf16, #tpu.memory_space<vmem>>, vector<1x32x2048xbf16>
      %167 = vector.shape_cast %166 : vector<1x32x2048xbf16> to vector<32x2048xbf16>
      %cst_60 = arith.constant dense<0.000000e+00> : vector<8x2048xf32>
      %168 = tpu.matmul %164, %167, %cst_60 {dimension_numbers = #tpu.dot_dimension_numbers<[1], [0], [0], [1], [0, 0, 1, 1], [], []>} : vector<8x32xbf16>, vector<32x2048xbf16>, vector<8x2048xf32> -> vector<8x2048xf32>
      %169 = arith.index_cast %arg22 : i32 to index
      %c0_61 = arith.constant 0 : index
      %c0_62 = arith.constant 0 : index
      %170 = vector.load %arg14[%169, %c0_61, %c0_62] : memref<2x1x2048xf32, #tpu.memory_space<vmem>>, vector<1x1x2048xf32>
      %171 = vector.shape_cast %170 : vector<1x1x2048xf32> to vector<1x2048xf32>
      %172 = vector.broadcast %171 : vector<1x2048xf32> to vector<8x2048xf32>
      %173 = arith.addf %168, %172 : vector<8x2048xf32>
      %cst_63 = arith.constant 0.000000e+00 : f32
      %174 = vector.broadcast %cst_63 : f32 to vector<8x2048xf32>
      %175 = arith.maximumf %173, %174 : vector<8x2048xf32>
      %176 = arith.truncf %175 : vector<8x2048xf32> to vector<8x2048xbf16>
      %177 = arith.index_cast %arg22 : i32 to index
      %c0_64 = arith.constant 0 : index
      %c0_65 = arith.constant 0 : index
      %178 = vector.load %arg15[%177, %c0_64, %c0_65] : memref<2x2048x32xbf16, #tpu.memory_space<vmem>>, vector<1x2048x32xbf16>
      %179 = vector.shape_cast %178 : vector<1x2048x32xbf16> to vector<2048x32xbf16>
      %cst_66 = arith.constant dense<0.000000e+00> : vector<8x32xf32>
      %180 = tpu.matmul %176, %179, %cst_66 {dimension_numbers = #tpu.dot_dimension_numbers<[1], [0], [0], [1], [0, 0, 1, 1], [], []>} : vector<8x2048xbf16>, vector<2048x32xbf16>, vector<8x32xf32> -> vector<8x32xf32>
      %181 = arith.index_cast %arg22 : i32 to index
      %c0_67 = arith.constant 0 : index
      %c0_68 = arith.constant 0 : index
      %182 = vector.load %arg16[%181, %c0_67, %c0_68] : memref<2x1x32xf32, #tpu.memory_space<vmem>>, vector<1x1x32xf32>
      %183 = vector.shape_cast %182 : vector<1x1x32xf32> to vector<1x32xf32>
      %184 = vector.broadcast %183 : vector<1x32xf32> to vector<8x32xf32>
      %185 = arith.addf %180, %184 : vector<8x32xf32>
      %186 = arith.addf %163, %185 : vector<8x32xf32>
      %187 = arith.index_cast %arg22 : i32 to index
      %c0_69 = arith.constant 0 : index
      %c0_70 = arith.constant 0 : index
      %188 = vector.load %arg17[%187, %c0_69, %c0_70] : memref<2x1x32xf32, #tpu.memory_space<vmem>>, vector<1x1x32xf32>
      %189 = vector.shape_cast %188 : vector<1x1x32xf32> to vector<1x32xf32>
      %190 = arith.index_cast %arg22 : i32 to index
      %c0_71 = arith.constant 0 : index
      %c0_72 = arith.constant 0 : index
      %191 = vector.load %arg18[%190, %c0_71, %c0_72] : memref<2x1x32xf32, #tpu.memory_space<vmem>>, vector<1x1x32xf32>
      %192 = vector.shape_cast %191 : vector<1x1x32xf32> to vector<1x32xf32>
      %cst_73 = arith.constant dense<0.000000e+00> : vector<8xf32>
      %193 = vector.multi_reduction <add>, %186, %cst_73 [1] : vector<8x32xf32> to vector<8xf32>
      %194 = vector.shape_cast %193 : vector<8xf32> to vector<8x1xf32>
      %cst_74 = arith.constant 3.200000e+01 : f32
      %195 = vector.broadcast %cst_74 : f32 to vector<8x1xf32>
      %196 = arith.divf %194, %195 : vector<8x1xf32>
      %197 = vector.broadcast %196 : vector<8x1xf32> to vector<8x32xf32>
      %198 = arith.subf %186, %197 : vector<8x32xf32>
      %199 = arith.mulf %198, %198 : vector<8x32xf32>
      %cst_75 = arith.constant dense<0.000000e+00> : vector<8xf32>
      %200 = vector.multi_reduction <add>, %199, %cst_75 [1] : vector<8x32xf32> to vector<8xf32>
      %201 = vector.shape_cast %200 : vector<8xf32> to vector<8x1xf32>
      %cst_76 = arith.constant 3.200000e+01 : f32
      %202 = vector.broadcast %cst_76 : f32 to vector<8x1xf32>
      %203 = arith.divf %201, %202 : vector<8x1xf32>
      %204 = vector.broadcast %196 : vector<8x1xf32> to vector<8x32xf32>
      %205 = arith.subf %186, %204 : vector<8x32xf32>
      %cst_77 = arith.constant 9.99999974E-6 : f32
      %206 = vector.broadcast %cst_77 : f32 to vector<8x1xf32>
      %207 = arith.addf %203, %206 : vector<8x1xf32>
      %208 = math.rsqrt %207 : vector<8x1xf32>
      %209 = vector.broadcast %208 : vector<8x1xf32> to vector<8x32xf32>
      %210 = arith.mulf %205, %209 : vector<8x32xf32>
      %211 = vector.broadcast %189 : vector<1x32xf32> to vector<8x32xf32>
      %212 = arith.mulf %210, %211 : vector<8x32xf32>
      %213 = vector.broadcast %192 : vector<1x32xf32> to vector<8x32xf32>
      %214 = arith.addf %212, %213 : vector<8x32xf32>
      scf.yield %214 : vector<8x32xf32>
    }
    %c2_i32_4 = arith.constant 2 : i32
    %7 = vector.shape_cast %6 : vector<8x32xf32> to vector<1x8x32xf32>
    %cst = arith.constant dense<0.000000e+00> : vector<1x32xf32>
    %8 = vector.multi_reduction <add>, %7, %cst [1] : vector<1x8x32xf32> to vector<1x32xf32>
    %9 = arith.truncf %8 : vector<1x32xf32> to vector<1x32xbf16>
    %c0_5 = arith.constant 0 : index
    %c0_6 = arith.constant 0 : index
    %10 = vector.load %arg19[%c0_5, %c0_6] : memref<32x128xbf16, #tpu.memory_space<vmem>>, vector<32x128xbf16>
    %cst_7 = arith.constant dense<0.000000e+00> : vector<1x128xf32>
    %11 = tpu.matmul %9, %10, %cst_7 {dimension_numbers = #tpu.dot_dimension_numbers<[1], [0], [0], [1], [0, 0, 1, 1], [], []>} : vector<1x32xbf16>, vector<32x128xbf16>, vector<1x128xf32> -> vector<1x128xf32>
    %c0_8 = arith.constant 0 : index
    %c0_9 = arith.constant 0 : index
    %12 = vector.load %arg20[%c0_8, %c0_9] : memref<1x128xf32, #tpu.memory_space<vmem>>, vector<1x128xf32>
    %13 = arith.addf %11, %12 : vector<1x128xf32>
    %14 = vector.shape_cast %13 : vector<1x128xf32> to vector<1x1x128xf32>
    %c0_10 = arith.constant 0 : index
    %c0_11 = arith.constant 0 : index
    %c0_12 = arith.constant 0 : index
    %15 = vector.load %arg21[%c0_10, %c0_11, %c0_12] : memref<1x1x128xf32, #tpu.memory_space<vmem>>, vector<1x1x128xf32>
    tpu.vector_store %arg21[%c0_10, %c0_11, %c0_12], %14 {strides = array<i32>} : memref<1x1x128xf32, #tpu.memory_space<vmem>>, vector<1x1x128xf32>,
    return
  }
  func.func @transform_0(%arg0: i32) -> (i32, i32, i32) {
    %c0_i32 = arith.constant 0 : i32
    %c0_i32_0 = arith.constant 0 : i32
    %c0_i32_1 = arith.constant 0 : i32
    return %arg0, %c0_i32, %c0_i32_0 : i32, i32, i32
  }
  func.func @transform_1(%arg0: i32) -> (i32, i32) {
    %c0_i32 = arith.constant 0 : i32
    %c0_i32_0 = arith.constant 0 : i32
    %c0_i32_1 = arith.constant 0 : i32
    return %c0_i32, %c0_i32_0 : i32, i32
  }
  func.func @transform_2(%arg0: i32) -> (i32, i32, i32) {
    %c0_i32 = arith.constant 0 : i32
    %c0_i32_0 = arith.constant 0 : i32
    %c0_i32_1 = arith.constant 0 : i32
    %c0_i32_2 = arith.constant 0 : i32
    return %c0_i32, %c0_i32_0, %c0_i32_1 : i32, i32, i32
  }
  func.func @transform_3(%arg0: i32) -> (i32, i32, i32) {
    %c0_i32 = arith.constant 0 : i32
    %c0_i32_0 = arith.constant 0 : i32
    %c0_i32_1 = arith.constant 0 : i32
    %c0_i32_2 = arith.constant 0 : i32
    return %c0_i32, %c0_i32_0, %c0_i32_1 : i32, i32, i32
  }
  func.func @transform_4(%arg0: i32) -> (i32, i32, i32) {
    %c0_i32 = arith.constant 0 : i32
    %c0_i32_0 = arith.constant 0 : i32
    %c0_i32_1 = arith.constant 0 : i32
    %c0_i32_2 = arith.constant 0 : i32
    return %c0_i32, %c0_i32_0, %c0_i32_1 : i32, i32, i32
  }
  func.func @transform_5(%arg0: i32) -> (i32, i32, i32) {
    %c0_i32 = arith.constant 0 : i32
    %c0_i32_0 = arith.constant 0 : i32
    %c0_i32_1 = arith.constant 0 : i32
    %c0_i32_2 = arith.constant 0 : i32
    return %c0_i32, %c0_i32_0, %c0_i32_1 : i32, i32, i32
  }
  func.func @transform_6(%arg0: i32) -> (i32, i32, i32) {
    %c0_i32 = arith.constant 0 : i32
    %c0_i32_0 = arith.constant 0 : i32
    %c0_i32_1 = arith.constant 0 : i32
    %c0_i32_2 = arith.constant 0 : i32
    return %c0_i32, %c0_i32_0, %c0_i32_1 : i32, i32, i32
  }
  func.func @transform_7(%arg0: i32) -> (i32, i32, i32) {
    %c0_i32 = arith.constant 0 : i32
    %c0_i32_0 = arith.constant 0 : i32
    %c0_i32_1 = arith.constant 0 : i32
    %c0_i32_2 = arith.constant 0 : i32
    return %c0_i32, %c0_i32_0, %c0_i32_1 : i32, i32, i32
  }
  func.func @transform_8(%arg0: i32) -> (i32, i32, i32) {
    %c0_i32 = arith.constant 0 : i32
    %c0_i32_0 = arith.constant 0 : i32
    %c0_i32_1 = arith.constant 0 : i32
    %c0_i32_2 = arith.constant 0 : i32
    return %c0_i32, %c0_i32_0, %c0_i32_1 : i32, i32, i32
  }
  func.func @transform_9(%arg0: i32) -> (i32, i32, i32) {
    %c0_i32 = arith.constant 0 : i32
    %c0_i32_0 = arith.constant 0 : i32
    %c0_i32_1 = arith.constant 0 : i32
    %c0_i32_2 = arith.constant 0 : i32
    return %c0_i32, %c0_i32_0, %c0_i32_1 : i32, i32, i32
  }
  func.func @transform_10(%arg0: i32) -> (i32, i32, i32) {
    %c0_i32 = arith.constant 0 : i32
    %c0_i32_0 = arith.constant 0 : i32
    %c0_i32_1 = arith.constant 0 : i32
    %c0_i32_2 = arith.constant 0 : i32
    return %c0_i32, %c0_i32_0, %c0_i32_1 : i32, i32, i32
  }
  func.func @transform_11(%arg0: i32) -> (i32, i32, i32) {
    %c0_i32 = arith.constant 0 : i32
    %c0_i32_0 = arith.constant 0 : i32
    %c0_i32_1 = arith.constant 0 : i32
    %c0_i32_2 = arith.constant 0 : i32
    return %c0_i32, %c0_i32_0, %c0_i32_1 : i32, i32, i32
  }
  func.func @transform_12(%arg0: i32) -> (i32, i32, i32) {
    %c0_i32 = arith.constant 0 : i32
    %c0_i32_0 = arith.constant 0 : i32
    %c0_i32_1 = arith.constant 0 : i32
    %c0_i32_2 = arith.constant 0 : i32
    return %c0_i32, %c0_i32_0, %c0_i32_1 : i32, i32, i32
  }
  func.func @transform_13(%arg0: i32) -> (i32, i32, i32) {
    %c0_i32 = arith.constant 0 : i32
    %c0_i32_0 = arith.constant 0 : i32
    %c0_i32_1 = arith.constant 0 : i32
    %c0_i32_2 = arith.constant 0 : i32
    return %c0_i32, %c0_i32_0, %c0_i32_1 : i32, i32, i32
  }
  func.func @transform_14(%arg0: i32) -> (i32, i32, i32) {
    %c0_i32 = arith.constant 0 : i32
    %c0_i32_0 = arith.constant 0 : i32
    %c0_i32_1 = arith.constant 0 : i32
    %c0_i32_2 = arith.constant 0 : i32
    return %c0_i32, %c0_i32_0, %c0_i32_1 : i32, i32, i32
  }
  func.func @transform_15(%arg0: i32) -> (i32, i32, i32) {
    %c0_i32 = arith.constant 0 : i32
    %c0_i32_0 = arith.constant 0 : i32
    %c0_i32_1 = arith.constant 0 : i32
    %c0_i32_2 = arith.constant 0 : i32
    return %c0_i32, %c0_i32_0, %c0_i32_1 : i32, i32, i32
  }
  func.func @transform_16(%arg0: i32) -> (i32, i32, i32) {
    %c0_i32 = arith.constant 0 : i32
    %c0_i32_0 = arith.constant 0 : i32
    %c0_i32_1 = arith.constant 0 : i32
    %c0_i32_2 = arith.constant 0 : i32
    return %c0_i32, %c0_i32_0, %c0_i32_1 : i32, i32, i32
  }
  func.func @transform_17(%arg0: i32) -> (i32, i32, i32) {
    %c0_i32 = arith.constant 0 : i32
    %c0_i32_0 = arith.constant 0 : i32
    %c0_i32_1 = arith.constant 0 : i32
    %c0_i32_2 = arith.constant 0 : i32
    return %c0_i32, %c0_i32_0, %c0_i32_1 : i32, i32, i32
  }
  func.func @transform_18(%arg0: i32) -> (i32, i32) {
    %c0_i32 = arith.constant 0 : i32
    %c0_i32_0 = arith.constant 0 : i32
    %c0_i32_1 = arith.constant 0 : i32
    return %c0_i32, %c0_i32_0 : i32, i32
  }
  func.func @transform_19(%arg0: i32) -> (i32, i32) {
    %c0_i32 = arith.constant 0 : i32
    %c0_i32_0 = arith.constant 0 : i32
    %c0_i32_1 = arith.constant 0 : i32
    return %c0_i32, %c0_i32_0 : i32, i32
  }
  func.func @transform_20(%arg0: i32) -> (i32, i32, i32) {
    %c0_i32 = arith.constant 0 : i32
    %c0_i32_0 = arith.constant 0 : i32
    %c0_i32_1 = arith.constant 0 : i32
    return %arg0, %c0_i32, %c0_i32_0 : i32, i32, i32
  }
}

</mosaic_0001>

<llo_original>
// kernel: tpu_custom_call.1
$region0: #{tpu_custom_call.1}
  #allocation0 [shape = 'u32[]', space=smem, size = 0x4, offset = 0x4, fixed_abs, tag = 'smem constant byte address 0x4 - core index']
  #allocation1 [shape = 'u32[144,128]{1,0:T(1,128)}', space=vmem, size = 0x12000, scoped, tag = 'internal scratch']
  %s0 = inlined_call_operand.vmem [shape: f32[2,8,32], index: 0, kind: input, shape index: {}]
  %s1 = inlined_call_operand.vmem [shape: f32[8,32], index: 1, kind: input, shape index: {}]
  %s2 = inlined_call_operand.vmem [shape: bf16[2,32,32], index: 2, kind: input, shape index: {}]
  %s3 = inlined_call_operand.vmem [shape: f32[2,1,32], index: 3, kind: input, shape index: {}]
  %s4 = inlined_call_operand.vmem [shape: bf16[2,32,32], index: 4, kind: input, shape index: {}]
  %s5 = inlined_call_operand.vmem [shape: f32[2,1,32], index: 5, kind: input, shape index: {}]
  %s6 = inlined_call_operand.vmem [shape: bf16[2,32,32], index: 6, kind: input, shape index: {}]
  %s7 = inlined_call_operand.vmem [shape: f32[2,1,32], index: 7, kind: input, shape index: {}]
  %s8 = inlined_call_operand.vmem [shape: bf16[2,32,32], index: 8, kind: input, shape index: {}]
  %s9 = inlined_call_operand.vmem [shape: f32[2,1,32], index: 9, kind: input, shape index: {}]
  %s10 = inlined_call_operand.vmem [shape: f32[2,1,32], index: 10, kind: input, shape index: {}]
  %s11 = inlined_call_operand.vmem [shape: f32[2,1,32], index: 11, kind: input, shape index: {}]
  %s12 = inlined_call_operand.vmem [shape: bf16[2,32,2048], index: 12, kind: input, shape index: {}]
  %s13 = inlined_call_operand.vmem [shape: f32[2,1,2048], index: 13, kind: input, shape index: {}]
  %s14 = inlined_call_operand.vmem [shape: bf16[2,2048,32], index: 14, kind: input, shape index: {}]
  %s15 = inlined_call_operand.vmem [shape: f32[2,1,32], index: 15, kind: input, shape index: {}]
  %s16 = inlined_call_operand.vmem [shape: f32[2,1,32], index: 16, kind: input, shape index: {}]
  %s17 = inlined_call_operand.vmem [shape: f32[2,1,32], index: 17, kind: input, shape index: {}]
  %s18 = inlined_call_operand.vmem [shape: bf16[32,128], index: 18, kind: input, shape index: {}]
  %s19 = inlined_call_operand.vmem [shape: f32[1,128], index: 19, kind: input, shape index: {}]
  %s20 = inlined_call_operand.hbm [shape: f32[2,1,128], index: 20, kind: output, shape index: {}]
  %s21 = sld [smem:[#allocation0]]
  $region120: #{tpu_custom_call.1} parent=0
    _
  %s23 = ssub.s32 1, %s21
  %s24 = scalar_select 0, %s23, %s21
  $region1: #{tpu_custom_call.1} parent=0
    #allocation2 [shape = 'u8[1024]{0}', space=vmem, size = 0x400, scoped, tag = 'output window, operand 0']
    #allocation3 [shape = 's32[2]{0}', space=sflag, size = 0x8, scoped, tag = 'scoped memory for tpu_custom_call.1']
    %25 = vsyncpa [#allocation3], 0
    %s26 = scalar_lea.sflag [#allocation3], 1
    %27 = vsyncpa %s26, 0
    loop: start=0, step=1, limit=4
    $region2: #{tpu_custom_call.1} parent=1 // loop_pre_header
      _
    $region3: #{tpu_custom_call.1} parent=1 // loop_header
      %s29 = sphi 0, %s33
      %p30 = scmp.ge.s32.totalorder %s29, 4
      %s39 = sphi 0, %s41
      %s42 = sphi 0, %s39
      %s43 = sphi 0, %s42
      %s59 = sphi 0, %s43
      %s63 = sphi 0, %s63
      %s65 = sphi 0, %s63
      %s66 = sphi 0, %s65
      %s80 = sphi 0, %s66
      %s84 = sphi 0, %s84
      %s86 = sphi 0, %s84
      %s87 = sphi 0, %s86
      %s101 = sphi 0, %s87
      %s105 = sphi 0, %s105
      %s107 = sphi 0, %s105
      %s108 = sphi 0, %s107
      %s122 = sphi 0, %s108
      %s126 = sphi 0, %s126
      %s128 = sphi 0, %s126
      %s129 = sphi 0, %s128
      %s143 = sphi 0, %s129
      %s147 = sphi 0, %s147
      %s149 = sphi 0, %s147
      %s150 = sphi 0, %s149
      %s164 = sphi 0, %s150
      %s168 = sphi 0, %s168
      %s170 = sphi 0, %s168
      %s171 = sphi 0, %s170
      %s185 = sphi 0, %s171
      %s189 = sphi 0, %s189
      %s191 = sphi 0, %s189
      %s192 = sphi 0, %s191
      %s206 = sphi 0, %s192
      %s210 = sphi 0, %s210
      %s212 = sphi 0, %s210
      %s213 = sphi 0, %s212
      %s227 = sphi 0, %s213
      %s231 = sphi 0, %s231
      %s233 = sphi 0, %s231
      %s234 = sphi 0, %s233
      %s248 = sphi 0, %s234
      %s252 = sphi 0, %s252
      %s254 = sphi 0, %s252
      %s255 = sphi 0, %s254
      %s269 = sphi 0, %s255
      %s273 = sphi 0, %s273
      %s275 = sphi 0, %s273
      %s276 = sphi 0, %s275
      %s290 = sphi 0, %s276
      %s294 = sphi 0, %s294
      %s296 = sphi 0, %s294
      %s297 = sphi 0, %s296
      %s311 = sphi 0, %s297
      %s315 = sphi 0, %s315
      %s317 = sphi 0, %s315
      %s318 = sphi 0, %s317
      %s332 = sphi 0, %s318
      %s336 = sphi 0, %s336
      %s338 = sphi 0, %s336
      %s339 = sphi 0, %s338
      %s353 = sphi 0, %s339
      %s357 = sphi 0, %s357
      %s359 = sphi 0, %s357
      %s360 = sphi 0, %s359
      %s374 = sphi 0, %s360
      %s378 = sphi 0, %s378
      %s380 = sphi 0, %s378
      %s381 = sphi 0, %s380
      %s395 = sphi 0, %s381
      %s399 = sphi 0, %s399
      %s401 = sphi 0, %s399
      %s402 = sphi 0, %s401
      %s416 = sphi 0, %s402
      %s420 = sphi 0, %s420
      %s422 = sphi 0, %s420
      %s423 = sphi 0, %s422
      %s437 = sphi 0, %s423
      %s441 = sphi 0, %s441
      %s443 = sphi 0, %s441
      %s444 = sphi 0, %s443
      %s458 = sphi 0, %s444
      %s464 = sphi 0, %s466
      %s467 = sphi 0, %s464
      %s468 = sphi 0, %s467
      %s484 = sphi 0, %s468
    $region4: #{tpu_custom_call.1} parent=1 // loop_header_branch
      %32 = sbr.rel (%p30) target = $region8
    $region5: #{tpu_custom_call.1} parent=1 // loop_body
      %s34 = ssub.s32 %s29, 1
      %s35 = ssub.s32 %s29, 2
      %s36 = sadd.s32 %s29, 1
      %s37 = ssub.s32 %s29, %s36
      %p38 = scmp.eq.s32.totalorder %s37, 0
      %s40 = sadd.s32 %s39, 1
      %s41 = scalar_select %p38, %s39, %s40
      %p44 = pneg %p38
      %p45 = scmp.eq.s32.totalorder %s29, 1
      %p46 = por %p44, %p45
      %p47 = scmp.ne.s32.totalorder %s39, %s42
      %p48 = scmp.eq.s32.totalorder %s29, 0
      %p49 = por %p47, %p48
      %p50 = scmp.ne.s32.totalorder %s39, %s42
      %p51 = scmp.eq.s32.totalorder %s34, 1
      %p52 = por %p50, %p51
      %p53 = scmp.ne.s32.totalorder %s42, %s43
      %p54 = scmp.eq.s32.totalorder %s34, 0
      %p55 = por %p53, %p54
      %p56 = scmp.ne.s32.totalorder %s42, %s43
      %p57 = scmp.eq.s32.totalorder %s35, 1
      %p58 = por %p56, %p57
      %p60 = scmp.ne.s32.totalorder %s43, %s59
      %p61 = scmp.eq.s32.totalorder %s35, 0
      %p62 = por %p60, %p61
      %s64 = sadd.s32 %s63, 1
      %p67 = scmp.eq.s32.totalorder %s29, 1
      %p68 = scmp.ne.s32.totalorder %s63, %s65
      %p69 = scmp.eq.s32.totalorder %s29, 0
      %p70 = por %p68, %p69
      %p71 = scmp.ne.s32.totalorder %s63, %s65
      %p72 = scmp.eq.s32.totalorder %s34, 1
      %p73 = por %p71, %p72
      %p74 = scmp.ne.s32.totalorder %s65, %s66
      %p75 = scmp.eq.s32.totalorder %s34, 0
      %p76 = por %p74, %p75
      %p77 = scmp.ne.s32.totalorder %s65, %s66
      %p78 = scmp.eq.s32.totalorder %s35, 1
      %p79 = por %p77, %p78
      %p81 = scmp.ne.s32.totalorder %s66, %s80
      %p82 = scmp.eq.s32.totalorder %s35, 0
      %p83 = por %p81, %p82
      %s85 = sadd.s32 %s84, 1
      %p88 = scmp.eq.s32.totalorder %s29, 1
      %p89 = scmp.ne.s32.totalorder %s84, %s86
      %p90 = scmp.eq.s32.totalorder %s29, 0
      %p91 = por %p89, %p90
      %p92 = scmp.ne.s32.totalorder %s84, %s86
      %p93 = scmp.eq.s32.totalorder %s34, 1
      %p94 = por %p92, %p93
      %p95 = scmp.ne.s32.totalorder %s86, %s87
      %p96 = scmp.eq.s32.totalorder %s34, 0
      %p97 = por %p95, %p96
      %p98 = scmp.ne.s32.totalorder %s86, %s87
      %p99 = scmp.eq.s32.totalorder %s35, 1
      %p100 = por %p98, %p99
      %p102 = scmp.ne.s32.totalorder %s87, %s101
      %p103 = scmp.eq.s32.totalorder %s35, 0
      %p104 = por %p102, %p103
      %s106 = sadd.s32 %s105, 1
      %p109 = scmp.eq.s32.totalorder %s29, 1
      %p110 = scmp.ne.s32.totalorder %s105, %s107
      %p111 = scmp.eq.s32.totalorder %s29, 0
      %p112 = por %p110, %p111
      %p113 = scmp.ne.s32.totalorder %s105, %s107
      %p114 = scmp.eq.s32.totalorder %s34, 1
      %p115 = por %p113, %p114
      %p116 = scmp.ne.s32.totalorder %s107, %s108
      %p117 = scmp.eq.s32.totalorder %s34, 0
      %p118 = por %p116, %p117
      %p119 = scmp.ne.s32.totalorder %s107, %s108
      %p120 = scmp.eq.s32.totalorder %s35, 1
      %p121 = por %p119, %p120
      %p123 = scmp.ne.s32.totalorder %s108, %s122
      %p124 = scmp.eq.s32.totalorder %s35, 0
      %p125 = por %p123, %p124
      %s127 = sadd.s32 %s126, 1
      %p130 = scmp.eq.s32.totalorder %s29, 1
      %p131 = scmp.ne.s32.totalorder %s126, %s128
      %p132 = scmp.eq.s32.totalorder %s29, 0
      %p133 = por %p131, %p132
      %p134 = scmp.ne.s32.totalorder %s126, %s128
      %p135 = scmp.eq.s32.totalorder %s34, 1
      %p136 = por %p134, %p135
      %p137 = scmp.ne.s32.totalorder %s128, %s129
      %p138 = scmp.eq.s32.totalorder %s34, 0
      %p139 = por %p137, %p138
      %p140 = scmp.ne.s32.totalorder %s128, %s129
      %p141 = scmp.eq.s32.totalorder %s35, 1
      %p142 = por %p140, %p141
      %p144 = scmp.ne.s32.totalorder %s129, %s143
      %p145 = scmp.eq.s32.totalorder %s35, 0
      %p146 = por %p144, %p145
      %s148 = sadd.s32 %s147, 1
      %p151 = scmp.eq.s32.totalorder %s29, 1
      %p152 = scmp.ne.s32.totalorder %s147, %s149
      %p153 = scmp.eq.s32.totalorder %s29, 0
      %p154 = por %p152, %p153
      %p155 = scmp.ne.s32.totalorder %s147, %s149
      %p156 = scmp.eq.s32.totalorder %s34, 1
      %p157 = por %p155, %p156
      %p158 = scmp.ne.s32.totalorder %s149, %s150
      %p159 = scmp.eq.s32.totalorder %s34, 0
      %p160 = por %p158, %p159
      %p161 = scmp.ne.s32.totalorder %s149, %s150
      %p162 = scmp.eq.s32.totalorder %s35, 1
      %p163 = por %p161, %p162
      %p165 = scmp.ne.s32.totalorder %s150, %s164
      %p166 = scmp.eq.s32.totalorder %s35, 0
      %p167 = por %p165, %p166
      %s169 = sadd.s32 %s168, 1
      %p172 = scmp.eq.s32.totalorder %s29, 1
      %p173 = scmp.ne.s32.totalorder %s168, %s170
      %p174 = scmp.eq.s32.totalorder %s29, 0
      %p175 = por %p173, %p174
      %p176 = scmp.ne.s32.totalorder %s168, %s170
      %p177 = scmp.eq.s32.totalorder %s34, 1
      %p178 = por %p176, %p177
      %p179 = scmp.ne.s32.totalorder %s170, %s171
      %p180 = scmp.eq.s32.totalorder %s34, 0
      %p181 = por %p179, %p180
      %p182 = scmp.ne.s32.totalorder %s170, %s171
      %p183 = scmp.eq.s32.totalorder %s35, 1
      %p184 = por %p182, %p183
      %p186 = scmp.ne.s32.totalorder %s171, %s185
      %p187 = scmp.eq.s32.totalorder %s35, 0
      %p188 = por %p186, %p187
      %s190 = sadd.s32 %s189, 1
      %p193 = scmp.eq.s32.totalorder %s29, 1
      %p194 = scmp.ne.s32.totalorder %s189, %s191
      %p195 = scmp.eq.s32.totalorder %s29, 0
      %p196 = por %p194, %p195
      %p197 = scmp.ne.s32.totalorder %s189, %s191
      %p198 = scmp.eq.s32.totalorder %s34, 1
      %p199 = por %p197, %p198
      %p200 = scmp.ne.s32.totalorder %s191, %s192
      %p201 = scmp.eq.s32.totalorder %s34, 0
      %p202 = por %p200, %p201
      %p203 = scmp.ne.s32.totalorder %s191, %s192
      %p204 = scmp.eq.s32.totalorder %s35, 1
      %p205 = por %p203, %p204
      %p207 = scmp.ne.s32.totalorder %s192, %s206
      %p208 = scmp.eq.s32.totalorder %s35, 0
      %p209 = por %p207, %p208
      %s211 = sadd.s32 %s210, 1
      %p214 = scmp.eq.s32.totalorder %s29, 1
      %p215 = scmp.ne.s32.totalorder %s210, %s212
      %p216 = scmp.eq.s32.totalorder %s29, 0
      %p217 = por %p215, %p216
      %p218 = scmp.ne.s32.totalorder %s210, %s212
      %p219 = scmp.eq.s32.totalorder %s34, 1
      %p220 = por %p218, %p219
      %p221 = scmp.ne.s32.totalorder %s212, %s213
      %p222 = scmp.eq.s32.totalorder %s34, 0
      %p223 = por %p221, %p222
      %p224 = scmp.ne.s32.totalorder %s212, %s213
      %p225 = scmp.eq.s32.totalorder %s35, 1
      %p226 = por %p224, %p225
      %p228 = scmp.ne.s32.totalorder %s213, %s227
      %p229 = scmp.eq.s32.totalorder %s35, 0
      %p230 = por %p228, %p229
      %s232 = sadd.s32 %s231, 1
      %p235 = scmp.eq.s32.totalorder %s29, 1
      %p236 = scmp.ne.s32.totalorder %s231, %s233
      %p237 = scmp.eq.s32.totalorder %s29, 0
      %p238 = por %p236, %p237
      %p239 = scmp.ne.s32.totalorder %s231, %s233
      %p240 = scmp.eq.s32.totalorder %s34, 1
      %p241 = por %p239, %p240
      %p242 = scmp.ne.s32.totalorder %s233, %s234
      %p243 = scmp.eq.s32.totalorder %s34, 0
      %p244 = por %p242, %p243
      %p245 = scmp.ne.s32.totalorder %s233, %s234
      %p246 = scmp.eq.s32.totalorder %s35, 1
      %p247 = por %p245, %p246
      %p249 = scmp.ne.s32.totalorder %s234, %s248
      %p250 = scmp.eq.s32.totalorder %s35, 0
      %p251 = por %p249, %p250
      %s253 = sadd.s32 %s252, 1
      %p256 = scmp.eq.s32.totalorder %s29, 1
      %p257 = scmp.ne.s32.totalorder %s252, %s254
      %p258 = scmp.eq.s32.totalorder %s29, 0
      %p259 = por %p257, %p258
      %p260 = scmp.ne.s32.totalorder %s252, %s254
      %p261 = scmp.eq.s32.totalorder %s34, 1
      %p262 = por %p260, %p261
      %p263 = scmp.ne.s32.totalorder %s254, %s255
      %p264 = scmp.eq.s32.totalorder %s34, 0
      %p265 = por %p263, %p264
      %p266 = scmp.ne.s32.totalorder %s254, %s255
      %p267 = scmp.eq.s32.totalorder %s35, 1
      %p268 = por %p266, %p267
      %p270 = scmp.ne.s32.totalorder %s255, %s269
      %p271 = scmp.eq.s32.totalorder %s35, 0
      %p272 = por %p270, %p271
      %s274 = sadd.s32 %s273, 1
      %p277 = scmp.eq.s32.totalorder %s29, 1
      %p278 = scmp.ne.s32.totalorder %s273, %s275
      %p279 = scmp.eq.s32.totalorder %s29, 0
      %p280 = por %p278, %p279
      %p281 = scmp.ne.s32.totalorder %s273, %s275
      %p282 = scmp.eq.s32.totalorder %s34, 1
      %p283 = por %p281, %p282
      %p284 = scmp.ne.s32.totalorder %s275, %s276
      %p285 = scmp.eq.s32.totalorder %s34, 0
      %p286 = por %p284, %p285
      %p287 = scmp.ne.s32.totalorder %s275, %s276
      %p288 = scmp.eq.s32.totalorder %s35, 1
      %p289 = por %p287, %p288
      %p291 = scmp.ne.s32.totalorder %s276, %s290
      %p292 = scmp.eq.s32.totalorder %s35, 0
      %p293 = por %p291, %p292
      %s295 = sadd.s32 %s294, 1
      %p298 = scmp.eq.s32.totalorder %s29, 1
      %p299 = scmp.ne.s32.totalorder %s294, %s296
      %p300 = scmp.eq.s32.totalorder %s29, 0
      %p301 = por %p299, %p300
      %p302 = scmp.ne.s32.totalorder %s294, %s296
      %p303 = scmp.eq.s32.totalorder %s34, 1
      %p304 = por %p302, %p303
      %p305 = scmp.ne.s32.totalorder %s296, %s297
      %p306 = scmp.eq.s32.totalorder %s34, 0
      %p307 = por %p305, %p306
      %p308 = scmp.ne.s32.totalorder %s296, %s297
      %p309 = scmp.eq.s32.totalorder %s35, 1
      %p310 = por %p308, %p309
      %p312 = scmp.ne.s32.totalorder %s297, %s311
      %p313 = scmp.eq.s32.totalorder %s35, 0
      %p314 = por %p312, %p313
      %s316 = sadd.s32 %s315, 1
      %p319 = scmp.eq.s32.totalorder %s29, 1
      %p320 = scmp.ne.s32.totalorder %s315, %s317
      %p321 = scmp.eq.s32.totalorder %s29, 0
      %p322 = por %p320, %p321
      %p323 = scmp.ne.s32.totalorder %s315, %s317
      %p324 = scmp.eq.s32.totalorder %s34, 1
      %p325 = por %p323, %p324
      %p326 = scmp.ne.s32.totalorder %s317, %s318
      %p327 = scmp.eq.s32.totalorder %s34, 0
      %p328 = por %p326, %p327
      %p329 = scmp.ne.s32.totalorder %s317, %s318
      %p330 = scmp.eq.s32.totalorder %s35, 1
      %p331 = por %p329, %p330
      %p333 = scmp.ne.s32.totalorder %s318, %s332
      %p334 = scmp.eq.s32.totalorder %s35, 0
      %p335 = por %p333, %p334
      %s337 = sadd.s32 %s336, 1
      %p340 = scmp.eq.s32.totalorder %s29, 1
      %p341 = scmp.ne.s32.totalorder %s336, %s338
      %p342 = scmp.eq.s32.totalorder %s29, 0
      %p343 = por %p341, %p342
      %p344 = scmp.ne.s32.totalorder %s336, %s338
      %p345 = scmp.eq.s32.totalorder %s34, 1
      %p346 = por %p344, %p345
      %p347 = scmp.ne.s32.totalorder %s338, %s339
      %p348 = scmp.eq.s32.totalorder %s34, 0
      %p349 = por %p347, %p348
      %p350 = scmp.ne.s32.totalorder %s338, %s339
      %p351 = scmp.eq.s32.totalorder %s35, 1
      %p352 = por %p350, %p351
      %p354 = scmp.ne.s32.totalorder %s339, %s353
      %p355 = scmp.eq.s32.totalorder %s35, 0
      %p356 = por %p354, %p355
      %s358 = sadd.s32 %s357, 1
      %p361 = scmp.eq.s32.totalorder %s29, 1
      %p362 = scmp.ne.s32.totalorder %s357, %s359
      %p363 = scmp.eq.s32.totalorder %s29, 0
      %p364 = por %p362, %p363
      %p365 = scmp.ne.s32.totalorder %s357, %s359
      %p366 = scmp.eq.s32.totalorder %s34, 1
      %p367 = por %p365, %p366
      %p368 = scmp.ne.s32.totalorder %s359, %s360
      %p369 = scmp.eq.s32.totalorder %s34, 0
      %p370 = por %p368, %p369
      %p371 = scmp.ne.s32.totalorder %s359, %s360
      %p372 = scmp.eq.s32.totalorder %s35, 1
      %p373 = por %p371, %p372
      %p375 = scmp.ne.s32.totalorder %s360, %s374
      %p376 = scmp.eq.s32.totalorder %s35, 0
      %p377 = por %p375, %p376
      %s379 = sadd.s32 %s378, 1
      %p382 = scmp.eq.s32.totalorder %s29, 1
      %p383 = scmp.ne.s32.totalorder %s378, %s380
      %p384 = scmp.eq.s32.totalorder %s29, 0
      %p385 = por %p383, %p384
      %p386 = scmp.ne.s32.totalorder %s378, %s380
      %p387 = scmp.eq.s32.totalorder %s34, 1
      %p388 = por %p386, %p387
      %p389 = scmp.ne.s32.totalorder %s380, %s381
      %p390 = scmp.eq.s32.totalorder %s34, 0
      %p391 = por %p389, %p390
      %p392 = scmp.ne.s32.totalorder %s380, %s381
      %p393 = scmp.eq.s32.totalorder %s35, 1
      %p394 = por %p392, %p393
      %p396 = scmp.ne.s32.totalorder %s381, %s395
      %p397 = scmp.eq.s32.totalorder %s35, 0
      %p398 = por %p396, %p397
      %s400 = sadd.s32 %s399, 1
      %p403 = scmp.eq.s32.totalorder %s29, 1
      %p404 = scmp.ne.s32.totalorder %s399, %s401
      %p405 = scmp.eq.s32.totalorder %s29, 0
      %p406 = por %p404, %p405
      %p407 = scmp.ne.s32.totalorder %s399, %s401
      %p408 = scmp.eq.s32.totalorder %s34, 1
      %p409 = por %p407, %p408
      %p410 = scmp.ne.s32.totalorder %s401, %s402
      %p411 = scmp.eq.s32.totalorder %s34, 0
      %p412 = por %p410, %p411
      %p413 = scmp.ne.s32.totalorder %s401, %s402
      %p414 = scmp.eq.s32.totalorder %s35, 1
      %p415 = por %p413, %p414
      %p417 = scmp.ne.s32.totalorder %s402, %s416
      %p418 = scmp.eq.s32.totalorder %s35, 0
      %p419 = por %p417, %p418
      %s421 = sadd.s32 %s420, 1
      %p424 = scmp.eq.s32.totalorder %s29, 1
      %p425 = scmp.ne.s32.totalorder %s420, %s422
      %p426 = scmp.eq.s32.totalorder %s29, 0
      %p427 = por %p425, %p426
      %p428 = scmp.ne.s32.totalorder %s420, %s422
      %p429 = scmp.eq.s32.totalorder %s34, 1
      %p430 = por %p428, %p429
      %p431 = scmp.ne.s32.totalorder %s422, %s423
      %p432 = scmp.eq.s32.totalorder %s34, 0
      %p433 = por %p431, %p432
      %p434 = scmp.ne.s32.totalorder %s422, %s423
      %p435 = scmp.eq.s32.totalorder %s35, 1
      %p436 = por %p434, %p435
      %p438 = scmp.ne.s32.totalorder %s423, %s437
      %p439 = scmp.eq.s32.totalorder %s35, 0
      %p440 = por %p438, %p439
      %s442 = sadd.s32 %s441, 1
      %p445 = scmp.eq.s32.totalorder %s29, 1
      %p446 = scmp.ne.s32.totalorder %s441, %s443
      %p447 = scmp.eq.s32.totalorder %s29, 0
      %p448 = por %p446, %p447
      %p449 = scmp.ne.s32.totalorder %s441, %s443
      %p450 = scmp.eq.s32.totalorder %s34, 1
      %p451 = por %p449, %p450
      %p452 = scmp.ne.s32.totalorder %s443, %s444
      %p453 = scmp.eq.s32.totalorder %s34, 0
      %p454 = por %p452, %p453
      %p455 = scmp.ne.s32.totalorder %s443, %s444
      %p456 = scmp.eq.s32.totalorder %s35, 1
      %p457 = por %p455, %p456
      %p459 = scmp.ne.s32.totalorder %s444, %s458
      %p460 = scmp.eq.s32.totalorder %s35, 0
      %p461 = por %p459, %p460
      %s462 = ssub.s32 %s29, %s36
      %p463 = scmp.eq.s32.totalorder %s462, 0
      %s465 = sadd.s32 %s464, 1
      %s466 = scalar_select %p463, %s464, %s465
      %p469 = pneg %p463
      %p470 = scmp.eq.s32.totalorder %s29, 1
      %p471 = por %p469, %p470
      %p472 = scmp.ne.s32.totalorder %s464, %s467
      %p473 = scmp.eq.s32.totalorder %s29, 0
      %p474 = por %p472, %p473
      %p475 = scmp.ne.s32.totalorder %s464, %s467
      %p476 = scmp.eq.s32.totalorder %s34, 1
      %p477 = por %p475, %p476
      %p478 = scmp.ne.s32.totalorder %s467, %s468
      %p479 = scmp.eq.s32.totalorder %s34, 0
      %p480 = por %p478, %p479
      %p481 = scmp.ne.s32.totalorder %s467, %s468
      %p482 = scmp.eq.s32.totalorder %s35, 1
      %p483 = por %p481, %p482
      %p485 = scmp.ne.s32.totalorder %s468, %s484
      %p486 = scmp.eq.s32.totalorder %s35, 0
      %p487 = por %p485, %p486
      %p488 = scmp.le.s32.totalorder 1, %s29
      %p489 = scmp.lt.s32.totalorder %s29, 3
      %p490 = pnand %p488, %p489
      %p491 = pneg %p490
      // Predicated region
      $region9: #{tpu_custom_call.1} parent=5 // pred_check
        _
      $region10: #{tpu_custom_call.1} parent=5 // pred_check_branch
        %493 = sbr.rel (%p490) target = $region12
      $region11: #{tpu_custom_call.1} parent=5 // pred_region
        %s494 = ssub.s32 %s29, 1
        // Predicated region
        $region13: #{tpu_custom_call.1} parent=11 // pred_check
          %p495 = pneg %p76
        $region14: #{tpu_custom_call.1} parent=11 // pred_check_branch
          %497 = sbr.rel (%p495) target = $region16
        $region15: #{tpu_custom_call.1} parent=11 // pred_region
          _
        $region16: #{tpu_custom_call.1} parent=11 // pred_fallthru
          _
        // Predicated region
        $region17: #{tpu_custom_call.1} parent=11 // pred_check
          %p498 = pneg %p97
        $region18: #{tpu_custom_call.1} parent=11 // pred_check_branch
          %500 = sbr.rel (%p498) target = $region20
        $region19: #{tpu_custom_call.1} parent=11 // pred_region
          _
        $region20: #{tpu_custom_call.1} parent=11 // pred_fallthru
          _
        // Predicated region
        $region21: #{tpu_custom_call.1} parent=11 // pred_check
          %p501 = pneg %p118
        $region22: #{tpu_custom_call.1} parent=11 // pred_check_branch
          %503 = sbr.rel (%p501) target = $region24
        $region23: #{tpu_custom_call.1} parent=11 // pred_region
          _
        $region24: #{tpu_custom_call.1} parent=11 // pred_fallthru
          _
        // Predicated region
        $region25: #{tpu_custom_call.1} parent=11 // pred_check
          %p504 = pneg %p139
        $region26: #{tpu_custom_call.1} parent=11 // pred_check_branch
          %506 = sbr.rel (%p504) target = $region28
        $region27: #{tpu_custom_call.1} parent=11 // pred_region
          _
        $region28: #{tpu_custom_call.1} parent=11 // pred_fallthru
          _
        // Predicated region
        $region29: #{tpu_custom_call.1} parent=11 // pred_check
          %p507 = pneg %p160
        $region30: #{tpu_custom_call.1} parent=11 // pred_check_branch
          %509 = sbr.rel (%p507) target = $region32
        $region31: #{tpu_custom_call.1} parent=11 // pred_region
          _
        $region32: #{tpu_custom_call.1} parent=11 // pred_fallthru
          _
        // Predicated region
        $region33: #{tpu_custom_call.1} parent=11 // pred_check
          %p510 = pneg %p181
        $region34: #{tpu_custom_call.1} parent=11 // pred_check_branch
          %512 = sbr.rel (%p510) target = $region36
        $region35: #{tpu_custom_call.1} parent=11 // pred_region
          _
        $region36: #{tpu_custom_call.1} parent=11 // pred_fallthru
          _
        // Predicated region
        $region37: #{tpu_custom_call.1} parent=11 // pred_check
          %p513 = pneg %p202
        $region38: #{tpu_custom_call.1} parent=11 // pred_check_branch
          %515 = sbr.rel (%p513) target = $region40
        $region39: #{tpu_custom_call.1} parent=11 // pred_region
          _
        $region40: #{tpu_custom_call.1} parent=11 // pred_fallthru
          _
        // Predicated region
        $region41: #{tpu_custom_call.1} parent=11 // pred_check
          %p516 = pneg %p223
        $region42: #{tpu_custom_call.1} parent=11 // pred_check_branch
          %518 = sbr.rel (%p516) target = $region44
        $region43: #{tpu_custom_call.1} parent=11 // pred_region
          _
        $region44: #{tpu_custom_call.1} parent=11 // pred_fallthru
          _
        // Predicated region
        $region45: #{tpu_custom_call.1} parent=11 // pred_check
          %p519 = pneg %p244
        $region46: #{tpu_custom_call.1} parent=11 // pred_check_branch
          %521 = sbr.rel (%p519) target = $region48
        $region47: #{tpu_custom_call.1} parent=11 // pred_region
          _
        $region48: #{tpu_custom_call.1} parent=11 // pred_fallthru
          _
        // Predicated region
        $region49: #{tpu_custom_call.1} parent=11 // pred_check
          %p522 = pneg %p265
        $region50: #{tpu_custom_call.1} parent=11 // pred_check_branch
          %524 = sbr.rel (%p522) target = $region52
        $region51: #{tpu_custom_call.1} parent=11 // pred_region
          _
        $region52: #{tpu_custom_call.1} parent=11 // pred_fallthru
          _
        // Predicated region
        $region53: #{tpu_custom_call.1} parent=11 // pred_check
          %p525 = pneg %p286
        $region54: #{tpu_custom_call.1} parent=11 // pred_check_branch
          %527 = sbr.rel (%p525) target = $region56
        $region55: #{tpu_custom_call.1} parent=11 // pred_region
          _
        $region56: #{tpu_custom_call.1} parent=11 // pred_fallthru
          _
        // Predicated region
        $region57: #{tpu_custom_call.1} parent=11 // pred_check
          %p528 = pneg %p307
        $region58: #{tpu_custom_call.1} parent=11 // pred_check_branch
          %530 = sbr.rel (%p528) target = $region60
        $region59: #{tpu_custom_call.1} parent=11 // pred_region
          _
        $region60: #{tpu_custom_call.1} parent=11 // pred_fallthru
          _
        // Predicated region
        $region61: #{tpu_custom_call.1} parent=11 // pred_check
          %p531 = pneg %p328
        $region62: #{tpu_custom_call.1} parent=11 // pred_check_branch
          %533 = sbr.rel (%p531) target = $region64
        $region63: #{tpu_custom_call.1} parent=11 // pred_region
          _
        $region64: #{tpu_custom_call.1} parent=11 // pred_fallthru
          _
        // Predicated region
        $region65: #{tpu_custom_call.1} parent=11 // pred_check
          %p534 = pneg %p349
        $region66: #{tpu_custom_call.1} parent=11 // pred_check_branch
          %536 = sbr.rel (%p534) target = $region68
        $region67: #{tpu_custom_call.1} parent=11 // pred_region
          _
        $region68: #{tpu_custom_call.1} parent=11 // pred_fallthru
          _
        // Predicated region
        $region69: #{tpu_custom_call.1} parent=11 // pred_check
          %p537 = pneg %p370
        $region70: #{tpu_custom_call.1} parent=11 // pred_check_branch
          %539 = sbr.rel (%p537) target = $region72
        $region71: #{tpu_custom_call.1} parent=11 // pred_region
          _
        $region72: #{tpu_custom_call.1} parent=11 // pred_fallthru
          _
        // Predicated region
        $region73: #{tpu_custom_call.1} parent=11 // pred_check
          %p540 = pneg %p391
        $region74: #{tpu_custom_call.1} parent=11 // pred_check_branch
          %542 = sbr.rel (%p540) target = $region76
        $region75: #{tpu_custom_call.1} parent=11 // pred_region
          _
        $region76: #{tpu_custom_call.1} parent=11 // pred_fallthru
          _
        // Predicated region
        $region77: #{tpu_custom_call.1} parent=11 // pred_check
          %p543 = pneg %p412
        $region78: #{tpu_custom_call.1} parent=11 // pred_check_branch
          %545 = sbr.rel (%p543) target = $region80
        $region79: #{tpu_custom_call.1} parent=11 // pred_region
          _
        $region80: #{tpu_custom_call.1} parent=11 // pred_fallthru
          _
        // Predicated region
        $region81: #{tpu_custom_call.1} parent=11 // pred_check
          %p546 = pneg %p433
        $region82: #{tpu_custom_call.1} parent=11 // pred_check_branch
          %548 = sbr.rel (%p546) target = $region84
        $region83: #{tpu_custom_call.1} parent=11 // pred_region
          _
        $region84: #{tpu_custom_call.1} parent=11 // pred_fallthru
          _
        // Predicated region
        $region85: #{tpu_custom_call.1} parent=11 // pred_check
          %p549 = pneg %p454
        $region86: #{tpu_custom_call.1} parent=11 // pred_check_branch
          %551 = sbr.rel (%p549) target = $region88
        $region87: #{tpu_custom_call.1} parent=11 // pred_region
          _
        $region88: #{tpu_custom_call.1} parent=11 // pred_fallthru
          _
      $region12: #{tpu_custom_call.1} parent=5 // pred_fallthru
        _
      %p552 = scmp.lt.s32.totalorder %s29, 2
      // Predicated region
      $region89: #{tpu_custom_call.1} parent=5 // pred_check
        %p553 = pneg %p552
      $region90: #{tpu_custom_call.1} parent=5 // pred_check_branch
        %555 = sbr.rel (%p553) target = $region92
      $region91: #{tpu_custom_call.1} parent=5 // pred_region
        // Predicated region
        $region93: #{tpu_custom_call.1} parent=91 // pred_check
          %p556 = pneg %p49
        $region94: #{tpu_custom_call.1} parent=91 // pred_check_branch
          %558 = sbr.rel (%p556) target = $region96
        $region95: #{tpu_custom_call.1} parent=91 // pred_region
          %p559 = scmp.lt.s32.totalorder %s29, 1
          %s560 = scalar_select %p559, %s29, 1
          %s561 = smul.addr %s560, 8
          %s562 = scalar_lea.vmem %s0, %s561
        $region96: #{tpu_custom_call.1} parent=91 // pred_fallthru
          _
      $region92: #{tpu_custom_call.1} parent=5 // pred_fallthru
        _
      %p563 = scmp.le.s32.totalorder 1, %s29
      %p564 = scmp.lt.s32.totalorder %s29, 3
      %p565 = pnand %p563, %p564
      %p566 = pneg %p565
      // Predicated region
      $region97: #{tpu_custom_call.1} parent=5 // pred_check
        _
      $region98: #{tpu_custom_call.1} parent=5 // pred_check_branch
        %568 = sbr.rel (%p565) target = $region100
      $region99: #{tpu_custom_call.1} parent=5 // pred_region
        %s569 = ssub.s32 %s29, 1
        %p570 = scmp.lt.s32.totalorder %s34, 1
        %s571 = scalar_select %p570, %s34, 1
        %s572 = smul.addr %s571, 8
        %s573 = scalar_lea.vmem %s0, %s572
        %p574 = pneg %p55
        %p575 = pneg %p52
        %p576 = pneg %p76
        %p577 = pneg %p73
        %p578 = pneg %p97
        %p579 = pneg %p94
        %p580 = pneg %p118
        %p581 = pneg %p115
        %p582 = pneg %p139
        %p583 = pneg %p136
        %p584 = pneg %p160
        %p585 = pneg %p157
        %p586 = pneg %p181
        %p587 = pneg %p178
        %p588 = pneg %p202
        %p589 = pneg %p199
        %p590 = pneg %p223
        %p591 = pneg %p220
        %p592 = pneg %p244
        %p593 = pneg %p241
        %p594 = pneg %p265
        %p595 = pneg %p262
        %p596 = pneg %p286
        %p597 = pneg %p283
        %p598 = pneg %p307
        %p599 = pneg %p304
        %p600 = pneg %p328
        %p601 = pneg %p325
        %p602 = pneg %p349
        %p603 = pneg %p346
        %p604 = pneg %p370
        %p605 = pneg %p367
        %p606 = pneg %p391
        %p607 = pneg %p388
        %p608 = pneg %p412
        %p609 = pneg %p409
        %p610 = pneg %p433
        %p611 = pneg %p430
        %p612 = pneg %p454
        %p613 = pneg %p451
        %p614 = pneg %p480
        %p615 = pneg %p477
        %s616 = sand.u32 %s467, 1
        %s617 = scalar_lea.sflag [#allocation3], %s616
        %s618 = sand.u32 %s467, 1
        %s619 = scalar_lea.vmem [#allocation2], %s618
        %p620 = scmp.lt.s32.totalorder %s34, 1
        %s621 = scalar_select %p620, %s34, 1
        %s622 = smul.addr %s621, 8
        %s623 = scalar_lea.vmem %s0, %s622
        %v625 = vld [vmem:[%s623] sm:$0xff]
        %v626 = vld [vmem:[%s1] sm:$0xff]
        %v627 = vadd.f32 %v625, %v626
        loop: start=0, step=1, limit=2
        $region101: #{tpu_custom_call.1} parent=99 // loop_pre_header
          _
        $region102: #{tpu_custom_call.1} parent=99 // loop_header
          %s629 = sphi 0, %s633
          %p630 = scmp.ge.s32.totalorder %s629, 2
          %v634 = vphi %v627, %v3432
        $region103: #{tpu_custom_call.1} parent=99 // loop_header_branch
          %632 = sbr.rel (%p630) target = $region107
        $region104: #{tpu_custom_call.1} parent=99 // loop_body
          %v635 = vpack.c.bf16 %v634, %v634
          %s636 = smul.u32 %s629, 4
          %s637 = smul.addr %s636, 4
          %s638 = scalar_lea.vmem %s2, %s637
          %v639 = vld [vmem:[%s638] sm:$0xf]
          %v640 = vld [vmem:[%s638 + $0x4] sm:$0xf]
          %v641 = vld [vmem:[%s638 + $0x8] sm:$0xf]
          %v642 = vld [vmem:[%s638 + $0xc] sm:$0xf]
          %s643 = scalar_lea.vmem %s3, %s629
          %v644 = vld [vmem:[%s643] sm:$0x1]
          %v646 = vlaneseq
          %v647 = vshrl.u32 %v646, 7
          %v648 = vsub.s32 0, %v647
          %v649 = vrot.slane %v644, %v648
          %v655 = vunpack.c.l.b16 %v639
          %v656 = vunpack.c.l.b16 %v640
          %v657 = vunpack.c.l.b16 %v641
          %v658 = vunpack.c.l.b16 %v642
          %v659 = vpack.c.b16 %v656, %v655
          %v660 = vpack.c.b16 %v658, %v657
          %vm663 = vcmask 261120
          %v665 = vsel %vm663, %v635, 0
          %667 = vmatprep.subr.bf16.mxu0 0
          %668 = vmatpush1.bf16.msra.mxu0 0
          %669 = vmatprep.subr.bf16.mxu0 0
          %670 = vmatpush1.bf16.msra.mxu0 0
          %671 = vmatprep.subr.bf16.mxu0 0
          %672 = vmatpush1.bf16.msra.mxu0 0
          %673 = vmatprep.subr.bf16.mxu0 0
          %674 = vmatpush1.bf16.msra.mxu0 0
          %675 = vmatprep.subr.bf16.mxu0 0
          %676 = vmatpush1.bf16.msra.mxu0 0
          %677 = vmatprep.subr.bf16.mxu0 0
          %678 = vmatpush1.bf16.msra.mxu0 0
          %679 = vmatprep.subr.bf16.mxu0 0
          %680 = vmatpush1.bf16.msra.mxu0 %v660
          %681 = vmatprep.subr.bf16.mxu0 0
          %682 = vmatpush1.bf16.msra.mxu0 %v659
          %683 = vmatprep.subr.bf16.mxu0 0
          %684 = vmatpush2.bf16.msra.mxu0 0
          %685 = vmatprep.subr.bf16.mxu0 0
          %686 = vmatpush2.bf16.msra.mxu0 0
          %687 = vmatprep.subr.bf16.mxu0 0
          %688 = vmatpush2.bf16.msra.mxu0 0
          %689 = vmatprep.subr.bf16.mxu0 0
          %690 = vmatpush2.bf16.msra.mxu0 0
          %691 = vmatprep.subr.bf16.mxu0 0
          %692 = vmatpush2.bf16.msra.mxu0 0
          %693 = vmatprep.subr.bf16.mxu0 0
          %694 = vmatpush2.bf16.msra.mxu0 0
          %695 = vmatprep.subr.bf16.mxu0 0
          %696 = vmatpush2.bf16.msra.mxu0 0
          %697 = vmatprep.subr.bf16.mxu0 0
          %698 = vmatpush2.bf16.msra.mxu0 0
          %699 = vmatprep.mubr.bf16.mxu0 0
          %700 = vmatmul.mubr.bf16.gmra.mxu0 %v665
          %v701 = vpop.f32.mrf.mxu0
          %v702 = vadd.f32 %v649, %v701
          %v703 = vpop.f32.mrf.mxu0
          %v704 = vpop.f32.mrf.mxu0
          %v705 = vpop.f32.mrf.mxu0
          %706 = vdwg.mxu0
          %s707 = smul.addr %s636, 4
          %s708 = scalar_lea.vmem %s4, %s707
          %v709 = vld [vmem:[%s708] sm:$0xf]
          %v710 = vld [vmem:[%s708 + $0x4] sm:$0xf]
          %v711 = vld [vmem:[%s708 + $0x8] sm:$0xf]
          %v712 = vld [vmem:[%s708 + $0xc] sm:$0xf]
          %s713 = scalar_lea.vmem %s5, %s629
          %v714 = vld [vmem:[%s713] sm:$0x1]
          %v716 = vlaneseq
          %v717 = vshrl.u32 %v716, 7
          %v718 = vsub.s32 0, %v717
          %v719 = vrot.slane %v714, %v718
          %v725 = vunpack.c.l.b16 %v709
          %v726 = vunpack.c.l.b16 %v710
          %v727 = vunpack.c.l.b16 %v711
          %v728 = vunpack.c.l.b16 %v712
          %v729 = vpack.c.b16 %v726, %v725
          %v730 = vpack.c.b16 %v728, %v727
          %733 = vmatprep.subr.bf16.mxu0 0
          %734 = vmatpush1.bf16.msra.mxu0 0
          %735 = vmatprep.subr.bf16.mxu0 0
          %736 = vmatpush1.bf16.msra.mxu0 0
          %737 = vmatprep.subr.bf16.mxu0 0
          %738 = vmatpush1.bf16.msra.mxu0 0
          %739 = vmatprep.subr.bf16.mxu0 0
          %740 = vmatpush1.bf16.msra.mxu0 0
          %741 = vmatprep.subr.bf16.mxu0 0
          %742 = vmatpush1.bf16.msra.mxu0 0
          %743 = vmatprep.subr.bf16.mxu0 0
          %744 = vmatpush1.bf16.msra.mxu0 0
          %745 = vmatprep.subr.bf16.mxu0 0
          %746 = vmatpush1.bf16.msra.mxu0 %v730
          %747 = vmatprep.subr.bf16.mxu0 0
          %748 = vmatpush1.bf16.msra.mxu0 %v729
          %749 = vmatprep.subr.bf16.mxu0 0
          %750 = vmatpush2.bf16.msra.mxu0 0
          %751 = vmatprep.subr.bf16.mxu0 0
          %752 = vmatpush2.bf16.msra.mxu0 0
          %753 = vmatprep.subr.bf16.mxu0 0
          %754 = vmatpush2.bf16.msra.mxu0 0
          %755 = vmatprep.subr.bf16.mxu0 0
          %756 = vmatpush2.bf16.msra.mxu0 0
          %757 = vmatprep.subr.bf16.mxu0 0
          %758 = vmatpush2.bf16.msra.mxu0 0
          %759 = vmatprep.subr.bf16.mxu0 0
          %760 = vmatpush2.bf16.msra.mxu0 0
          %761 = vmatprep.subr.bf16.mxu0 0
          %762 = vmatpush2.bf16.msra.mxu0 0
          %763 = vmatprep.subr.bf16.mxu0 0
          %764 = vmatpush2.bf16.msra.mxu0 0
          %765 = vmatprep.mubr.bf16.mxu0 0
          %766 = vmatmul.mubr.bf16.gmra.mxu0 %v665
          %v767 = vpop.f32.mrf.mxu0
          %v768 = vadd.f32 %v719, %v767
          %v769 = vpop.f32.mrf.mxu0
          %v770 = vpop.f32.mrf.mxu0
          %v771 = vpop.f32.mrf.mxu0
          %772 = vdwg.mxu0
          %s773 = smul.addr %s636, 4
          %s774 = scalar_lea.vmem %s6, %s773
          %v775 = vld [vmem:[%s774] sm:$0xf]
          %v776 = vld [vmem:[%s774 + $0x4] sm:$0xf]
          %v777 = vld [vmem:[%s774 + $0x8] sm:$0xf]
          %v778 = vld [vmem:[%s774 + $0xc] sm:$0xf]
          %s779 = scalar_lea.vmem %s7, %s629
          %v780 = vld [vmem:[%s779] sm:$0x1]
          %v782 = vlaneseq
          %v783 = vshrl.u32 %v782, 7
          %v784 = vsub.s32 0, %v783
          %v785 = vrot.slane %v780, %v784
          %v791 = vunpack.c.l.b16 %v775
          %v792 = vunpack.c.l.b16 %v776
          %v793 = vunpack.c.l.b16 %v777
          %v794 = vunpack.c.l.b16 %v778
          %v795 = vpack.c.b16 %v792, %v791
          %v796 = vpack.c.b16 %v794, %v793
          %799 = vmatprep.subr.bf16.mxu0 0
          %800 = vmatpush1.bf16.msra.mxu0 0
          %801 = vmatprep.subr.bf16.mxu0 0
          %802 = vmatpush1.bf16.msra.mxu0 0
          %803 = vmatprep.subr.bf16.mxu0 0
          %804 = vmatpush1.bf16.msra.mxu0 0
          %805 = vmatprep.subr.bf16.mxu0 0
          %806 = vmatpush1.bf16.msra.mxu0 0
          %807 = vmatprep.subr.bf16.mxu0 0
          %808 = vmatpush1.bf16.msra.mxu0 0
          %809 = vmatprep.subr.bf16.mxu0 0
          %810 = vmatpush1.bf16.msra.mxu0 0
          %811 = vmatprep.subr.bf16.mxu0 0
          %812 = vmatpush1.bf16.msra.mxu0 %v796
          %813 = vmatprep.subr.bf16.mxu0 0
          %814 = vmatpush1.bf16.msra.mxu0 %v795
          %815 = vmatprep.subr.bf16.mxu0 0
          %816 = vmatpush2.bf16.msra.mxu0 0
          %817 = vmatprep.subr.bf16.mxu0 0
          %818 = vmatpush2.bf16.msra.mxu0 0
          %819 = vmatprep.subr.bf16.mxu0 0
          %820 = vmatpush2.bf16.msra.mxu0 0
          %821 = vmatprep.subr.bf16.mxu0 0
          %822 = vmatpush2.bf16.msra.mxu0 0
          %823 = vmatprep.subr.bf16.mxu0 0
          %824 = vmatpush2.bf16.msra.mxu0 0
          %825 = vmatprep.subr.bf16.mxu0 0
          %826 = vmatpush2.bf16.msra.mxu0 0
          %827 = vmatprep.subr.bf16.mxu0 0
          %828 = vmatpush2.bf16.msra.mxu0 0
          %829 = vmatprep.subr.bf16.mxu0 0
          %830 = vmatpush2.bf16.msra.mxu0 0
          %831 = vmatprep.mubr.bf16.mxu0 0
          %832 = vmatmul.mubr.bf16.gmra.mxu0 %v665
          %v833 = vpop.f32.mrf.mxu0
          %v834 = vadd.f32 %v785, %v833
          %v835 = vpop.f32.mrf.mxu0
          %v836 = vpop.f32.mrf.mxu0
          %v837 = vpop.f32.mrf.mxu0
          %838 = vdwg.mxu0
          %v839 = vpack.c.bf16 %v702, %v702
          %v840 = vpack.c.bf16 %v768, %v768
          %v841 = vpack.c.bf16 %v834, %v834
          %vm842 = vcmask 64512
          %v844 = vsel %vm842, %v839, 0
          %v847 = vsel %vm842, %v840, 0
          %849 = vmatprep.subr.bf16.mxu0 0
          %850 = vmatpush1.bf16.xpose.msra.mxu0 0
          %851 = vmatprep.subr.bf16.mxu0 0
          %852 = vmatpush1.bf16.xpose.msra.mxu0 0
          %853 = vmatprep.subr.bf16.mxu0 0
          %854 = vmatpush1.bf16.xpose.msra.mxu0 0
          %855 = vmatprep.subr.bf16.mxu0 0
          %856 = vmatpush1.bf16.xpose.msra.mxu0 0
          %857 = vmatprep.subr.bf16.mxu0 0
          %858 = vmatpush1.bf16.xpose.msra.mxu0 0
          %859 = vmatprep.subr.bf16.mxu0 0
          %860 = vmatpush1.bf16.xpose.msra.mxu0 0
          %861 = vmatprep.subr.bf16.mxu0 0
          %862 = vmatpush1.bf16.xpose.msra.mxu0 0
          %863 = vmatprep.subr.bf16.mxu0 0
          %864 = vmatpush1.bf16.xpose.msra.mxu0 %v847
          %865 = vmatprep.subr.bf16.mxu0 0
          %866 = vmatpush2.bf16.xpose.msra.mxu0 0
          %867 = vmatprep.subr.bf16.mxu0 0
          %868 = vmatpush2.bf16.xpose.msra.mxu0 0
          %869 = vmatprep.subr.bf16.mxu0 0
          %870 = vmatpush2.bf16.xpose.msra.mxu0 0
          %871 = vmatprep.subr.bf16.mxu0 0
          %872 = vmatpush2.bf16.xpose.msra.mxu0 0
          %873 = vmatprep.subr.bf16.mxu0 0
          %874 = vmatpush2.bf16.xpose.msra.mxu0 0
          %875 = vmatprep.subr.bf16.mxu0 0
          %876 = vmatpush2.bf16.xpose.msra.mxu0 0
          %877 = vmatprep.subr.bf16.mxu0 0
          %878 = vmatpush2.bf16.xpose.msra.mxu0 0
          %879 = vmatprep.subr.bf16.mxu0 0
          %880 = vmatpush2.bf16.xpose.msra.mxu0 0
          %881 = vmatprep.mubr.bf16.mxu0 0
          %882 = vmatmul.mubr.bf16.gmra.mxu0 %v844
          %v883 = vpop.f32.mrf.mxu0
          %v884 = vadd.f32 0.0, %v883
          %v885 = vpop.f32.mrf.mxu0
          %v886 = vpop.f32.mrf.mxu0
          %v887 = vpop.f32.mrf.mxu0
          %888 = vdwg.mxu0
          %v889 = vsel %vm842, %v884, -inf
          %890 = vmax.xlane.f32.xlu0 %v889
          %v891 = vpop.xlane.xlu0 %890
          %v892 = vsub.f32 %v884, %v891
          %v893 = vmul.f32 %v892, 1.442695
          %v894 = vpow.pop %v893
          %v895 = vsel %vm842, %v894, 0.0
          %896 = vadd.xlane.f32.xlu0 %v895
          %v897 = vpop.xlane.xlu0 %896
          %v898 = vrcp.pop %v897
          %v899 = vmul.f32 %v894, %v898
          %v900 = vpack.c.bf16 %v899, %v899
          %v902 = vsel %vm842, %v900, 0
          %vm904 = vcmask 1043456
          %v906 = vsel %vm904, %v841, 0
          %908 = vmatprep.subr.bf16.mxu0 0
          %909 = vmatpush1.bf16.msra.mxu0 0
          %910 = vmatprep.subr.bf16.mxu0 0
          %911 = vmatpush1.bf16.msra.mxu0 0
          %912 = vmatprep.subr.bf16.mxu0 0
          %913 = vmatpush1.bf16.msra.mxu0 0
          %914 = vmatprep.subr.bf16.mxu0 0
          %915 = vmatpush1.bf16.msra.mxu0 0
          %916 = vmatprep.subr.bf16.mxu0 0
          %917 = vmatpush1.bf16.msra.mxu0 0
          %918 = vmatprep.subr.bf16.mxu0 0
          %919 = vmatpush1.bf16.msra.mxu0 0
          %920 = vmatprep.subr.bf16.mxu0 0
          %921 = vmatpush1.bf16.msra.mxu0 0
          %922 = vmatprep.subr.bf16.mxu0 0
          %923 = vmatpush1.bf16.msra.mxu0 %v906
          %924 = vmatprep.subr.bf16.mxu0 0
          %925 = vmatpush2.bf16.msra.mxu0 0
          %926 = vmatprep.subr.bf16.mxu0 0
          %927 = vmatpush2.bf16.msra.mxu0 0
          %928 = vmatprep.subr.bf16.mxu0 0
          %929 = vmatpush2.bf16.msra.mxu0 0
          %930 = vmatprep.subr.bf16.mxu0 0
          %931 = vmatpush2.bf16.msra.mxu0 0
          %932 = vmatprep.subr.bf16.mxu0 0
          %933 = vmatpush2.bf16.msra.mxu0 0
          %934 = vmatprep.subr.bf16.mxu0 0
          %935 = vmatpush2.bf16.msra.mxu0 0
          %936 = vmatprep.subr.bf16.mxu0 0
          %937 = vmatpush2.bf16.msra.mxu0 0
          %938 = vmatprep.subr.bf16.mxu0 0
          %939 = vmatpush2.bf16.msra.mxu0 0
          %940 = vmatprep.mubr.bf16.mxu0 0
          %941 = vmatmul.mubr.bf16.gmra.mxu0 %v902
          %v942 = vpop.f32.mrf.mxu0
          %v943 = vadd.f32 0.0, %v942
          %v944 = vpop.f32.mrf.mxu0
          %v945 = vpop.f32.mrf.mxu0
          %v946 = vpop.f32.mrf.mxu0
          %947 = vdwg.mxu0
          %949 = vrot.lane.b32.xlu0 %v839, 120
          %v950 = vpop.permute.xlu0 %949
          %952 = vrot.lane.b32.xlu0 %v840, 120
          %v953 = vpop.permute.xlu0 %952
          %v955 = vsel %vm842, %v950, 0
          %v958 = vsel %vm842, %v953, 0
          %960 = vmatprep.subr.bf16.mxu0 0
          %961 = vmatpush1.bf16.xpose.msra.mxu0 0
          %962 = vmatprep.subr.bf16.mxu0 0
          %963 = vmatpush1.bf16.xpose.msra.mxu0 0
          %964 = vmatprep.subr.bf16.mxu0 0
          %965 = vmatpush1.bf16.xpose.msra.mxu0 0
          %966 = vmatprep.subr.bf16.mxu0 0
          %967 = vmatpush1.bf16.xpose.msra.mxu0 0
          %968 = vmatprep.subr.bf16.mxu0 0
          %969 = vmatpush1.bf16.xpose.msra.mxu0 0
          %970 = vmatprep.subr.bf16.mxu0 0
          %971 = vmatpush1.bf16.xpose.msra.mxu0 0
          %972 = vmatprep.subr.bf16.mxu0 0
          %973 = vmatpush1.bf16.xpose.msra.mxu0 0
          %974 = vmatprep.subr.bf16.mxu0 0
          %975 = vmatpush1.bf16.xpose.msra.mxu0 %v958
          %976 = vmatprep.subr.bf16.mxu0 0
          %977 = vmatpush2.bf16.xpose.msra.mxu0 0
          %978 = vmatprep.subr.bf16.mxu0 0
          %979 = vmatpush2.bf16.xpose.msra.mxu0 0
          %980 = vmatprep.subr.bf16.mxu0 0
          %981 = vmatpush2.bf16.xpose.msra.mxu0 0
          %982 = vmatprep.subr.bf16.mxu0 0
          %983 = vmatpush2.bf16.xpose.msra.mxu0 0
          %984 = vmatprep.subr.bf16.mxu0 0
          %985 = vmatpush2.bf16.xpose.msra.mxu0 0
          %986 = vmatprep.subr.bf16.mxu0 0
          %987 = vmatpush2.bf16.xpose.msra.mxu0 0
          %988 = vmatprep.subr.bf16.mxu0 0
          %989 = vmatpush2.bf16.xpose.msra.mxu0 0
          %990 = vmatprep.subr.bf16.mxu0 0
          %991 = vmatpush2.bf16.xpose.msra.mxu0 0
          %992 = vmatprep.mubr.bf16.mxu0 0
          %993 = vmatmul.mubr.bf16.gmra.mxu0 %v955
          %v994 = vpop.f32.mrf.mxu0
          %v995 = vadd.f32 0.0, %v994
          %v996 = vpop.f32.mrf.mxu0
          %v997 = vpop.f32.mrf.mxu0
          %v998 = vpop.f32.mrf.mxu0
          %999 = vdwg.mxu0
          %v1000 = vsel %vm842, %v995, -inf
          %1001 = vmax.xlane.f32.xlu0 %v1000
          %v1002 = vpop.xlane.xlu0 %1001
          %v1003 = vsub.f32 %v995, %v1002
          %v1004 = vmul.f32 %v1003, 1.442695
          %v1005 = vpow.pop %v1004
          %v1006 = vsel %vm842, %v1005, 0.0
          %1007 = vadd.xlane.f32.xlu0 %v1006
          %v1008 = vpop.xlane.xlu0 %1007
          %v1009 = vrcp.pop %v1008
          %v1010 = vmul.f32 %v1005, %v1009
          %v1011 = vpack.c.bf16 %v1010, %v1010
          %1013 = vrot.lane.b32.xlu0 %v841, 120
          %v1014 = vpop.permute.xlu0 %1013
          %v1016 = vsel %vm842, %v1011, 0
          %v1019 = vsel %vm904, %v1014, 0
          %1021 = vmatprep.subr.bf16.mxu0 0
          %1022 = vmatpush1.bf16.msra.mxu0 0
          %1023 = vmatprep.subr.bf16.mxu0 0
          %1024 = vmatpush1.bf16.msra.mxu0 0
          %1025 = vmatprep.subr.bf16.mxu0 0
          %1026 = vmatpush1.bf16.msra.mxu0 0
          %1027 = vmatprep.subr.bf16.mxu0 0
          %1028 = vmatpush1.bf16.msra.mxu0 0
          %1029 = vmatprep.subr.bf16.mxu0 0
          %1030 = vmatpush1.bf16.msra.mxu0 0
          %1031 = vmatprep.subr.bf16.mxu0 0
          %1032 = vmatpush1.bf16.msra.mxu0 0
          %1033 = vmatprep.subr.bf16.mxu0 0
          %1034 = vmatpush1.bf16.msra.mxu0 0
          %1035 = vmatprep.subr.bf16.mxu0 0
          %1036 = vmatpush1.bf16.msra.mxu0 %v1019
          %1037 = vmatprep.subr.bf16.mxu0 0
          %1038 = vmatpush2.bf16.msra.mxu0 0
          %1039 = vmatprep.subr.bf16.mxu0 0
          %1040 = vmatpush2.bf16.msra.mxu0 0
          %1041 = vmatprep.subr.bf16.mxu0 0
          %1042 = vmatpush2.bf16.msra.mxu0 0
          %1043 = vmatprep.subr.bf16.mxu0 0
          %1044 = vmatpush2.bf16.msra.mxu0 0
          %1045 = vmatprep.subr.bf16.mxu0 0
          %1046 = vmatpush2.bf16.msra.mxu0 0
          %1047 = vmatprep.subr.bf16.mxu0 0
          %1048 = vmatpush2.bf16.msra.mxu0 0
          %1049 = vmatprep.subr.bf16.mxu0 0
          %1050 = vmatpush2.bf16.msra.mxu0 0
          %1051 = vmatprep.subr.bf16.mxu0 0
          %1052 = vmatpush2.bf16.msra.mxu0 0
          %1053 = vmatprep.mubr.bf16.mxu0 0
          %1054 = vmatmul.mubr.bf16.gmra.mxu0 %v1016
          %v1055 = vpop.f32.mrf.mxu0
          %v1056 = vadd.f32 0.0, %v1055
          %v1057 = vpop.f32.mrf.mxu0
          %v1058 = vpop.f32.mrf.mxu0
          %v1059 = vpop.f32.mrf.mxu0
          %1060 = vdwg.mxu0
          %1061 = vrot.lane.b32.xlu0 %v839, 112
          %v1062 = vpop.permute.xlu0 %1061
          %1063 = vrot.lane.b32.xlu0 %v840, 112
          %v1064 = vpop.permute.xlu0 %1063
          %v1066 = vsel %vm842, %v1062, 0
          %v1069 = vsel %vm842, %v1064, 0
          %1071 = vmatprep.subr.bf16.mxu0 0
          %1072 = vmatpush1.bf16.xpose.msra.mxu0 0
          %1073 = vmatprep.subr.bf16.mxu0 0
          %1074 = vmatpush1.bf16.xpose.msra.mxu0 0
          %1075 = vmatprep.subr.bf16.mxu0 0
          %1076 = vmatpush1.bf16.xpose.msra.mxu0 0
          %1077 = vmatprep.subr.bf16.mxu0 0
          %1078 = vmatpush1.bf16.xpose.msra.mxu0 0
          %1079 = vmatprep.subr.bf16.mxu0 0
          %1080 = vmatpush1.bf16.xpose.msra.mxu0 0
          %1081 = vmatprep.subr.bf16.mxu0 0
          %1082 = vmatpush1.bf16.xpose.msra.mxu0 0
          %1083 = vmatprep.subr.bf16.mxu0 0
          %1084 = vmatpush1.bf16.xpose.msra.mxu0 0
          %1085 = vmatprep.subr.bf16.mxu0 0
          %1086 = vmatpush1.bf16.xpose.msra.mxu0 %v1069
          %1087 = vmatprep.subr.bf16.mxu0 0
          %1088 = vmatpush2.bf16.xpose.msra.mxu0 0
          %1089 = vmatprep.subr.bf16.mxu0 0
          %1090 = vmatpush2.bf16.xpose.msra.mxu0 0
          %1091 = vmatprep.subr.bf16.mxu0 0
          %1092 = vmatpush2.bf16.xpose.msra.mxu0 0
          %1093 = vmatprep.subr.bf16.mxu0 0
          %1094 = vmatpush2.bf16.xpose.msra.mxu0 0
          %1095 = vmatprep.subr.bf16.mxu0 0
          %1096 = vmatpush2.bf16.xpose.msra.mxu0 0
          %1097 = vmatprep.subr.bf16.mxu0 0
          %1098 = vmatpush2.bf16.xpose.msra.mxu0 0
          %1099 = vmatprep.subr.bf16.mxu0 0
          %1100 = vmatpush2.bf16.xpose.msra.mxu0 0
          %1101 = vmatprep.subr.bf16.mxu0 0
          %1102 = vmatpush2.bf16.xpose.msra.mxu0 0
          %1103 = vmatprep.mubr.bf16.mxu0 0
          %1104 = vmatmul.mubr.bf16.gmra.mxu0 %v1066
          %v1105 = vpop.f32.mrf.mxu0
          %v1106 = vadd.f32 0.0, %v1105
          %v1107 = vpop.f32.mrf.mxu0
          %v1108 = vpop.f32.mrf.mxu0
          %v1109 = vpop.f32.mrf.mxu0
          %1110 = vdwg.mxu0
          %v1111 = vsel %vm842, %v1106, -inf
          %1112 = vmax.xlane.f32.xlu0 %v1111
          %v1113 = vpop.xlane.xlu0 %1112
          %v1114 = vsub.f32 %v1106, %v1113
          %v1115 = vmul.f32 %v1114, 1.442695
          %v1116 = vpow.pop %v1115
          %v1117 = vsel %vm842, %v1116, 0.0
          %1118 = vadd.xlane.f32.xlu0 %v1117
          %v1119 = vpop.xlane.xlu0 %1118
          %v1120 = vrcp.pop %v1119
          %v1121 = vmul.f32 %v1116, %v1120
          %v1122 = vpack.c.bf16 %v1121, %v1121
          %1123 = vrot.lane.b32.xlu0 %v841, 112
          %v1124 = vpop.permute.xlu0 %1123
          %v1126 = vsel %vm842, %v1122, 0
          %v1129 = vsel %vm904, %v1124, 0
          %1131 = vmatprep.subr.bf16.mxu0 0
          %1132 = vmatpush1.bf16.msra.mxu0 0
          %1133 = vmatprep.subr.bf16.mxu0 0
          %1134 = vmatpush1.bf16.msra.mxu0 0
          %1135 = vmatprep.subr.bf16.mxu0 0
          %1136 = vmatpush1.bf16.msra.mxu0 0
          %1137 = vmatprep.subr.bf16.mxu0 0
          %1138 = vmatpush1.bf16.msra.mxu0 0
          %1139 = vmatprep.subr.bf16.mxu0 0
          %1140 = vmatpush1.bf16.msra.mxu0 0
          %1141 = vmatprep.subr.bf16.mxu0 0
          %1142 = vmatpush1.bf16.msra.mxu0 0
          %1143 = vmatprep.subr.bf16.mxu0 0
          %1144 = vmatpush1.bf16.msra.mxu0 0
          %1145 = vmatprep.subr.bf16.mxu0 0
          %1146 = vmatpush1.bf16.msra.mxu0 %v1129
          %1147 = vmatprep.subr.bf16.mxu0 0
          %1148 = vmatpush2.bf16.msra.mxu0 0
          %1149 = vmatprep.subr.bf16.mxu0 0
          %1150 = vmatpush2.bf16.msra.mxu0 0
          %1151 = vmatprep.subr.bf16.mxu0 0
          %1152 = vmatpush2.bf16.msra.mxu0 0
          %1153 = vmatprep.subr.bf16.mxu0 0
          %1154 = vmatpush2.bf16.msra.mxu0 0
          %1155 = vmatprep.subr.bf16.mxu0 0
          %1156 = vmatpush2.bf16.msra.mxu0 0
          %1157 = vmatprep.subr.bf16.mxu0 0
          %1158 = vmatpush2.bf16.msra.mxu0 0
          %1159 = vmatprep.subr.bf16.mxu0 0
          %1160 = vmatpush2.bf16.msra.mxu0 0
          %1161 = vmatprep.subr.bf16.mxu0 0
          %1162 = vmatpush2.bf16.msra.mxu0 0
          %1163 = vmatprep.mubr.bf16.mxu0 0
          %1164 = vmatmul.mubr.bf16.gmra.mxu0 %v1126
          %v1165 = vpop.f32.mrf.mxu0
          %v1166 = vadd.f32 0.0, %v1165
          %v1167 = vpop.f32.mrf.mxu0
          %v1168 = vpop.f32.mrf.mxu0
          %v1169 = vpop.f32.mrf.mxu0
          %1170 = vdwg.mxu0
          %1171 = vrot.lane.b32.xlu0 %v839, 104
          %v1172 = vpop.permute.xlu0 %1171
          %1173 = vrot.lane.b32.xlu0 %v840, 104
          %v1174 = vpop.permute.xlu0 %1173
          %v1176 = vsel %vm842, %v1172, 0
          %v1179 = vsel %vm842, %v1174, 0
          %1181 = vmatprep.subr.bf16.mxu0 0
          %1182 = vmatpush1.bf16.xpose.msra.mxu0 0
          %1183 = vmatprep.subr.bf16.mxu0 0
          %1184 = vmatpush1.bf16.xpose.msra.mxu0 0
          %1185 = vmatprep.subr.bf16.mxu0 0
          %1186 = vmatpush1.bf16.xpose.msra.mxu0 0
          %1187 = vmatprep.subr.bf16.mxu0 0
          %1188 = vmatpush1.bf16.xpose.msra.mxu0 0
          %1189 = vmatprep.subr.bf16.mxu0 0
          %1190 = vmatpush1.bf16.xpose.msra.mxu0 0
          %1191 = vmatprep.subr.bf16.mxu0 0
          %1192 = vmatpush1.bf16.xpose.msra.mxu0 0
          %1193 = vmatprep.subr.bf16.mxu0 0
          %1194 = vmatpush1.bf16.xpose.msra.mxu0 0
          %1195 = vmatprep.subr.bf16.mxu0 0
          %1196 = vmatpush1.bf16.xpose.msra.mxu0 %v1179
          %1197 = vmatprep.subr.bf16.mxu0 0
          %1198 = vmatpush2.bf16.xpose.msra.mxu0 0
          %1199 = vmatprep.subr.bf16.mxu0 0
          %1200 = vmatpush2.bf16.xpose.msra.mxu0 0
          %1201 = vmatprep.subr.bf16.mxu0 0
          %1202 = vmatpush2.bf16.xpose.msra.mxu0 0
          %1203 = vmatprep.subr.bf16.mxu0 0
          %1204 = vmatpush2.bf16.xpose.msra.mxu0 0
          %1205 = vmatprep.subr.bf16.mxu0 0
          %1206 = vmatpush2.bf16.xpose.msra.mxu0 0
          %1207 = vmatprep.subr.bf16.mxu0 0
          %1208 = vmatpush2.bf16.xpose.msra.mxu0 0
          %1209 = vmatprep.subr.bf16.mxu0 0
          %1210 = vmatpush2.bf16.xpose.msra.mxu0 0
          %1211 = vmatprep.subr.bf16.mxu0 0
          %1212 = vmatpush2.bf16.xpose.msra.mxu0 0
          %1213 = vmatprep.mubr.bf16.mxu0 0
          %1214 = vmatmul.mubr.bf16.gmra.mxu0 %v1176
          %v1215 = vpop.f32.mrf.mxu0
          %v1216 = vadd.f32 0.0, %v1215
          %v1217 = vpop.f32.mrf.mxu0
          %v1218 = vpop.f32.mrf.mxu0
          %v1219 = vpop.f32.mrf.mxu0
          %1220 = vdwg.mxu0
          %v1221 = vsel %vm842, %v1216, -inf
          %1222 = vmax.xlane.f32.xlu0 %v1221
          %v1223 = vpop.xlane.xlu0 %1222
          %v1224 = vsub.f32 %v1216, %v1223
          %v1225 = vmul.f32 %v1224, 1.442695
          %v1226 = vpow.pop %v1225
          %v1227 = vsel %vm842, %v1226, 0.0
          %1228 = vadd.xlane.f32.xlu0 %v1227
          %v1229 = vpop.xlane.xlu0 %1228
          %v1230 = vrcp.pop %v1229
          %v1231 = vmul.f32 %v1226, %v1230
          %v1232 = vpack.c.bf16 %v1231, %v1231
          %1233 = vrot.lane.b32.xlu0 %v841, 104
          %v1234 = vpop.permute.xlu0 %1233
          %v1236 = vsel %vm842, %v1232, 0
          %v1239 = vsel %vm904, %v1234, 0
          %1241 = vmatprep.subr.bf16.mxu0 0
          %1242 = vmatpush1.bf16.msra.mxu0 0
          %1243 = vmatprep.subr.bf16.mxu0 0
          %1244 = vmatpush1.bf16.msra.mxu0 0
          %1245 = vmatprep.subr.bf16.mxu0 0
          %1246 = vmatpush1.bf16.msra.mxu0 0
          %1247 = vmatprep.subr.bf16.mxu0 0
          %1248 = vmatpush1.bf16.msra.mxu0 0
          %1249 = vmatprep.subr.bf16.mxu0 0
          %1250 = vmatpush1.bf16.msra.mxu0 0
          %1251 = vmatprep.subr.bf16.mxu0 0
          %1252 = vmatpush1.bf16.msra.mxu0 0
          %1253 = vmatprep.subr.bf16.mxu0 0
          %1254 = vmatpush1.bf16.msra.mxu0 0
          %1255 = vmatprep.subr.bf16.mxu0 0
          %1256 = vmatpush1.bf16.msra.mxu0 %v1239
          %1257 = vmatprep.subr.bf16.mxu0 0
          %1258 = vmatpush2.bf16.msra.mxu0 0
          %1259 = vmatprep.subr.bf16.mxu0 0
          %1260 = vmatpush2.bf16.msra.mxu0 0
          %1261 = vmatprep.subr.bf16.mxu0 0
          %1262 = vmatpush2.bf16.msra.mxu0 0
          %1263 = vmatprep.subr.bf16.mxu0 0
          %1264 = vmatpush2.bf16.msra.mxu0 0
          %1265 = vmatprep.subr.bf16.mxu0 0
          %1266 = vmatpush2.bf16.msra.mxu0 0
          %1267 = vmatprep.subr.bf16.mxu0 0
          %1268 = vmatpush2.bf16.msra.mxu0 0
          %1269 = vmatprep.subr.bf16.mxu0 0
          %1270 = vmatpush2.bf16.msra.mxu0 0
          %1271 = vmatprep.subr.bf16.mxu0 0
          %1272 = vmatpush2.bf16.msra.mxu0 0
          %1273 = vmatprep.mubr.bf16.mxu0 0
          %1274 = vmatmul.mubr.bf16.gmra.mxu0 %v1236
          %v1275 = vpop.f32.mrf.mxu0
          %v1276 = vadd.f32 0.0, %v1275
          %v1277 = vpop.f32.mrf.mxu0
          %v1278 = vpop.f32.mrf.mxu0
          %v1279 = vpop.f32.mrf.mxu0
          %1280 = vdwg.mxu0
          %1282 = vrot.lane.b32.xlu0 %v1056, 8
          %v1283 = vpop.permute.xlu0 %1282
          %1286 = vrot.lane.b32.xlu0 %v1166, 16
          %v1287 = vpop.permute.xlu0 %1286
          %1290 = vrot.lane.b32.xlu0 %v1276, 24
          %v1291 = vpop.permute.xlu0 %1290
          %v1293 = vsel %vm842, %v943, %v1283
          %vm1294 = vcmask 130048
          %v1295 = vsel %vm1294, %v1293, %v1287
          %vm1296 = vcmask 195584
          %v1297 = vsel %vm1296, %v1295, %v1291
          %v1298 = vpack.c.bf16 %v1297, %v1297
          %s1299 = smul.addr %s636, 4
          %s1300 = scalar_lea.vmem %s8, %s1299
          %v1301 = vld [vmem:[%s1300] sm:$0xf]
          %v1302 = vld [vmem:[%s1300 + $0x4] sm:$0xf]
          %v1303 = vld [vmem:[%s1300 + $0x8] sm:$0xf]
          %v1304 = vld [vmem:[%s1300 + $0xc] sm:$0xf]
          %s1305 = scalar_lea.vmem %s9, %s629
          %v1306 = vld [vmem:[%s1305] sm:$0x1]
          %v1308 = vlaneseq
          %v1309 = vshrl.u32 %v1308, 7
          %v1310 = vsub.s32 0, %v1309
          %v1311 = vrot.slane %v1306, %v1310
          %v1317 = vunpack.c.l.b16 %v1301
          %v1318 = vunpack.c.l.b16 %v1302
          %v1319 = vunpack.c.l.b16 %v1303
          %v1320 = vunpack.c.l.b16 %v1304
          %v1321 = vpack.c.b16 %v1318, %v1317
          %v1322 = vpack.c.b16 %v1320, %v1319
          %v1326 = vsel %vm663, %v1298, 0
          %1328 = vmatprep.subr.bf16.mxu0 0
          %1329 = vmatpush1.bf16.msra.mxu0 0
          %1330 = vmatprep.subr.bf16.mxu0 0
          %1331 = vmatpush1.bf16.msra.mxu0 0
          %1332 = vmatprep.subr.bf16.mxu0 0
          %1333 = vmatpush1.bf16.msra.mxu0 0
          %1334 = vmatprep.subr.bf16.mxu0 0
          %1335 = vmatpush1.bf16.msra.mxu0 0
          %1336 = vmatprep.subr.bf16.mxu0 0
          %1337 = vmatpush1.bf16.msra.mxu0 0
          %1338 = vmatprep.subr.bf16.mxu0 0
          %1339 = vmatpush1.bf16.msra.mxu0 0
          %1340 = vmatprep.subr.bf16.mxu0 0
          %1341 = vmatpush1.bf16.msra.mxu0 %v1322
          %1342 = vmatprep.subr.bf16.mxu0 0
          %1343 = vmatpush1.bf16.msra.mxu0 %v1321
          %1344 = vmatprep.subr.bf16.mxu0 0
          %1345 = vmatpush2.bf16.msra.mxu0 0
          %1346 = vmatprep.subr.bf16.mxu0 0
          %1347 = vmatpush2.bf16.msra.mxu0 0
          %1348 = vmatprep.subr.bf16.mxu0 0
          %1349 = vmatpush2.bf16.msra.mxu0 0
          %1350 = vmatprep.subr.bf16.mxu0 0
          %1351 = vmatpush2.bf16.msra.mxu0 0
          %1352 = vmatprep.subr.bf16.mxu0 0
          %1353 = vmatpush2.bf16.msra.mxu0 0
          %1354 = vmatprep.subr.bf16.mxu0 0
          %1355 = vmatpush2.bf16.msra.mxu0 0
          %1356 = vmatprep.subr.bf16.mxu0 0
          %1357 = vmatpush2.bf16.msra.mxu0 0
          %1358 = vmatprep.subr.bf16.mxu0 0
          %1359 = vmatpush2.bf16.msra.mxu0 0
          %1360 = vmatprep.mubr.bf16.mxu0 0
          %1361 = vmatmul.mubr.bf16.gmra.mxu0 %v1326
          %v1362 = vpop.f32.mrf.mxu0
          %v1363 = vadd.f32 %v1311, %v1362
          %v1364 = vpop.f32.mrf.mxu0
          %v1365 = vpop.f32.mrf.mxu0
          %v1366 = vpop.f32.mrf.mxu0
          %1367 = vdwg.mxu0
          %v1368 = vadd.f32 %v634, %v1363
          %s1369 = scalar_lea.vmem %s10, %s629
          %v1370 = vld [vmem:[%s1369] sm:$0x1]
          %s1371 = scalar_lea.vmem %s11, %s629
          %v1372 = vld [vmem:[%s1371] sm:$0x1]
          %v1373 = vsel %vm663, %v1368, 0.0
          %1374 = vadd.xlane.f32.xlu0 %v1373
          %v1375 = vpop.xlane.xlu0 %1374
          %v1376 = vrcp.pop 32.0
          %v1377 = vmul.f32 %v1375, %v1376
          %v1378 = vsub.f32 %v1368, %v1377
          %v1379 = vmul.f32 %v1378, %v1378
          %v1380 = vsel %vm663, %v1379, 0.0
          %1381 = vadd.xlane.f32.xlu0 %v1380
          %v1382 = vpop.xlane.xlu0 %1381
          %v1383 = vmul.f32 %v1382, %v1376
          %v1384 = vadd.f32 %v1383, 1e-05
          %v1385 = vrsqrt.pop %v1384
          %v1386 = vmul.f32 %v1378, %v1385
          %v1388 = vlaneseq
          %v1389 = vshrl.u32 %v1388, 7
          %v1390 = vsub.s32 0, %v1389
          %v1391 = vrot.slane %v1370, %v1390
          %v1393 = vmul.f32 %v1386, %v1391
          %v1395 = vlaneseq
          %v1396 = vshrl.u32 %v1395, 7
          %v1397 = vsub.s32 0, %v1396
          %v1398 = vrot.slane %v1372, %v1397
          %v1400 = vadd.f32 %v1393, %v1398
          %v1401 = vpack.c.bf16 %v1400, %v1400
          %s1402 = smul.u32 %s629, 64
          %s1403 = smul.addr %s1402, 4
          %s1404 = scalar_lea.vmem %s12, %s1403
          %v1405 = vld [vmem:[%s1404] sm:$0xff]
          %v1406 = vld [vmem:[%s1404 + $0x8] sm:$0xff]
          %v1407 = vld [vmem:[%s1404 + $0x10] sm:$0xff]
          %v1408 = vld [vmem:[%s1404 + $0x18] sm:$0xff]
          %v1409 = vld [vmem:[%s1404 + $0x20] sm:$0xff]
          %v1410 = vld [vmem:[%s1404 + $0x28] sm:$0xff]
          %v1411 = vld [vmem:[%s1404 + $0x30] sm:$0xff]
          %v1412 = vld [vmem:[%s1404 + $0x38] sm:$0xff]
          %v1413 = vld [vmem:[%s1404 + $0x40] sm:$0xff]
          %v1414 = vld [vmem:[%s1404 + $0x48] sm:$0xff]
          %v1415 = vld [vmem:[%s1404 + $0x50] sm:$0xff]
          %v1416 = vld [vmem:[%s1404 + $0x58] sm:$0xff]
          %v1417 = vld [vmem:[%s1404 + $0x60] sm:$0xff]
          %v1418 = vld [vmem:[%s1404 + $0x68] sm:$0xff]
          %v1419 = vld [vmem:[%s1404 + $0x70] sm:$0xff]
          %v1420 = vld [vmem:[%s1404 + $0x78] sm:$0xff]
          %v1421 = vld [vmem:[%s1404 + $0x80] sm:$0xff]
          %v1422 = vld [vmem:[%s1404 + $0x88] sm:$0xff]
          %v1423 = vld [vmem:[%s1404 + $0x90] sm:$0xff]
          %v1424 = vld [vmem:[%s1404 + $0x98] sm:$0xff]
          %v1425 = vld [vmem:[%s1404 + $0xa0] sm:$0xff]
          %v1426 = vld [vmem:[%s1404 + $0xa8] sm:$0xff]
          %v1427 = vld [vmem:[%s1404 + $0xb0] sm:$0xff]
          %v1428 = vld [vmem:[%s1404 + $0xb8] sm:$0xff]
          %v1429 = vld [vmem:[%s1404 + $0xc0] sm:$0xff]
          %v1430 = vld [vmem:[%s1404 + $0xc8] sm:$0xff]
          %v1431 = vld [vmem:[%s1404 + $0xd0] sm:$0xff]
          %v1432 = vld [vmem:[%s1404 + $0xd8] sm:$0xff]
          %v1433 = vld [vmem:[%s1404 + $0xe0] sm:$0xff]
          %v1434 = vld [vmem:[%s1404 + $0xe8] sm:$0xff]
          %v1435 = vld [vmem:[%s1404 + $0xf0] sm:$0xff]
          %v1436 = vld [vmem:[%s1404 + $0xf8] sm:$0xff]
          %s1437 = smul.u32 %s629, 16
          %s1438 = scalar_lea.vmem %s13, %s1437
          %v1439 = vld [vmem:[%s1438] sm:$0xff]
          %v1440 = vld [vmem:[%s1438 + $0x8] sm:$0xff]
          %v1443 = vlaneseq
          %v1444 = vshrl.u32 %v1443, 7
          %v1445 = vsub.s32 0, %v1444
          %v1446 = vrot.slane %v1439, %v1445
          %v1447 = vlaneseq
          %v1448 = vshrl.u32 %v1447, 7
          %v1449 = vsub.s32 1, %v1448
          %v1450 = vrot.slane %v1439, %v1449
          %v1451 = vlaneseq
          %v1452 = vshrl.u32 %v1451, 7
          %v1453 = vsub.s32 2, %v1452
          %v1454 = vrot.slane %v1439, %v1453
          %v1455 = vlaneseq
          %v1456 = vshrl.u32 %v1455, 7
          %v1457 = vsub.s32 3, %v1456
          %v1458 = vrot.slane %v1439, %v1457
          %v1459 = vlaneseq
          %v1460 = vshrl.u32 %v1459, 7
          %v1461 = vsub.s32 4, %v1460
          %v1462 = vrot.slane %v1439, %v1461
          %v1463 = vlaneseq
          %v1464 = vshrl.u32 %v1463, 7
          %v1465 = vsub.s32 5, %v1464
          %v1466 = vrot.slane %v1439, %v1465
          %v1467 = vlaneseq
          %v1468 = vshrl.u32 %v1467, 7
          %v1469 = vsub.s32 6, %v1468
          %v1470 = vrot.slane %v1439, %v1469
          %v1471 = vlaneseq
          %v1472 = vshrl.u32 %v1471, 7
          %v1473 = vsub.s32 7, %v1472
          %v1474 = vrot.slane %v1439, %v1473
          %v1475 = vlaneseq
          %v1476 = vshrl.u32 %v1475, 7
          %v1477 = vsub.s32 0, %v1476
          %v1478 = vrot.slane %v1440, %v1477
          %v1479 = vlaneseq
          %v1480 = vshrl.u32 %v1479, 7
          %v1481 = vsub.s32 1, %v1480
          %v1482 = vrot.slane %v1440, %v1481
          %v1483 = vlaneseq
          %v1484 = vshrl.u32 %v1483, 7
          %v1485 = vsub.s32 2, %v1484
          %v1486 = vrot.slane %v1440, %v1485
          %v1487 = vlaneseq
          %v1488 = vshrl.u32 %v1487, 7
          %v1489 = vsub.s32 3, %v1488
          %v1490 = vrot.slane %v1440, %v1489
          %v1491 = vlaneseq
          %v1492 = vshrl.u32 %v1491, 7
          %v1493 = vsub.s32 4, %v1492
          %v1494 = vrot.slane %v1440, %v1493
          %v1495 = vlaneseq
          %v1496 = vshrl.u32 %v1495, 7
          %v1497 = vsub.s32 5, %v1496
          %v1498 = vrot.slane %v1440, %v1497
          %v1499 = vlaneseq
          %v1500 = vshrl.u32 %v1499, 7
          %v1501 = vsub.s32 6, %v1500
          %v1502 = vrot.slane %v1440, %v1501
          %v1503 = vlaneseq
          %v1504 = vshrl.u32 %v1503, 7
          %v1505 = vsub.s32 7, %v1504
          %v1506 = vrot.slane %v1440, %v1505
          %v1555 = vunpack.c.l.b16 %v1405
          %v1556 = vunpack.c.h.b16 %v1405
          %v1557 = vunpack.c.l.b16 %v1406
          %v1558 = vunpack.c.h.b16 %v1406
          %v1559 = vunpack.c.l.b16 %v1407
          %v1560 = vunpack.c.h.b16 %v1407
          %v1561 = vunpack.c.l.b16 %v1408
          %v1562 = vunpack.c.h.b16 %v1408
          %v1563 = vunpack.c.l.b16 %v1409
          %v1564 = vunpack.c.h.b16 %v1409
          %v1565 = vunpack.c.l.b16 %v1410
          %v1566 = vunpack.c.h.b16 %v1410
          %v1567 = vunpack.c.l.b16 %v1411
          %v1568 = vunpack.c.h.b16 %v1411
          %v1569 = vunpack.c.l.b16 %v1412
          %v1570 = vunpack.c.h.b16 %v1412
          %v1571 = vunpack.c.l.b16 %v1413
          %v1572 = vunpack.c.h.b16 %v1413
          %v1573 = vunpack.c.l.b16 %v1414
          %v1574 = vunpack.c.h.b16 %v1414
          %v1575 = vunpack.c.l.b16 %v1415
          %v1576 = vunpack.c.h.b16 %v1415
          %v1577 = vunpack.c.l.b16 %v1416
          %v1578 = vunpack.c.h.b16 %v1416
          %v1579 = vunpack.c.l.b16 %v1417
          %v1580 = vunpack.c.h.b16 %v1417
          %v1581 = vunpack.c.l.b16 %v1418
          %v1582 = vunpack.c.h.b16 %v1418
          %v1583 = vunpack.c.l.b16 %v1419
          %v1584 = vunpack.c.h.b16 %v1419
          %v1585 = vunpack.c.l.b16 %v1420
          %v1586 = vunpack.c.h.b16 %v1420
          %v1587 = vunpack.c.l.b16 %v1421
          %v1588 = vunpack.c.h.b16 %v1421
          %v1589 = vunpack.c.l.b16 %v1422
          %v1590 = vunpack.c.h.b16 %v1422
          %v1591 = vunpack.c.l.b16 %v1423
          %v1592 = vunpack.c.h.b16 %v1423
          %v1593 = vunpack.c.l.b16 %v1424
          %v1594 = vunpack.c.h.b16 %v1424
          %v1595 = vunpack.c.l.b16 %v1425
          %v1596 = vunpack.c.h.b16 %v1425
          %v1597 = vunpack.c.l.b16 %v1426
          %v1598 = vunpack.c.h.b16 %v1426
          %v1599 = vunpack.c.l.b16 %v1427
          %v1600 = vunpack.c.h.b16 %v1427
          %v1601 = vunpack.c.l.b16 %v1428
          %v1602 = vunpack.c.h.b16 %v1428
          %v1603 = vunpack.c.l.b16 %v1429
          %v1604 = vunpack.c.h.b16 %v1429
          %v1605 = vunpack.c.l.b16 %v1430
          %v1606 = vunpack.c.h.b16 %v1430
          %v1607 = vunpack.c.l.b16 %v1431
          %v1608 = vunpack.c.h.b16 %v1431
          %v1609 = vunpack.c.l.b16 %v1432
          %v1610 = vunpack.c.h.b16 %v1432
          %v1611 = vunpack.c.l.b16 %v1433
          %v1612 = vunpack.c.h.b16 %v1433
          %v1613 = vunpack.c.l.b16 %v1434
          %v1614 = vunpack.c.h.b16 %v1434
          %v1615 = vunpack.c.l.b16 %v1435
          %v1616 = vunpack.c.h.b16 %v1435
          %v1617 = vunpack.c.l.b16 %v1436
          %v1618 = vunpack.c.h.b16 %v1436
          %v1619 = vpack.c.b16 %v1571, %v1555
          %v1620 = vpack.c.b16 %v1572, %v1556
          %v1621 = vpack.c.b16 %v1573, %v1557
          %v1622 = vpack.c.b16 %v1574, %v1558
          %v1623 = vpack.c.b16 %v1575, %v1559
          %v1624 = vpack.c.b16 %v1576, %v1560
          %v1625 = vpack.c.b16 %v1577, %v1561
          %v1626 = vpack.c.b16 %v1578, %v1562
          %v1627 = vpack.c.b16 %v1579, %v1563
          %v1628 = vpack.c.b16 %v1580, %v1564
          %v1629 = vpack.c.b16 %v1581, %v1565
          %v1630 = vpack.c.b16 %v1582, %v1566
          %v1631 = vpack.c.b16 %v1583, %v1567
          %v1632 = vpack.c.b16 %v1584, %v1568
          %v1633 = vpack.c.b16 %v1585, %v1569
          %v1634 = vpack.c.b16 %v1586, %v1570
          %v1635 = vpack.c.b16 %v1603, %v1587
          %v1636 = vpack.c.b16 %v1604, %v1588
          %v1637 = vpack.c.b16 %v1605, %v1589
          %v1638 = vpack.c.b16 %v1606, %v1590
          %v1639 = vpack.c.b16 %v1607, %v1591
          %v1640 = vpack.c.b16 %v1608, %v1592
          %v1641 = vpack.c.b16 %v1609, %v1593
          %v1642 = vpack.c.b16 %v1610, %v1594
          %v1643 = vpack.c.b16 %v1611, %v1595
          %v1644 = vpack.c.b16 %v1612, %v1596
          %v1645 = vpack.c.b16 %v1613, %v1597
          %v1646 = vpack.c.b16 %v1614, %v1598
          %v1647 = vpack.c.b16 %v1615, %v1599
          %v1648 = vpack.c.b16 %v1616, %v1600
          %v1649 = vpack.c.b16 %v1617, %v1601
          %v1650 = vpack.c.b16 %v1618, %v1602
          %v1684 = vsel %vm663, %v1401, 0
          %1686 = vmatprep.subr.bf16.mxu0 0
          %1687 = vmatpush1.bf16.msra.mxu0 0
          %1688 = vmatprep.subr.bf16.mxu0 0
          %1689 = vmatpush1.bf16.msra.mxu0 0
          %1690 = vmatprep.subr.bf16.mxu0 0
          %1691 = vmatpush1.bf16.msra.mxu0 0
          %1692 = vmatprep.subr.bf16.mxu0 0
          %1693 = vmatpush1.bf16.msra.mxu0 0
          %1694 = vmatprep.subr.bf16.mxu0 0
          %1695 = vmatpush1.bf16.msra.mxu0 0
          %1696 = vmatprep.subr.bf16.mxu0 0
          %1697 = vmatpush1.bf16.msra.mxu0 0
          %1698 = vmatprep.subr.bf16.mxu0 %v1636
          %1699 = vmatpush1.bf16.msra.mxu0 %v1635
          %1700 = vmatprep.subr.bf16.mxu0 %v1620
          %1701 = vmatpush1.bf16.msra.mxu0 %v1619
          %1702 = vmatprep.subr.bf16.mxu0 0
          %1703 = vmatpush2.bf16.msra.mxu0 0
          %1704 = vmatprep.subr.bf16.mxu0 0
          %1705 = vmatpush2.bf16.msra.mxu0 0
          %1706 = vmatprep.subr.bf16.mxu0 0
          %1707 = vmatpush2.bf16.msra.mxu0 0
          %1708 = vmatprep.subr.bf16.mxu0 0
          %1709 = vmatpush2.bf16.msra.mxu0 0
          %1710 = vmatprep.subr.bf16.mxu0 0
          %1711 = vmatpush2.bf16.msra.mxu0 0
          %1712 = vmatprep.subr.bf16.mxu0 0
          %1713 = vmatpush2.bf16.msra.mxu0 0
          %1714 = vmatprep.subr.bf16.mxu0 0
          %1715 = vmatpush2.bf16.msra.mxu0 0
          %1716 = vmatprep.subr.bf16.mxu0 0
          %1717 = vmatpush2.bf16.msra.mxu0 0
          %1718 = vmatprep.mubr.bf16.mxu0 0
          %1719 = vmatmul.mubr.bf16.gmra.mxu0 %v1684
          %v1720 = vpop.f32.mrf.mxu0
          %v1721 = vadd.f32 %v1446, %v1720
          %v1722 = vpop.f32.mrf.mxu0
          %v1723 = vadd.f32 %v1450, %v1722
          %v1724 = vpop.f32.mrf.mxu0
          %v1725 = vpop.f32.mrf.mxu0
          %1726 = vdwg.mxu0
          %1727 = vmatprep.subr.bf16.mxu0 0
          %1728 = vmatpush1.bf16.msra.mxu0 0
          %1729 = vmatprep.subr.bf16.mxu0 0
          %1730 = vmatpush1.bf16.msra.mxu0 0
          %1731 = vmatprep.subr.bf16.mxu0 0
          %1732 = vmatpush1.bf16.msra.mxu0 0
          %1733 = vmatprep.subr.bf16.mxu0 0
          %1734 = vmatpush1.bf16.msra.mxu0 0
          %1735 = vmatprep.subr.bf16.mxu0 0
          %1736 = vmatpush1.bf16.msra.mxu0 0
          %1737 = vmatprep.subr.bf16.mxu0 0
          %1738 = vmatpush1.bf16.msra.mxu0 0
          %1739 = vmatprep.subr.bf16.mxu0 %v1638
          %1740 = vmatpush1.bf16.msra.mxu0 %v1637
          %1741 = vmatprep.subr.bf16.mxu0 %v1622
          %1742 = vmatpush1.bf16.msra.mxu0 %v1621
          %1743 = vmatprep.subr.bf16.mxu0 0
          %1744 = vmatpush2.bf16.msra.mxu0 0
          %1745 = vmatprep.subr.bf16.mxu0 0
          %1746 = vmatpush2.bf16.msra.mxu0 0
          %1747 = vmatprep.subr.bf16.mxu0 0
          %1748 = vmatpush2.bf16.msra.mxu0 0
          %1749 = vmatprep.subr.bf16.mxu0 0
          %1750 = vmatpush2.bf16.msra.mxu0 0
          %1751 = vmatprep.subr.bf16.mxu0 0
          %1752 = vmatpush2.bf16.msra.mxu0 0
          %1753 = vmatprep.subr.bf16.mxu0 0
          %1754 = vmatpush2.bf16.msra.mxu0 0
          %1755 = vmatprep.subr.bf16.mxu0 0
          %1756 = vmatpush2.bf16.msra.mxu0 0
          %1757 = vmatprep.subr.bf16.mxu0 0
          %1758 = vmatpush2.bf16.msra.mxu0 0
          %1759 = vmatprep.mubr.bf16.mxu0 0
          %1760 = vmatmul.mubr.bf16.gmra.mxu0 %v1684
          %v1761 = vpop.f32.mrf.mxu0
          %v1762 = vadd.f32 %v1454, %v1761
          %v1763 = vpop.f32.mrf.mxu0
          %v1764 = vadd.f32 %v1458, %v1763
          %v1765 = vpop.f32.mrf.mxu0
          %v1766 = vpop.f32.mrf.mxu0
          %1767 = vdwg.mxu0
          %1768 = vmatprep.subr.bf16.mxu0 0
          %1769 = vmatpush1.bf16.msra.mxu0 0
          %1770 = vmatprep.subr.bf16.mxu0 0
          %1771 = vmatpush1.bf16.msra.mxu0 0
          %1772 = vmatprep.subr.bf16.mxu0 0
          %1773 = vmatpush1.bf16.msra.mxu0 0
          %1774 = vmatprep.subr.bf16.mxu0 0
          %1775 = vmatpush1.bf16.msra.mxu0 0
          %1776 = vmatprep.subr.bf16.mxu0 0
          %1777 = vmatpush1.bf16.msra.mxu0 0
          %1778 = vmatprep.subr.bf16.mxu0 0
          %1779 = vmatpush1.bf16.msra.mxu0 0
          %1780 = vmatprep.subr.bf16.mxu0 %v1640
          %1781 = vmatpush1.bf16.msra.mxu0 %v1639
          %1782 = vmatprep.subr.bf16.mxu0 %v1624
          %1783 = vmatpush1.bf16.msra.mxu0 %v1623
          %1784 = vmatprep.subr.bf16.mxu0 0
          %1785 = vmatpush2.bf16.msra.mxu0 0
          %1786 = vmatprep.subr.bf16.mxu0 0
          %1787 = vmatpush2.bf16.msra.mxu0 0
          %1788 = vmatprep.subr.bf16.mxu0 0
          %1789 = vmatpush2.bf16.msra.mxu0 0
          %1790 = vmatprep.subr.bf16.mxu0 0
          %1791 = vmatpush2.bf16.msra.mxu0 0
          %1792 = vmatprep.subr.bf16.mxu0 0
          %1793 = vmatpush2.bf16.msra.mxu0 0
          %1794 = vmatprep.subr.bf16.mxu0 0
          %1795 = vmatpush2.bf16.msra.mxu0 0
          %1796 = vmatprep.subr.bf16.mxu0 0
          %1797 = vmatpush2.bf16.msra.mxu0 0
          %1798 = vmatprep.subr.bf16.mxu0 0
          %1799 = vmatpush2.bf16.msra.mxu0 0
          %1800 = vmatprep.mubr.bf16.mxu0 0
          %1801 = vmatmul.mubr.bf16.gmra.mxu0 %v1684
          %v1802 = vpop.f32.mrf.mxu0
          %v1803 = vadd.f32 %v1462, %v1802
          %v1804 = vpop.f32.mrf.mxu0
          %v1805 = vadd.f32 %v1466, %v1804
          %v1806 = vpop.f32.mrf.mxu0
          %v1807 = vpop.f32.mrf.mxu0
          %1808 = vdwg.mxu0
          %1809 = vmatprep.subr.bf16.mxu0 0
          %1810 = vmatpush1.bf16.msra.mxu0 0
          %1811 = vmatprep.subr.bf16.mxu0 0
          %1812 = vmatpush1.bf16.msra.mxu0 0
          %1813 = vmatprep.subr.bf16.mxu0 0
          %1814 = vmatpush1.bf16.msra.mxu0 0
          %1815 = vmatprep.subr.bf16.mxu0 0
          %1816 = vmatpush1.bf16.msra.mxu0 0
          %1817 = vmatprep.subr.bf16.mxu0 0
          %1818 = vmatpush1.bf16.msra.mxu0 0
          %1819 = vmatprep.subr.bf16.mxu0 0
          %1820 = vmatpush1.bf16.msra.mxu0 0
          %1821 = vmatprep.subr.bf16.mxu0 %v1642
          %1822 = vmatpush1.bf16.msra.mxu0 %v1641
          %1823 = vmatprep.subr.bf16.mxu0 %v1626
          %1824 = vmatpush1.bf16.msra.mxu0 %v1625
          %1825 = vmatprep.subr.bf16.mxu0 0
          %1826 = vmatpush2.bf16.msra.mxu0 0
          %1827 = vmatprep.subr.bf16.mxu0 0
          %1828 = vmatpush2.bf16.msra.mxu0 0
          %1829 = vmatprep.subr.bf16.mxu0 0
          %1830 = vmatpush2.bf16.msra.mxu0 0
          %1831 = vmatprep.subr.bf16.mxu0 0
          %1832 = vmatpush2.bf16.msra.mxu0 0
          %1833 = vmatprep.subr.bf16.mxu0 0
          %1834 = vmatpush2.bf16.msra.mxu0 0
          %1835 = vmatprep.subr.bf16.mxu0 0
          %1836 = vmatpush2.bf16.msra.mxu0 0
          %1837 = vmatprep.subr.bf16.mxu0 0
          %1838 = vmatpush2.bf16.msra.mxu0 0
          %1839 = vmatprep.subr.bf16.mxu0 0
          %1840 = vmatpush2.bf16.msra.mxu0 0
          %1841 = vmatprep.mubr.bf16.mxu0 0
          %1842 = vmatmul.mubr.bf16.gmra.mxu0 %v1684
          %v1843 = vpop.f32.mrf.mxu0
          %v1844 = vadd.f32 %v1470, %v1843
          %v1845 = vpop.f32.mrf.mxu0
          %v1846 = vadd.f32 %v1474, %v1845
          %v1847 = vpop.f32.mrf.mxu0
          %v1848 = vpop.f32.mrf.mxu0
          %1849 = vdwg.mxu0
          %1850 = vmatprep.subr.bf16.mxu0 0
          %1851 = vmatpush1.bf16.msra.mxu0 0
          %1852 = vmatprep.subr.bf16.mxu0 0
          %1853 = vmatpush1.bf16.msra.mxu0 0
          %1854 = vmatprep.subr.bf16.mxu0 0
          %1855 = vmatpush1.bf16.msra.mxu0 0
          %1856 = vmatprep.subr.bf16.mxu0 0
          %1857 = vmatpush1.bf16.msra.mxu0 0
          %1858 = vmatprep.subr.bf16.mxu0 0
          %1859 = vmatpush1.bf16.msra.mxu0 0
          %1860 = vmatprep.subr.bf16.mxu0 0
          %1861 = vmatpush1.bf16.msra.mxu0 0
          %1862 = vmatprep.subr.bf16.mxu0 %v1644
          %1863 = vmatpush1.bf16.msra.mxu0 %v1643
          %1864 = vmatprep.subr.bf16.mxu0 %v1628
          %1865 = vmatpush1.bf16.msra.mxu0 %v1627
          %1866 = vmatprep.subr.bf16.mxu0 0
          %1867 = vmatpush2.bf16.msra.mxu0 0
          %1868 = vmatprep.subr.bf16.mxu0 0
          %1869 = vmatpush2.bf16.msra.mxu0 0
          %1870 = vmatprep.subr.bf16.mxu0 0
          %1871 = vmatpush2.bf16.msra.mxu0 0
          %1872 = vmatprep.subr.bf16.mxu0 0
          %1873 = vmatpush2.bf16.msra.mxu0 0
          %1874 = vmatprep.subr.bf16.mxu0 0
          %1875 = vmatpush2.bf16.msra.mxu0 0
          %1876 = vmatprep.subr.bf16.mxu0 0
          %1877 = vmatpush2.bf16.msra.mxu0 0
          %1878 = vmatprep.subr.bf16.mxu0 0
          %1879 = vmatpush2.bf16.msra.mxu0 0
          %1880 = vmatprep.subr.bf16.mxu0 0
          %1881 = vmatpush2.bf16.msra.mxu0 0
          %1882 = vmatprep.mubr.bf16.mxu0 0
          %1883 = vmatmul.mubr.bf16.gmra.mxu0 %v1684
          %v1884 = vpop.f32.mrf.mxu0
          %v1885 = vadd.f32 %v1478, %v1884
          %v1886 = vpop.f32.mrf.mxu0
          %v1887 = vadd.f32 %v1482, %v1886
          %v1888 = vpop.f32.mrf.mxu0
          %v1889 = vpop.f32.mrf.mxu0
          %1890 = vdwg.mxu0
          %1891 = vmatprep.subr.bf16.mxu0 0
          %1892 = vmatpush1.bf16.msra.mxu0 0
          %1893 = vmatprep.subr.bf16.mxu0 0
          %1894 = vmatpush1.bf16.msra.mxu0 0
          %1895 = vmatprep.subr.bf16.mxu0 0
          %1896 = vmatpush1.bf16.msra.mxu0 0
          %1897 = vmatprep.subr.bf16.mxu0 0
          %1898 = vmatpush1.bf16.msra.mxu0 0
          %1899 = vmatprep.subr.bf16.mxu0 0
          %1900 = vmatpush1.bf16.msra.mxu0 0
          %1901 = vmatprep.subr.bf16.mxu0 0
          %1902 = vmatpush1.bf16.msra.mxu0 0
          %1903 = vmatprep.subr.bf16.mxu0 %v1646
          %1904 = vmatpush1.bf16.msra.mxu0 %v1645
          %1905 = vmatprep.subr.bf16.mxu0 %v1630
          %1906 = vmatpush1.bf16.msra.mxu0 %v1629
          %1907 = vmatprep.subr.bf16.mxu0 0
          %1908 = vmatpush2.bf16.msra.mxu0 0
          %1909 = vmatprep.subr.bf16.mxu0 0
          %1910 = vmatpush2.bf16.msra.mxu0 0
          %1911 = vmatprep.subr.bf16.mxu0 0
          %1912 = vmatpush2.bf16.msra.mxu0 0
          %1913 = vmatprep.subr.bf16.mxu0 0
          %1914 = vmatpush2.bf16.msra.mxu0 0
          %1915 = vmatprep.subr.bf16.mxu0 0
          %1916 = vmatpush2.bf16.msra.mxu0 0
          %1917 = vmatprep.subr.bf16.mxu0 0
          %1918 = vmatpush2.bf16.msra.mxu0 0
          %1919 = vmatprep.subr.bf16.mxu0 0
          %1920 = vmatpush2.bf16.msra.mxu0 0
          %1921 = vmatprep.subr.bf16.mxu0 0
          %1922 = vmatpush2.bf16.msra.mxu0 0
          %1923 = vmatprep.mubr.bf16.mxu0 0
          %1924 = vmatmul.mubr.bf16.gmra.mxu0 %v1684
          %v1925 = vpop.f32.mrf.mxu0
          %v1926 = vadd.f32 %v1486, %v1925
          %v1927 = vpop.f32.mrf.mxu0
          %v1928 = vadd.f32 %v1490, %v1927
          %v1929 = vpop.f32.mrf.mxu0
          %v1930 = vpop.f32.mrf.mxu0
          %1931 = vdwg.mxu0
          %1932 = vmatprep.subr.bf16.mxu0 0
          %1933 = vmatpush1.bf16.msra.mxu0 0
          %1934 = vmatprep.subr.bf16.mxu0 0
          %1935 = vmatpush1.bf16.msra.mxu0 0
          %1936 = vmatprep.subr.bf16.mxu0 0
          %1937 = vmatpush1.bf16.msra.mxu0 0
          %1938 = vmatprep.subr.bf16.mxu0 0
          %1939 = vmatpush1.bf16.msra.mxu0 0
          %1940 = vmatprep.subr.bf16.mxu0 0
          %1941 = vmatpush1.bf16.msra.mxu0 0
          %1942 = vmatprep.subr.bf16.mxu0 0
          %1943 = vmatpush1.bf16.msra.mxu0 0
          %1944 = vmatprep.subr.bf16.mxu0 %v1648
          %1945 = vmatpush1.bf16.msra.mxu0 %v1647
          %1946 = vmatprep.subr.bf16.mxu0 %v1632
          %1947 = vmatpush1.bf16.msra.mxu0 %v1631
          %1948 = vmatprep.subr.bf16.mxu0 0
          %1949 = vmatpush2.bf16.msra.mxu0 0
          %1950 = vmatprep.subr.bf16.mxu0 0
          %1951 = vmatpush2.bf16.msra.mxu0 0
          %1952 = vmatprep.subr.bf16.mxu0 0
          %1953 = vmatpush2.bf16.msra.mxu0 0
          %1954 = vmatprep.subr.bf16.mxu0 0
          %1955 = vmatpush2.bf16.msra.mxu0 0
          %1956 = vmatprep.subr.bf16.mxu0 0
          %1957 = vmatpush2.bf16.msra.mxu0 0
          %1958 = vmatprep.subr.bf16.mxu0 0
          %1959 = vmatpush2.bf16.msra.mxu0 0
          %1960 = vmatprep.subr.bf16.mxu0 0
          %1961 = vmatpush2.bf16.msra.mxu0 0
          %1962 = vmatprep.subr.bf16.mxu0 0
          %1963 = vmatpush2.bf16.msra.mxu0 0
          %1964 = vmatprep.mubr.bf16.mxu0 0
          %1965 = vmatmul.mubr.bf16.gmra.mxu0 %v1684
          %v1966 = vpop.f32.mrf.mxu0
          %v1967 = vadd.f32 %v1494, %v1966
          %v1968 = vpop.f32.mrf.mxu0
          %v1969 = vadd.f32 %v1498, %v1968
          %v1970 = vpop.f32.mrf.mxu0
          %v1971 = vpop.f32.mrf.mxu0
          %1972 = vdwg.mxu0
          %1973 = vmatprep.subr.bf16.mxu0 0
          %1974 = vmatpush1.bf16.msra.mxu0 0
          %1975 = vmatprep.subr.bf16.mxu0 0
          %1976 = vmatpush1.bf16.msra.mxu0 0
          %1977 = vmatprep.subr.bf16.mxu0 0
          %1978 = vmatpush1.bf16.msra.mxu0 0
          %1979 = vmatprep.subr.bf16.mxu0 0
          %1980 = vmatpush1.bf16.msra.mxu0 0
          %1981 = vmatprep.subr.bf16.mxu0 0
          %1982 = vmatpush1.bf16.msra.mxu0 0
          %1983 = vmatprep.subr.bf16.mxu0 0
          %1984 = vmatpush1.bf16.msra.mxu0 0
          %1985 = vmatprep.subr.bf16.mxu0 %v1650
          %1986 = vmatpush1.bf16.msra.mxu0 %v1649
          %1987 = vmatprep.subr.bf16.mxu0 %v1634
          %1988 = vmatpush1.bf16.msra.mxu0 %v1633
          %1989 = vmatprep.subr.bf16.mxu0 0
          %1990 = vmatpush2.bf16.msra.mxu0 0
          %1991 = vmatprep.subr.bf16.mxu0 0
          %1992 = vmatpush2.bf16.msra.mxu0 0
          %1993 = vmatprep.subr.bf16.mxu0 0
          %1994 = vmatpush2.bf16.msra.mxu0 0
          %1995 = vmatprep.subr.bf16.mxu0 0
          %1996 = vmatpush2.bf16.msra.mxu0 0
          %1997 = vmatprep.subr.bf16.mxu0 0
          %1998 = vmatpush2.bf16.msra.mxu0 0
          %1999 = vmatprep.subr.bf16.mxu0 0
          %2000 = vmatpush2.bf16.msra.mxu0 0
          %2001 = vmatprep.subr.bf16.mxu0 0
          %2002 = vmatpush2.bf16.msra.mxu0 0
          %2003 = vmatprep.subr.bf16.mxu0 0
          %2004 = vmatpush2.bf16.msra.mxu0 0
          %2005 = vmatprep.mubr.bf16.mxu0 0
          %2006 = vmatmul.mubr.bf16.gmra.mxu0 %v1684
          %v2007 = vpop.f32.mrf.mxu0
          %v2008 = vadd.f32 %v1502, %v2007
          %v2009 = vpop.f32.mrf.mxu0
          %v2010 = vadd.f32 %v1506, %v2009
          %v2011 = vpop.f32.mrf.mxu0
          %v2012 = vpop.f32.mrf.mxu0
          %2013 = vdwg.mxu0
          %v2014 = vmax.f32 %v1721, 0.0
          %v2015 = vmax.f32 %v1723, 0.0
          %v2016 = vmax.f32 %v1762, 0.0
          %v2017 = vmax.f32 %v1764, 0.0
          %v2018 = vmax.f32 %v1803, 0.0
          %v2019 = vmax.f32 %v1805, 0.0
          %v2020 = vmax.f32 %v1844, 0.0
          %v2021 = vmax.f32 %v1846, 0.0
          %v2022 = vmax.f32 %v1885, 0.0
          %v2023 = vmax.f32 %v1887, 0.0
          %v2024 = vmax.f32 %v1926, 0.0
          %v2025 = vmax.f32 %v1928, 0.0
          %v2026 = vmax.f32 %v1967, 0.0
          %v2027 = vmax.f32 %v1969, 0.0
          %v2028 = vmax.f32 %v2008, 0.0
          %v2029 = vmax.f32 %v2010, 0.0
          %v2030 = vpack.c.bf16 %v2014, %v2014
          %v2031 = vpack.c.bf16 %v2015, %v2015
          %v2032 = vpack.c.bf16 %v2016, %v2016
          %v2033 = vpack.c.bf16 %v2017, %v2017
          %v2034 = vpack.c.bf16 %v2018, %v2018
          %v2035 = vpack.c.bf16 %v2019, %v2019
          %v2036 = vpack.c.bf16 %v2020, %v2020
          %v2037 = vpack.c.bf16 %v2021, %v2021
          %v2038 = vpack.c.bf16 %v2022, %v2022
          %v2039 = vpack.c.bf16 %v2023, %v2023
          %v2040 = vpack.c.bf16 %v2024, %v2024
          %v2041 = vpack.c.bf16 %v2025, %v2025
          %v2042 = vpack.c.bf16 %v2026, %v2026
          %v2043 = vpack.c.bf16 %v2027, %v2027
          %v2044 = vpack.c.bf16 %v2028, %v2028
          %v2045 = vpack.c.bf16 %v2029, %v2029
          %s2046 = smul.u32 %s629, 256
          %s2047 = smul.addr %s2046, 4
          %s2048 = scalar_lea.vmem %s14, %s2047
          %v2049 = vld [vmem:[%s2048] sm:$0xf]
          %v2050 = vld [vmem:[%s2048 + $0x4] sm:$0xf]
          %v2051 = vld [vmem:[%s2048 + $0x8] sm:$0xf]
          %v2052 = vld [vmem:[%s2048 + $0xc] sm:$0xf]
          %v2053 = vld [vmem:[%s2048 + $0x10] sm:$0xf]
          %v2054 = vld [vmem:[%s2048 + $0x14] sm:$0xf]
          %v2055 = vld [vmem:[%s2048 + $0x18] sm:$0xf]
          %v2056 = vld [vmem:[%s2048 + $0x1c] sm:$0xf]
          %v2057 = vld [vmem:[%s2048 + $0x20] sm:$0xf]
          %v2058 = vld [vmem:[%s2048 + $0x24] sm:$0xf]
          %v2059 = vld [vmem:[%s2048 + $0x28] sm:$0xf]
          %v2060 = vld [vmem:[%s2048 + $0x2c] sm:$0xf]
          %v2061 = vld [vmem:[%s2048 + $0x30] sm:$0xf]
          %v2062 = vld [vmem:[%s2048 + $0x34] sm:$0xf]
          %v2063 = vld [vmem:[%s2048 + $0x38] sm:$0xf]
          %v2064 = vld [vmem:[%s2048 + $0x3c] sm:$0xf]
          %v2065 = vld [vmem:[%s2048 + $0x40] sm:$0xf]
          %v2066 = vld [vmem:[%s2048 + $0x44] sm:$0xf]
          %v2067 = vld [vmem:[%s2048 + $0x48] sm:$0xf]
          %v2068 = vld [vmem:[%s2048 + $0x4c] sm:$0xf]
          %v2069 = vld [vmem:[%s2048 + $0x50] sm:$0xf]
          %v2070 = vld [vmem:[%s2048 + $0x54] sm:$0xf]
          %v2071 = vld [vmem:[%s2048 + $0x58] sm:$0xf]
          %v2072 = vld [vmem:[%s2048 + $0x5c] sm:$0xf]
          %v2073 = vld [vmem:[%s2048 + $0x60] sm:$0xf]
          %v2074 = vld [vmem:[%s2048 + $0x64] sm:$0xf]
          %v2075 = vld [vmem:[%s2048 + $0x68] sm:$0xf]
          %v2076 = vld [vmem:[%s2048 + $0x6c] sm:$0xf]
          %v2077 = vld [vmem:[%s2048 + $0x70] sm:$0xf]
          %v2078 = vld [vmem:[%s2048 + $0x74] sm:$0xf]
          %v2079 = vld [vmem:[%s2048 + $0x78] sm:$0xf]
          %v2080 = vld [vmem:[%s2048 + $0x7c] sm:$0xf]
          %v2081 = vld [vmem:[%s2048 + $0x80] sm:$0xf]
          %v2082 = vld [vmem:[%s2048 + $0x84] sm:$0xf]
          %v2083 = vld [vmem:[%s2048 + $0x88] sm:$0xf]
          %v2084 = vld [vmem:[%s2048 + $0x8c] sm:$0xf]
          %v2085 = vld [vmem:[%s2048 + $0x90] sm:$0xf]
          %v2086 = vld [vmem:[%s2048 + $0x94] sm:$0xf]
          %v2087 = vld [vmem:[%s2048 + $0x98] sm:$0xf]
          %v2088 = vld [vmem:[%s2048 + $0x9c] sm:$0xf]
          %v2089 = vld [vmem:[%s2048 + $0xa0] sm:$0xf]
          %v2090 = vld [vmem:[%s2048 + $0xa4] sm:$0xf]
          %v2091 = vld [vmem:[%s2048 + $0xa8] sm:$0xf]
          %v2092 = vld [vmem:[%s2048 + $0xac] sm:$0xf]
          %v2093 = vld [vmem:[%s2048 + $0xb0] sm:$0xf]
          %v2094 = vld [vmem:[%s2048 + $0xb4] sm:$0xf]
          %v2095 = vld [vmem:[%s2048 + $0xb8] sm:$0xf]
          %v2096 = vld [vmem:[%s2048 + $0xbc] sm:$0xf]
          %v2097 = vld [vmem:[%s2048 + $0xc0] sm:$0xf]
          %v2098 = vld [vmem:[%s2048 + $0xc4] sm:$0xf]
          %v2099 = vld [vmem:[%s2048 + $0xc8] sm:$0xf]
          %v2100 = vld [vmem:[%s2048 + $0xcc] sm:$0xf]
          %v2101 = vld [vmem:[%s2048 + $0xd0] sm:$0xf]
          %v2102 = vld [vmem:[%s2048 + $0xd4] sm:$0xf]
          %v2103 = vld [vmem:[%s2048 + $0xd8] sm:$0xf]
          %v2104 = vld [vmem:[%s2048 + $0xdc] sm:$0xf]
          %v2105 = vld [vmem:[%s2048 + $0xe0] sm:$0xf]
          %v2106 = vld [vmem:[%s2048 + $0xe4] sm:$0xf]
          %v2107 = vld [vmem:[%s2048 + $0xe8] sm:$0xf]
          %v2108 = vld [vmem:[%s2048 + $0xec] sm:$0xf]
          %v2109 = vld [vmem:[%s2048 + $0xf0] sm:$0xf]
          %v2110 = vld [vmem:[%s2048 + $0xf4] sm:$0xf]
          %v2111 = vld [vmem:[%s2048 + $0xf8] sm:$0xf]
          %v2112 = vld [vmem:[%s2048 + $0xfc] sm:$0xf]
          %v2113 = vld [vmem:[%s2048 + $0x100] sm:$0xf]
          %v2114 = vld [vmem:[%s2048 + $0x104] sm:$0xf]
          %v2115 = vld [vmem:[%s2048 + $0x108] sm:$0xf]
          %v2116 = vld [vmem:[%s2048 + $0x10c] sm:$0xf]
          %v2117 = vld [vmem:[%s2048 + $0x110] sm:$0xf]
          %v2118 = vld [vmem:[%s2048 + $0x114] sm:$0xf]
          %v2119 = vld [vmem:[%s2048 + $0x118] sm:$0xf]
          %v2120 = vld [vmem:[%s2048 + $0x11c] sm:$0xf]
          %v2121 = vld [vmem:[%s2048 + $0x120] sm:$0xf]
          %v2122 = vld [vmem:[%s2048 + $0x124] sm:$0xf]
          %v2123 = vld [vmem:[%s2048 + $0x128] sm:$0xf]
          %v2124 = vld [vmem:[%s2048 + $0x12c] sm:$0xf]
          %v2125 = vld [vmem:[%s2048 + $0x130] sm:$0xf]
          %v2126 = vld [vmem:[%s2048 + $0x134] sm:$0xf]
          %v2127 = vld [vmem:[%s2048 + $0x138] sm:$0xf]
          %v2128 = vld [vmem:[%s2048 + $0x13c] sm:$0xf]
          %v2129 = vld [vmem:[%s2048 + $0x140] sm:$0xf]
          %v2130 = vld [vmem:[%s2048 + $0x144] sm:$0xf]
          %v2131 = vld [vmem:[%s2048 + $0x148] sm:$0xf]
          %v2132 = vld [vmem:[%s2048 + $0x14c] sm:$0xf]
          %v2133 = vld [vmem:[%s2048 + $0x150] sm:$0xf]
          %v2134 = vld [vmem:[%s2048 + $0x154] sm:$0xf]
          %v2135 = vld [vmem:[%s2048 + $0x158] sm:$0xf]
          %v2136 = vld [vmem:[%s2048 + $0x15c] sm:$0xf]
          %v2137 = vld [vmem:[%s2048 + $0x160] sm:$0xf]
          %v2138 = vld [vmem:[%s2048 + $0x164] sm:$0xf]
          %v2139 = vld [vmem:[%s2048 + $0x168] sm:$0xf]
          %v2140 = vld [vmem:[%s2048 + $0x16c] sm:$0xf]
          %v2141 = vld [vmem:[%s2048 + $0x170] sm:$0xf]
          %v2142 = vld [vmem:[%s2048 + $0x174] sm:$0xf]
          %v2143 = vld [vmem:[%s2048 + $0x178] sm:$0xf]
          %v2144 = vld [vmem:[%s2048 + $0x17c] sm:$0xf]
          %v2145 = vld [vmem:[%s2048 + $0x180] sm:$0xf]
          %v2146 = vld [vmem:[%s2048 + $0x184] sm:$0xf]
          %v2147 = vld [vmem:[%s2048 + $0x188] sm:$0xf]
          %v2148 = vld [vmem:[%s2048 + $0x18c] sm:$0xf]
          %v2149 = vld [vmem:[%s2048 + $0x190] sm:$0xf]
          %v2150 = vld [vmem:[%s2048 + $0x194] sm:$0xf]
          %v2151 = vld [vmem:[%s2048 + $0x198] sm:$0xf]
          %v2152 = vld [vmem:[%s2048 + $0x19c] sm:$0xf]
          %v2153 = vld [vmem:[%s2048 + $0x1a0] sm:$0xf]
          %v2154 = vld [vmem:[%s2048 + $0x1a4] sm:$0xf]
          %v2155 = vld [vmem:[%s2048 + $0x1a8] sm:$0xf]
          %v2156 = vld [vmem:[%s2048 + $0x1ac] sm:$0xf]
          %v2157 = vld [vmem:[%s2048 + $0x1b0] sm:$0xf]
          %v2158 = vld [vmem:[%s2048 + $0x1b4] sm:$0xf]
          %v2159 = vld [vmem:[%s2048 + $0x1b8] sm:$0xf]
          %v2160 = vld [vmem:[%s2048 + $0x1bc] sm:$0xf]
          %v2161 = vld [vmem:[%s2048 + $0x1c0] sm:$0xf]
          %v2162 = vld [vmem:[%s2048 + $0x1c4] sm:$0xf]
          %v2163 = vld [vmem:[%s2048 + $0x1c8] sm:$0xf]
          %v2164 = vld [vmem:[%s2048 + $0x1cc] sm:$0xf]
          %v2165 = vld [vmem:[%s2048 + $0x1d0] sm:$0xf]
          %v2166 = vld [vmem:[%s2048 + $0x1d4] sm:$0xf]
          %v2167 = vld [vmem:[%s2048 + $0x1d8] sm:$0xf]
          %v2168 = vld [vmem:[%s2048 + $0x1dc] sm:$0xf]
          %v2169 = vld [vmem:[%s2048 + $0x1e0] sm:$0xf]
          %v2170 = vld [vmem:[%s2048 + $0x1e4] sm:$0xf]
          %v2171 = vld [vmem:[%s2048 + $0x1e8] sm:$0xf]
          %v2172 = vld [vmem:[%s2048 + $0x1ec] sm:$0xf]
          %v2173 = vld [vmem:[%s2048 + $0x1f0] sm:$0xf]
          %v2174 = vld [vmem:[%s2048 + $0x1f4] sm:$0xf]
          %v2175 = vld [vmem:[%s2048 + $0x1f8] sm:$0xf]
          %v2176 = vld [vmem:[%s2048 + $0x1fc] sm:$0xf]
          %v2177 = vld [vmem:[%s2048 + $0x200] sm:$0xf]
          %v2178 = vld [vmem:[%s2048 + $0x204] sm:$0xf]
          %v2179 = vld [vmem:[%s2048 + $0x208] sm:$0xf]
          %v2180 = vld [vmem:[%s2048 + $0x20c] sm:$0xf]
          %v2181 = vld [vmem:[%s2048 + $0x210] sm:$0xf]
          %v2182 = vld [vmem:[%s2048 + $0x214] sm:$0xf]
          %v2183 = vld [vmem:[%s2048 + $0x218] sm:$0xf]
          %v2184 = vld [vmem:[%s2048 + $0x21c] sm:$0xf]
          %v2185 = vld [vmem:[%s2048 + $0x220] sm:$0xf]
          %v2186 = vld [vmem:[%s2048 + $0x224] sm:$0xf]
          %v2187 = vld [vmem:[%s2048 + $0x228] sm:$0xf]
          %v2188 = vld [vmem:[%s2048 + $0x22c] sm:$0xf]
          %v2189 = vld [vmem:[%s2048 + $0x230] sm:$0xf]
          %v2190 = vld [vmem:[%s2048 + $0x234] sm:$0xf]
          %v2191 = vld [vmem:[%s2048 + $0x238] sm:$0xf]
          %v2192 = vld [vmem:[%s2048 + $0x23c] sm:$0xf]
          %v2193 = vld [vmem:[%s2048 + $0x240] sm:$0xf]
          %v2194 = vld [vmem:[%s2048 + $0x244] sm:$0xf]
          %v2195 = vld [vmem:[%s2048 + $0x248] sm:$0xf]
          %v2196 = vld [vmem:[%s2048 + $0x24c] sm:$0xf]
          %v2197 = vld [vmem:[%s2048 + $0x250] sm:$0xf]
          %v2198 = vld [vmem:[%s2048 + $0x254] sm:$0xf]
          %v2199 = vld [vmem:[%s2048 + $0x258] sm:$0xf]
          %v2200 = vld [vmem:[%s2048 + $0x25c] sm:$0xf]
          %v2201 = vld [vmem:[%s2048 + $0x260] sm:$0xf]
          %v2202 = vld [vmem:[%s2048 + $0x264] sm:$0xf]
          %v2203 = vld [vmem:[%s2048 + $0x268] sm:$0xf]
          %v2204 = vld [vmem:[%s2048 + $0x26c] sm:$0xf]
          %v2205 = vld [vmem:[%s2048 + $0x270] sm:$0xf]
          %v2206 = vld [vmem:[%s2048 + $0x274] sm:$0xf]
          %v2207 = vld [vmem:[%s2048 + $0x278] sm:$0xf]
          %v2208 = vld [vmem:[%s2048 + $0x27c] sm:$0xf]
          %v2209 = vld [vmem:[%s2048 + $0x280] sm:$0xf]
          %v2210 = vld [vmem:[%s2048 + $0x284] sm:$0xf]
          %v2211 = vld [vmem:[%s2048 + $0x288] sm:$0xf]
          %v2212 = vld [vmem:[%s2048 + $0x28c] sm:$0xf]
          %v2213 = vld [vmem:[%s2048 + $0x290] sm:$0xf]
          %v2214 = vld [vmem:[%s2048 + $0x294] sm:$0xf]
          %v2215 = vld [vmem:[%s2048 + $0x298] sm:$0xf]
          %v2216 = vld [vmem:[%s2048 + $0x29c] sm:$0xf]
          %v2217 = vld [vmem:[%s2048 + $0x2a0] sm:$0xf]
          %v2218 = vld [vmem:[%s2048 + $0x2a4] sm:$0xf]
          %v2219 = vld [vmem:[%s2048 + $0x2a8] sm:$0xf]
          %v2220 = vld [vmem:[%s2048 + $0x2ac] sm:$0xf]
          %v2221 = vld [vmem:[%s2048 + $0x2b0] sm:$0xf]
          %v2222 = vld [vmem:[%s2048 + $0x2b4] sm:$0xf]
          %v2223 = vld [vmem:[%s2048 + $0x2b8] sm:$0xf]
          %v2224 = vld [vmem:[%s2048 + $0x2bc] sm:$0xf]
          %v2225 = vld [vmem:[%s2048 + $0x2c0] sm:$0xf]
          %v2226 = vld [vmem:[%s2048 + $0x2c4] sm:$0xf]
          %v2227 = vld [vmem:[%s2048 + $0x2c8] sm:$0xf]
          %v2228 = vld [vmem:[%s2048 + $0x2cc] sm:$0xf]
          %v2229 = vld [vmem:[%s2048 + $0x2d0] sm:$0xf]
          %v2230 = vld [vmem:[%s2048 + $0x2d4] sm:$0xf]
          %v2231 = vld [vmem:[%s2048 + $0x2d8] sm:$0xf]
          %v2232 = vld [vmem:[%s2048 + $0x2dc] sm:$0xf]
          %v2233 = vld [vmem:[%s2048 + $0x2e0] sm:$0xf]
          %v2234 = vld [vmem:[%s2048 + $0x2e4] sm:$0xf]
          %v2235 = vld [vmem:[%s2048 + $0x2e8] sm:$0xf]
          %v2236 = vld [vmem:[%s2048 + $0x2ec] sm:$0xf]
          %v2237 = vld [vmem:[%s2048 + $0x2f0] sm:$0xf]
          %v2238 = vld [vmem:[%s2048 + $0x2f4] sm:$0xf]
          %v2239 = vld [vmem:[%s2048 + $0x2f8] sm:$0xf]
          %v2240 = vld [vmem:[%s2048 + $0x2fc] sm:$0xf]
          %v2241 = vld [vmem:[%s2048 + $0x300] sm:$0xf]
          %v2242 = vld [vmem:[%s2048 + $0x304] sm:$0xf]
          %v2243 = vld [vmem:[%s2048 + $0x308] sm:$0xf]
          %v2244 = vld [vmem:[%s2048 + $0x30c] sm:$0xf]
          %v2245 = vld [vmem:[%s2048 + $0x310] sm:$0xf]
          %v2246 = vld [vmem:[%s2048 + $0x314] sm:$0xf]
          %v2247 = vld [vmem:[%s2048 + $0x318] sm:$0xf]
          %v2248 = vld [vmem:[%s2048 + $0x31c] sm:$0xf]
          %v2249 = vld [vmem:[%s2048 + $0x320] sm:$0xf]
          %v2250 = vld [vmem:[%s2048 + $0x324] sm:$0xf]
          %v2251 = vld [vmem:[%s2048 + $0x328] sm:$0xf]
          %v2252 = vld [vmem:[%s2048 + $0x32c] sm:$0xf]
          %v2253 = vld [vmem:[%s2048 + $0x330] sm:$0xf]
          %v2254 = vld [vmem:[%s2048 + $0x334] sm:$0xf]
          %v2255 = vld [vmem:[%s2048 + $0x338] sm:$0xf]
          %v2256 = vld [vmem:[%s2048 + $0x33c] sm:$0xf]
          %v2257 = vld [vmem:[%s2048 + $0x340] sm:$0xf]
          %v2258 = vld [vmem:[%s2048 + $0x344] sm:$0xf]
          %v2259 = vld [vmem:[%s2048 + $0x348] sm:$0xf]
          %v2260 = vld [vmem:[%s2048 + $0x34c] sm:$0xf]
          %v2261 = vld [vmem:[%s2048 + $0x350] sm:$0xf]
          %v2262 = vld [vmem:[%s2048 + $0x354] sm:$0xf]
          %v2263 = vld [vmem:[%s2048 + $0x358] sm:$0xf]
          %v2264 = vld [vmem:[%s2048 + $0x35c] sm:$0xf]
          %v2265 = vld [vmem:[%s2048 + $0x360] sm:$0xf]
          %v2266 = vld [vmem:[%s2048 + $0x364] sm:$0xf]
          %v2267 = vld [vmem:[%s2048 + $0x368] sm:$0xf]
          %v2268 = vld [vmem:[%s2048 + $0x36c] sm:$0xf]
          %v2269 = vld [vmem:[%s2048 + $0x370] sm:$0xf]
          %v2270 = vld [vmem:[%s2048 + $0x374] sm:$0xf]
          %v2271 = vld [vmem:[%s2048 + $0x378] sm:$0xf]
          %v2272 = vld [vmem:[%s2048 + $0x37c] sm:$0xf]
          %v2273 = vld [vmem:[%s2048 + $0x380] sm:$0xf]
          %v2274 = vld [vmem:[%s2048 + $0x384] sm:$0xf]
          %v2275 = vld [vmem:[%s2048 + $0x388] sm:$0xf]
          %v2276 = vld [vmem:[%s2048 + $0x38c] sm:$0xf]
          %v2277 = vld [vmem:[%s2048 + $0x390] sm:$0xf]
          %v2278 = vld [vmem:[%s2048 + $0x394] sm:$0xf]
          %v2279 = vld [vmem:[%s2048 + $0x398] sm:$0xf]
          %v2280 = vld [vmem:[%s2048 + $0x39c] sm:$0xf]
          %v2281 = vld [vmem:[%s2048 + $0x3a0] sm:$0xf]
          %v2282 = vld [vmem:[%s2048 + $0x3a4] sm:$0xf]
          %v2283 = vld [vmem:[%s2048 + $0x3a8] sm:$0xf]
          %v2284 = vld [vmem:[%s2048 + $0x3ac] sm:$0xf]
          %v2285 = vld [vmem:[%s2048 + $0x3b0] sm:$0xf]
          %v2286 = vld [vmem:[%s2048 + $0x3b4] sm:$0xf]
          %v2287 = vld [vmem:[%s2048 + $0x3b8] sm:$0xf]
          %v2288 = vld [vmem:[%s2048 + $0x3bc] sm:$0xf]
          %v2289 = vld [vmem:[%s2048 + $0x3c0] sm:$0xf]
          %v2290 = vld [vmem:[%s2048 + $0x3c4] sm:$0xf]
          %v2291 = vld [vmem:[%s2048 + $0x3c8] sm:$0xf]
          %v2292 = vld [vmem:[%s2048 + $0x3cc] sm:$0xf]
          %v2293 = vld [vmem:[%s2048 + $0x3d0] sm:$0xf]
          %v2294 = vld [vmem:[%s2048 + $0x3d4] sm:$0xf]
          %v2295 = vld [vmem:[%s2048 + $0x3d8] sm:$0xf]
          %v2296 = vld [vmem:[%s2048 + $0x3dc] sm:$0xf]
          %v2297 = vld [vmem:[%s2048 + $0x3e0] sm:$0xf]
          %v2298 = vld [vmem:[%s2048 + $0x3e4] sm:$0xf]
          %v2299 = vld [vmem:[%s2048 + $0x3e8] sm:$0xf]
          %v2300 = vld [vmem:[%s2048 + $0x3ec] sm:$0xf]
          %v2301 = vld [vmem:[%s2048 + $0x3f0] sm:$0xf]
          %v2302 = vld [vmem:[%s2048 + $0x3f4] sm:$0xf]
          %v2303 = vld [vmem:[%s2048 + $0x3f8] sm:$0xf]
          %v2304 = vld [vmem:[%s2048 + $0x3fc] sm:$0xf]
          %s2305 = scalar_lea.vmem %s15, %s629
          %v2306 = vld [vmem:[%s2305] sm:$0x1]
          %v2308 = vlaneseq
          %v2309 = vshrl.u32 %v2308, 7
          %v2310 = vsub.s32 0, %v2309
          %v2311 = vrot.slane %v2306, %v2310
          %v2569 = vunpack.c.l.b16 %v2049
          %v2570 = vunpack.c.l.b16 %v2050
          %v2571 = vunpack.c.l.b16 %v2051
          %v2572 = vunpack.c.l.b16 %v2052
          %v2573 = vunpack.c.l.b16 %v2053
          %v2574 = vunpack.c.l.b16 %v2054
          %v2575 = vunpack.c.l.b16 %v2055
          %v2576 = vunpack.c.l.b16 %v2056
          %v2577 = vunpack.c.l.b16 %v2057
          %v2578 = vunpack.c.l.b16 %v2058
          %v2579 = vunpack.c.l.b16 %v2059
          %v2580 = vunpack.c.l.b16 %v2060
          %v2581 = vunpack.c.l.b16 %v2061
          %v2582 = vunpack.c.l.b16 %v2062
          %v2583 = vunpack.c.l.b16 %v2063
          %v2584 = vunpack.c.l.b16 %v2064
          %v2585 = vunpack.c.l.b16 %v2065
          %v2586 = vunpack.c.l.b16 %v2066
          %v2587 = vunpack.c.l.b16 %v2067
          %v2588 = vunpack.c.l.b16 %v2068
          %v2589 = vunpack.c.l.b16 %v2069
          %v2590 = vunpack.c.l.b16 %v2070
          %v2591 = vunpack.c.l.b16 %v2071
          %v2592 = vunpack.c.l.b16 %v2072
          %v2593 = vunpack.c.l.b16 %v2073
          %v2594 = vunpack.c.l.b16 %v2074
          %v2595 = vunpack.c.l.b16 %v2075
          %v2596 = vunpack.c.l.b16 %v2076
          %v2597 = vunpack.c.l.b16 %v2077
          %v2598 = vunpack.c.l.b16 %v2078
          %v2599 = vunpack.c.l.b16 %v2079
          %v2600 = vunpack.c.l.b16 %v2080
          %v2601 = vunpack.c.l.b16 %v2081
          %v2602 = vunpack.c.l.b16 %v2082
          %v2603 = vunpack.c.l.b16 %v2083
          %v2604 = vunpack.c.l.b16 %v2084
          %v2605 = vunpack.c.l.b16 %v2085
          %v2606 = vunpack.c.l.b16 %v2086
          %v2607 = vunpack.c.l.b16 %v2087
          %v2608 = vunpack.c.l.b16 %v2088
          %v2609 = vunpack.c.l.b16 %v2089
          %v2610 = vunpack.c.l.b16 %v2090
          %v2611 = vunpack.c.l.b16 %v2091
          %v2612 = vunpack.c.l.b16 %v2092
          %v2613 = vunpack.c.l.b16 %v2093
          %v2614 = vunpack.c.l.b16 %v2094
          %v2615 = vunpack.c.l.b16 %v2095
          %v2616 = vunpack.c.l.b16 %v2096
          %v2617 = vunpack.c.l.b16 %v2097
          %v2618 = vunpack.c.l.b16 %v2098
          %v2619 = vunpack.c.l.b16 %v2099
          %v2620 = vunpack.c.l.b16 %v2100
          %v2621 = vunpack.c.l.b16 %v2101
          %v2622 = vunpack.c.l.b16 %v2102
          %v2623 = vunpack.c.l.b16 %v2103
          %v2624 = vunpack.c.l.b16 %v2104
          %v2625 = vunpack.c.l.b16 %v2105
          %v2626 = vunpack.c.l.b16 %v2106
          %v2627 = vunpack.c.l.b16 %v2107
          %v2628 = vunpack.c.l.b16 %v2108
          %v2629 = vunpack.c.l.b16 %v2109
          %v2630 = vunpack.c.l.b16 %v2110
          %v2631 = vunpack.c.l.b16 %v2111
          %v2632 = vunpack.c.l.b16 %v2112
          %v2633 = vunpack.c.l.b16 %v2113
          %v2634 = vunpack.c.l.b16 %v2114
          %v2635 = vunpack.c.l.b16 %v2115
          %v2636 = vunpack.c.l.b16 %v2116
          %v2637 = vunpack.c.l.b16 %v2117
          %v2638 = vunpack.c.l.b16 %v2118
          %v2639 = vunpack.c.l.b16 %v2119
          %v2640 = vunpack.c.l.b16 %v2120
          %v2641 = vunpack.c.l.b16 %v2121
          %v2642 = vunpack.c.l.b16 %v2122
          %v2643 = vunpack.c.l.b16 %v2123
          %v2644 = vunpack.c.l.b16 %v2124
          %v2645 = vunpack.c.l.b16 %v2125
          %v2646 = vunpack.c.l.b16 %v2126
          %v2647 = vunpack.c.l.b16 %v2127
          %v2648 = vunpack.c.l.b16 %v2128
          %v2649 = vunpack.c.l.b16 %v2129
          %v2650 = vunpack.c.l.b16 %v2130
          %v2651 = vunpack.c.l.b16 %v2131
          %v2652 = vunpack.c.l.b16 %v2132
          %v2653 = vunpack.c.l.b16 %v2133
          %v2654 = vunpack.c.l.b16 %v2134
          %v2655 = vunpack.c.l.b16 %v2135
          %v2656 = vunpack.c.l.b16 %v2136
          %v2657 = vunpack.c.l.b16 %v2137
          %v2658 = vunpack.c.l.b16 %v2138
          %v2659 = vunpack.c.l.b16 %v2139
          %v2660 = vunpack.c.l.b16 %v2140
          %v2661 = vunpack.c.l.b16 %v2141
          %v2662 = vunpack.c.l.b16 %v2142
          %v2663 = vunpack.c.l.b16 %v2143
          %v2664 = vunpack.c.l.b16 %v2144
          %v2665 = vunpack.c.l.b16 %v2145
          %v2666 = vunpack.c.l.b16 %v2146
          %v2667 = vunpack.c.l.b16 %v2147
          %v2668 = vunpack.c.l.b16 %v2148
          %v2669 = vunpack.c.l.b16 %v2149
          %v2670 = vunpack.c.l.b16 %v2150
          %v2671 = vunpack.c.l.b16 %v2151
          %v2672 = vunpack.c.l.b16 %v2152
          %v2673 = vunpack.c.l.b16 %v2153
          %v2674 = vunpack.c.l.b16 %v2154
          %v2675 = vunpack.c.l.b16 %v2155
          %v2676 = vunpack.c.l.b16 %v2156
          %v2677 = vunpack.c.l.b16 %v2157
          %v2678 = vunpack.c.l.b16 %v2158
          %v2679 = vunpack.c.l.b16 %v2159
          %v2680 = vunpack.c.l.b16 %v2160
          %v2681 = vunpack.c.l.b16 %v2161
          %v2682 = vunpack.c.l.b16 %v2162
          %v2683 = vunpack.c.l.b16 %v2163
          %v2684 = vunpack.c.l.b16 %v2164
          %v2685 = vunpack.c.l.b16 %v2165
          %v2686 = vunpack.c.l.b16 %v2166
          %v2687 = vunpack.c.l.b16 %v2167
          %v2688 = vunpack.c.l.b16 %v2168
          %v2689 = vunpack.c.l.b16 %v2169
          %v2690 = vunpack.c.l.b16 %v2170
          %v2691 = vunpack.c.l.b16 %v2171
          %v2692 = vunpack.c.l.b16 %v2172
          %v2693 = vunpack.c.l.b16 %v2173
          %v2694 = vunpack.c.l.b16 %v2174
          %v2695 = vunpack.c.l.b16 %v2175
          %v2696 = vunpack.c.l.b16 %v2176
          %v2697 = vunpack.c.l.b16 %v2177
          %v2698 = vunpack.c.l.b16 %v2178
          %v2699 = vunpack.c.l.b16 %v2179
          %v2700 = vunpack.c.l.b16 %v2180
          %v2701 = vunpack.c.l.b16 %v2181
          %v2702 = vunpack.c.l.b16 %v2182
          %v2703 = vunpack.c.l.b16 %v2183
          %v2704 = vunpack.c.l.b16 %v2184
          %v2705 = vunpack.c.l.b16 %v2185
          %v2706 = vunpack.c.l.b16 %v2186
          %v2707 = vunpack.c.l.b16 %v2187
          %v2708 = vunpack.c.l.b16 %v2188
          %v2709 = vunpack.c.l.b16 %v2189
          %v2710 = vunpack.c.l.b16 %v2190
          %v2711 = vunpack.c.l.b16 %v2191
          %v2712 = vunpack.c.l.b16 %v2192
          %v2713 = vunpack.c.l.b16 %v2193
          %v2714 = vunpack.c.l.b16 %v2194
          %v2715 = vunpack.c.l.b16 %v2195
          %v2716 = vunpack.c.l.b16 %v2196
          %v2717 = vunpack.c.l.b16 %v2197
          %v2718 = vunpack.c.l.b16 %v2198
          %v2719 = vunpack.c.l.b16 %v2199
          %v2720 = vunpack.c.l.b16 %v2200
          %v2721 = vunpack.c.l.b16 %v2201
          %v2722 = vunpack.c.l.b16 %v2202
          %v2723 = vunpack.c.l.b16 %v2203
          %v2724 = vunpack.c.l.b16 %v2204
          %v2725 = vunpack.c.l.b16 %v2205
          %v2726 = vunpack.c.l.b16 %v2206
          %v2727 = vunpack.c.l.b16 %v2207
          %v2728 = vunpack.c.l.b16 %v2208
          %v2729 = vunpack.c.l.b16 %v2209
          %v2730 = vunpack.c.l.b16 %v2210
          %v2731 = vunpack.c.l.b16 %v2211
          %v2732 = vunpack.c.l.b16 %v2212
          %v2733 = vunpack.c.l.b16 %v2213
          %v2734 = vunpack.c.l.b16 %v2214
          %v2735 = vunpack.c.l.b16 %v2215
          %v2736 = vunpack.c.l.b16 %v2216
          %v2737 = vunpack.c.l.b16 %v2217
          %v2738 = vunpack.c.l.b16 %v2218
          %v2739 = vunpack.c.l.b16 %v2219
          %v2740 = vunpack.c.l.b16 %v2220
          %v2741 = vunpack.c.l.b16 %v2221
          %v2742 = vunpack.c.l.b16 %v2222
          %v2743 = vunpack.c.l.b16 %v2223
          %v2744 = vunpack.c.l.b16 %v2224
          %v2745 = vunpack.c.l.b16 %v2225
          %v2746 = vunpack.c.l.b16 %v2226
          %v2747 = vunpack.c.l.b16 %v2227
          %v2748 = vunpack.c.l.b16 %v2228
          %v2749 = vunpack.c.l.b16 %v2229
          %v2750 = vunpack.c.l.b16 %v2230
          %v2751 = vunpack.c.l.b16 %v2231
          %v2752 = vunpack.c.l.b16 %v2232
          %v2753 = vunpack.c.l.b16 %v2233
          %v2754 = vunpack.c.l.b16 %v2234
          %v2755 = vunpack.c.l.b16 %v2235
          %v2756 = vunpack.c.l.b16 %v2236
          %v2757 = vunpack.c.l.b16 %v2237
          %v2758 = vunpack.c.l.b16 %v2238
          %v2759 = vunpack.c.l.b16 %v2239
          %v2760 = vunpack.c.l.b16 %v2240
          %v2761 = vunpack.c.l.b16 %v2241
          %v2762 = vunpack.c.l.b16 %v2242
          %v2763 = vunpack.c.l.b16 %v2243
          %v2764 = vunpack.c.l.b16 %v2244
          %v2765 = vunpack.c.l.b16 %v2245
          %v2766 = vunpack.c.l.b16 %v2246
          %v2767 = vunpack.c.l.b16 %v2247
          %v2768 = vunpack.c.l.b16 %v2248
          %v2769 = vunpack.c.l.b16 %v2249
          %v2770 = vunpack.c.l.b16 %v2250
          %v2771 = vunpack.c.l.b16 %v2251
          %v2772 = vunpack.c.l.b16 %v2252
          %v2773 = vunpack.c.l.b16 %v2253
          %v2774 = vunpack.c.l.b16 %v2254
          %v2775 = vunpack.c.l.b16 %v2255
          %v2776 = vunpack.c.l.b16 %v2256
          %v2777 = vunpack.c.l.b16 %v2257
          %v2778 = vunpack.c.l.b16 %v2258
          %v2779 = vunpack.c.l.b16 %v2259
          %v2780 = vunpack.c.l.b16 %v2260
          %v2781 = vunpack.c.l.b16 %v2261
          %v2782 = vunpack.c.l.b16 %v2262
          %v2783 = vunpack.c.l.b16 %v2263
          %v2784 = vunpack.c.l.b16 %v2264
          %v2785 = vunpack.c.l.b16 %v2265
          %v2786 = vunpack.c.l.b16 %v2266
          %v2787 = vunpack.c.l.b16 %v2267
          %v2788 = vunpack.c.l.b16 %v2268
          %v2789 = vunpack.c.l.b16 %v2269
          %v2790 = vunpack.c.l.b16 %v2270
          %v2791 = vunpack.c.l.b16 %v2271
          %v2792 = vunpack.c.l.b16 %v2272
          %v2793 = vunpack.c.l.b16 %v2273
          %v2794 = vunpack.c.l.b16 %v2274
          %v2795 = vunpack.c.l.b16 %v2275
          %v2796 = vunpack.c.l.b16 %v2276
          %v2797 = vunpack.c.l.b16 %v2277
          %v2798 = vunpack.c.l.b16 %v2278
          %v2799 = vunpack.c.l.b16 %v2279
          %v2800 = vunpack.c.l.b16 %v2280
          %v2801 = vunpack.c.l.b16 %v2281
          %v2802 = vunpack.c.l.b16 %v2282
          %v2803 = vunpack.c.l.b16 %v2283
          %v2804 = vunpack.c.l.b16 %v2284
          %v2805 = vunpack.c.l.b16 %v2285
          %v2806 = vunpack.c.l.b16 %v2286
          %v2807 = vunpack.c.l.b16 %v2287
          %v2808 = vunpack.c.l.b16 %v2288
          %v2809 = vunpack.c.l.b16 %v2289
          %v2810 = vunpack.c.l.b16 %v2290
          %v2811 = vunpack.c.l.b16 %v2291
          %v2812 = vunpack.c.l.b16 %v2292
          %v2813 = vunpack.c.l.b16 %v2293
          %v2814 = vunpack.c.l.b16 %v2294
          %v2815 = vunpack.c.l.b16 %v2295
          %v2816 = vunpack.c.l.b16 %v2296
          %v2817 = vunpack.c.l.b16 %v2297
          %v2818 = vunpack.c.l.b16 %v2298
          %v2819 = vunpack.c.l.b16 %v2299
          %v2820 = vunpack.c.l.b16 %v2300
          %v2821 = vunpack.c.l.b16 %v2301
          %v2822 = vunpack.c.l.b16 %v2302
          %v2823 = vunpack.c.l.b16 %v2303
          %v2824 = vunpack.c.l.b16 %v2304
          %v2825 = vpack.c.b16 %v2570, %v2569
          %v2826 = vpack.c.b16 %v2572, %v2571
          %v2827 = vpack.c.b16 %v2574, %v2573
          %v2828 = vpack.c.b16 %v2576, %v2575
          %v2829 = vpack.c.b16 %v2578, %v2577
          %v2830 = vpack.c.b16 %v2580, %v2579
          %v2831 = vpack.c.b16 %v2582, %v2581
          %v2832 = vpack.c.b16 %v2584, %v2583
          %v2833 = vpack.c.b16 %v2586, %v2585
          %v2834 = vpack.c.b16 %v2588, %v2587
          %v2835 = vpack.c.b16 %v2590, %v2589
          %v2836 = vpack.c.b16 %v2592, %v2591
          %v2837 = vpack.c.b16 %v2594, %v2593
          %v2838 = vpack.c.b16 %v2596, %v2595
          %v2839 = vpack.c.b16 %v2598, %v2597
          %v2840 = vpack.c.b16 %v2600, %v2599
          %v2841 = vpack.c.b16 %v2602, %v2601
          %v2842 = vpack.c.b16 %v2604, %v2603
          %v2843 = vpack.c.b16 %v2606, %v2605
          %v2844 = vpack.c.b16 %v2608, %v2607
          %v2845 = vpack.c.b16 %v2610, %v2609
          %v2846 = vpack.c.b16 %v2612, %v2611
          %v2847 = vpack.c.b16 %v2614, %v2613
          %v2848 = vpack.c.b16 %v2616, %v2615
          %v2849 = vpack.c.b16 %v2618, %v2617
          %v2850 = vpack.c.b16 %v2620, %v2619
          %v2851 = vpack.c.b16 %v2622, %v2621
          %v2852 = vpack.c.b16 %v2624, %v2623
          %v2853 = vpack.c.b16 %v2626, %v2625
          %v2854 = vpack.c.b16 %v2628, %v2627
          %v2855 = vpack.c.b16 %v2630, %v2629
          %v2856 = vpack.c.b16 %v2632, %v2631
          %v2857 = vpack.c.b16 %v2634, %v2633
          %v2858 = vpack.c.b16 %v2636, %v2635
          %v2859 = vpack.c.b16 %v2638, %v2637
          %v2860 = vpack.c.b16 %v2640, %v2639
          %v2861 = vpack.c.b16 %v2642, %v2641
          %v2862 = vpack.c.b16 %v2644, %v2643
          %v2863 = vpack.c.b16 %v2646, %v2645
          %v2864 = vpack.c.b16 %v2648, %v2647
          %v2865 = vpack.c.b16 %v2650, %v2649
          %v2866 = vpack.c.b16 %v2652, %v2651
          %v2867 = vpack.c.b16 %v2654, %v2653
          %v2868 = vpack.c.b16 %v2656, %v2655
          %v2869 = vpack.c.b16 %v2658, %v2657
          %v2870 = vpack.c.b16 %v2660, %v2659
          %v2871 = vpack.c.b16 %v2662, %v2661
          %v2872 = vpack.c.b16 %v2664, %v2663
          %v2873 = vpack.c.b16 %v2666, %v2665
          %v2874 = vpack.c.b16 %v2668, %v2667
          %v2875 = vpack.c.b16 %v2670, %v2669
          %v2876 = vpack.c.b16 %v2672, %v2671
          %v2877 = vpack.c.b16 %v2674, %v2673
          %v2878 = vpack.c.b16 %v2676, %v2675
          %v2879 = vpack.c.b16 %v2678, %v2677
          %v2880 = vpack.c.b16 %v2680, %v2679
          %v2881 = vpack.c.b16 %v2682, %v2681
          %v2882 = vpack.c.b16 %v2684, %v2683
          %v2883 = vpack.c.b16 %v2686, %v2685
          %v2884 = vpack.c.b16 %v2688, %v2687
          %v2885 = vpack.c.b16 %v2690, %v2689
          %v2886 = vpack.c.b16 %v2692, %v2691
          %v2887 = vpack.c.b16 %v2694, %v2693
          %v2888 = vpack.c.b16 %v2696, %v2695
          %v2889 = vpack.c.b16 %v2698, %v2697
          %v2890 = vpack.c.b16 %v2700, %v2699
          %v2891 = vpack.c.b16 %v2702, %v2701
          %v2892 = vpack.c.b16 %v2704, %v2703
          %v2893 = vpack.c.b16 %v2706, %v2705
          %v2894 = vpack.c.b16 %v2708, %v2707
          %v2895 = vpack.c.b16 %v2710, %v2709
          %v2896 = vpack.c.b16 %v2712, %v2711
          %v2897 = vpack.c.b16 %v2714, %v2713
          %v2898 = vpack.c.b16 %v2716, %v2715
          %v2899 = vpack.c.b16 %v2718, %v2717
          %v2900 = vpack.c.b16 %v2720, %v2719
          %v2901 = vpack.c.b16 %v2722, %v2721
          %v2902 = vpack.c.b16 %v2724, %v2723
          %v2903 = vpack.c.b16 %v2726, %v2725
          %v2904 = vpack.c.b16 %v2728, %v2727
          %v2905 = vpack.c.b16 %v2730, %v2729
          %v2906 = vpack.c.b16 %v2732, %v2731
          %v2907 = vpack.c.b16 %v2734, %v2733
          %v2908 = vpack.c.b16 %v2736, %v2735
          %v2909 = vpack.c.b16 %v2738, %v2737
          %v2910 = vpack.c.b16 %v2740, %v2739
          %v2911 = vpack.c.b16 %v2742, %v2741
          %v2912 = vpack.c.b16 %v2744, %v2743
          %v2913 = vpack.c.b16 %v2746, %v2745
          %v2914 = vpack.c.b16 %v2748, %v2747
          %v2915 = vpack.c.b16 %v2750, %v2749
          %v2916 = vpack.c.b16 %v2752, %v2751
          %v2917 = vpack.c.b16 %v2754, %v2753
          %v2918 = vpack.c.b16 %v2756, %v2755
          %v2919 = vpack.c.b16 %v2758, %v2757
          %v2920 = vpack.c.b16 %v2760, %v2759
          %v2921 = vpack.c.b16 %v2762, %v2761
          %v2922 = vpack.c.b16 %v2764, %v2763
          %v2923 = vpack.c.b16 %v2766, %v2765
          %v2924 = vpack.c.b16 %v2768, %v2767
          %v2925 = vpack.c.b16 %v2770, %v2769
          %v2926 = vpack.c.b16 %v2772, %v2771
          %v2927 = vpack.c.b16 %v2774, %v2773
          %v2928 = vpack.c.b16 %v2776, %v2775
          %v2929 = vpack.c.b16 %v2778, %v2777
          %v2930 = vpack.c.b16 %v2780, %v2779
          %v2931 = vpack.c.b16 %v2782, %v2781
          %v2932 = vpack.c.b16 %v2784, %v2783
          %v2933 = vpack.c.b16 %v2786, %v2785
          %v2934 = vpack.c.b16 %v2788, %v2787
          %v2935 = vpack.c.b16 %v2790, %v2789
          %v2936 = vpack.c.b16 %v2792, %v2791
          %v2937 = vpack.c.b16 %v2794, %v2793
          %v2938 = vpack.c.b16 %v2796, %v2795
          %v2939 = vpack.c.b16 %v2798, %v2797
          %v2940 = vpack.c.b16 %v2800, %v2799
          %v2941 = vpack.c.b16 %v2802, %v2801
          %v2942 = vpack.c.b16 %v2804, %v2803
          %v2943 = vpack.c.b16 %v2806, %v2805
          %v2944 = vpack.c.b16 %v2808, %v2807
          %v2945 = vpack.c.b16 %v2810, %v2809
          %v2946 = vpack.c.b16 %v2812, %v2811
          %v2947 = vpack.c.b16 %v2814, %v2813
          %v2948 = vpack.c.b16 %v2816, %v2815
          %v2949 = vpack.c.b16 %v2818, %v2817
          %v2950 = vpack.c.b16 %v2820, %v2819
          %v2951 = vpack.c.b16 %v2822, %v2821
          %v2952 = vpack.c.b16 %v2824, %v2823
          %3081 = vmatprep.subr.bf16.mxu0 0
          %3082 = vmatpush1.bf16.msra.mxu0 %v2832
          %3083 = vmatprep.subr.bf16.mxu0 0
          %3084 = vmatpush1.bf16.msra.mxu0 %v2831
          %3085 = vmatprep.subr.bf16.mxu0 0
          %3086 = vmatpush1.bf16.msra.mxu0 %v2830
          %3087 = vmatprep.subr.bf16.mxu0 0
          %3088 = vmatpush1.bf16.msra.mxu0 %v2829
          %3089 = vmatprep.subr.bf16.mxu0 0
          %3090 = vmatpush1.bf16.msra.mxu0 %v2828
          %3091 = vmatprep.subr.bf16.mxu0 0
          %3092 = vmatpush1.bf16.msra.mxu0 %v2827
          %3093 = vmatprep.subr.bf16.mxu0 0
          %3094 = vmatpush1.bf16.msra.mxu0 %v2826
          %3095 = vmatprep.subr.bf16.mxu0 0
          %3096 = vmatpush1.bf16.msra.mxu0 %v2825
          %3097 = vmatprep.subr.bf16.mxu0 0
          %3098 = vmatpush2.bf16.msra.mxu0 %v2840
          %3099 = vmatprep.subr.bf16.mxu0 0
          %3100 = vmatpush2.bf16.msra.mxu0 %v2839
          %3101 = vmatprep.subr.bf16.mxu0 0
          %3102 = vmatpush2.bf16.msra.mxu0 %v2838
          %3103 = vmatprep.subr.bf16.mxu0 0
          %3104 = vmatpush2.bf16.msra.mxu0 %v2837
          %3105 = vmatprep.subr.bf16.mxu0 0
          %3106 = vmatpush2.bf16.msra.mxu0 %v2836
          %3107 = vmatprep.subr.bf16.mxu0 0
          %3108 = vmatpush2.bf16.msra.mxu0 %v2835
          %3109 = vmatprep.subr.bf16.mxu0 0
          %3110 = vmatpush2.bf16.msra.mxu0 %v2834
          %3111 = vmatprep.subr.bf16.mxu0 0
          %3112 = vmatpush2.bf16.msra.mxu0 %v2833
          %3113 = vmatprep.mubr.bf16.mxu0 %v2031
          %3114 = vmatmul.mubr.bf16.gmra.mxu0 %v2030
          %v3115 = vpop.f32.mrf.mxu0
          %v3116 = vadd.f32 %v2311, %v3115
          %v3117 = vpop.f32.mrf.mxu0
          %v3118 = vpop.f32.mrf.mxu0
          %v3119 = vpop.f32.mrf.mxu0
          %3120 = vdwg.mxu0
          %3121 = vmatprep.subr.bf16.mxu0 0
          %3122 = vmatpush1.bf16.msra.mxu0 %v2848
          %3123 = vmatprep.subr.bf16.mxu0 0
          %3124 = vmatpush1.bf16.msra.mxu0 %v2847
          %3125 = vmatprep.subr.bf16.mxu0 0
          %3126 = vmatpush1.bf16.msra.mxu0 %v2846
          %3127 = vmatprep.subr.bf16.mxu0 0
          %3128 = vmatpush1.bf16.msra.mxu0 %v2845
          %3129 = vmatprep.subr.bf16.mxu0 0
          %3130 = vmatpush1.bf16.msra.mxu0 %v2844
          %3131 = vmatprep.subr.bf16.mxu0 0
          %3132 = vmatpush1.bf16.msra.mxu0 %v2843
          %3133 = vmatprep.subr.bf16.mxu0 0
          %3134 = vmatpush1.bf16.msra.mxu0 %v2842
          %3135 = vmatprep.subr.bf16.mxu0 0
          %3136 = vmatpush1.bf16.msra.mxu0 %v2841
          %3137 = vmatprep.subr.bf16.mxu0 0
          %3138 = vmatpush2.bf16.msra.mxu0 %v2856
          %3139 = vmatprep.subr.bf16.mxu0 0
          %3140 = vmatpush2.bf16.msra.mxu0 %v2855
          %3141 = vmatprep.subr.bf16.mxu0 0
          %3142 = vmatpush2.bf16.msra.mxu0 %v2854
          %3143 = vmatprep.subr.bf16.mxu0 0
          %3144 = vmatpush2.bf16.msra.mxu0 %v2853
          %3145 = vmatprep.subr.bf16.mxu0 0
          %3146 = vmatpush2.bf16.msra.mxu0 %v2852
          %3147 = vmatprep.subr.bf16.mxu0 0
          %3148 = vmatpush2.bf16.msra.mxu0 %v2851
          %3149 = vmatprep.subr.bf16.mxu0 0
          %3150 = vmatpush2.bf16.msra.mxu0 %v2850
          %3151 = vmatprep.subr.bf16.mxu0 0
          %3152 = vmatpush2.bf16.msra.mxu0 %v2849
          %3153 = vmatprep.mubr.bf16.mxu0 %v2033
          %3154 = vmatmul.mubr.bf16.gmra.mxu0 %v2032
          %v3155 = vpop.f32.mrf.mxu0
          %v3156 = vadd.f32 %v3116, %v3155
          %v3157 = vpop.f32.mrf.mxu0
          %v3158 = vpop.f32.mrf.mxu0
          %v3159 = vpop.f32.mrf.mxu0
          %3160 = vdwg.mxu0
          %3161 = vmatprep.subr.bf16.mxu0 0
          %3162 = vmatpush1.bf16.msra.mxu0 %v2864
          %3163 = vmatprep.subr.bf16.mxu0 0
          %3164 = vmatpush1.bf16.msra.mxu0 %v2863
          %3165 = vmatprep.subr.bf16.mxu0 0
          %3166 = vmatpush1.bf16.msra.mxu0 %v2862
          %3167 = vmatprep.subr.bf16.mxu0 0
          %3168 = vmatpush1.bf16.msra.mxu0 %v2861
          %3169 = vmatprep.subr.bf16.mxu0 0
          %3170 = vmatpush1.bf16.msra.mxu0 %v2860
          %3171 = vmatprep.subr.bf16.mxu0 0
          %3172 = vmatpush1.bf16.msra.mxu0 %v2859
          %3173 = vmatprep.subr.bf16.mxu0 0
          %3174 = vmatpush1.bf16.msra.mxu0 %v2858
          %3175 = vmatprep.subr.bf16.mxu0 0
          %3176 = vmatpush1.bf16.msra.mxu0 %v2857
          %3177 = vmatprep.subr.bf16.mxu0 0
          %3178 = vmatpush2.bf16.msra.mxu0 %v2872
          %3179 = vmatprep.subr.bf16.mxu0 0
          %3180 = vmatpush2.bf16.msra.mxu0 %v2871
          %3181 = vmatprep.subr.bf16.mxu0 0
          %3182 = vmatpush2.bf16.msra.mxu0 %v2870
          %3183 = vmatprep.subr.bf16.mxu0 0
          %3184 = vmatpush2.bf16.msra.mxu0 %v2869
          %3185 = vmatprep.subr.bf16.mxu0 0
          %3186 = vmatpush2.bf16.msra.mxu0 %v2868
          %3187 = vmatprep.subr.bf16.mxu0 0
          %3188 = vmatpush2.bf16.msra.mxu0 %v2867
          %3189 = vmatprep.subr.bf16.mxu0 0
          %3190 = vmatpush2.bf16.msra.mxu0 %v2866
          %3191 = vmatprep.subr.bf16.mxu0 0
          %3192 = vmatpush2.bf16.msra.mxu0 %v2865
          %3193 = vmatprep.mubr.bf16.mxu0 %v2035
          %3194 = vmatmul.mubr.bf16.gmra.mxu0 %v2034
          %v3195 = vpop.f32.mrf.mxu0
          %v3196 = vadd.f32 %v3156, %v3195
          %v3197 = vpop.f32.mrf.mxu0
          %v3198 = vpop.f32.mrf.mxu0
          %v3199 = vpop.f32.mrf.mxu0
          %3200 = vdwg.mxu0
          %3201 = vmatprep.subr.bf16.mxu0 0
          %3202 = vmatpush1.bf16.msra.mxu0 %v2880
          %3203 = vmatprep.subr.bf16.mxu0 0
          %3204 = vmatpush1.bf16.msra.mxu0 %v2879
          %3205 = vmatprep.subr.bf16.mxu0 0
          %3206 = vmatpush1.bf16.msra.mxu0 %v2878
          %3207 = vmatprep.subr.bf16.mxu0 0
          %3208 = vmatpush1.bf16.msra.mxu0 %v2877
          %3209 = vmatprep.subr.bf16.mxu0 0
          %3210 = vmatpush1.bf16.msra.mxu0 %v2876
          %3211 = vmatprep.subr.bf16.mxu0 0
          %3212 = vmatpush1.bf16.msra.mxu0 %v2875
          %3213 = vmatprep.subr.bf16.mxu0 0
          %3214 = vmatpush1.bf16.msra.mxu0 %v2874
          %3215 = vmatprep.subr.bf16.mxu0 0
          %3216 = vmatpush1.bf16.msra.mxu0 %v2873
          %3217 = vmatprep.subr.bf16.mxu0 0
          %3218 = vmatpush2.bf16.msra.mxu0 %v2888
          %3219 = vmatprep.subr.bf16.mxu0 0
          %3220 = vmatpush2.bf16.msra.mxu0 %v2887
          %3221 = vmatprep.subr.bf16.mxu0 0
          %3222 = vmatpush2.bf16.msra.mxu0 %v2886
          %3223 = vmatprep.subr.bf16.mxu0 0
          %3224 = vmatpush2.bf16.msra.mxu0 %v2885
          %3225 = vmatprep.subr.bf16.mxu0 0
          %3226 = vmatpush2.bf16.msra.mxu0 %v2884
          %3227 = vmatprep.subr.bf16.mxu0 0
          %3228 = vmatpush2.bf16.msra.mxu0 %v2883
          %3229 = vmatprep.subr.bf16.mxu0 0
          %3230 = vmatpush2.bf16.msra.mxu0 %v2882
          %3231 = vmatprep.subr.bf16.mxu0 0
          %3232 = vmatpush2.bf16.msra.mxu0 %v2881
          %3233 = vmatprep.mubr.bf16.mxu0 %v2037
          %3234 = vmatmul.mubr.bf16.gmra.mxu0 %v2036
          %v3235 = vpop.f32.mrf.mxu0
          %v3236 = vadd.f32 %v3196, %v3235
          %v3237 = vpop.f32.mrf.mxu0
          %v3238 = vpop.f32.mrf.mxu0
          %v3239 = vpop.f32.mrf.mxu0
          %3240 = vdwg.mxu0
          %3241 = vmatprep.subr.bf16.mxu0 0
          %3242 = vmatpush1.bf16.msra.mxu0 %v2896
          %3243 = vmatprep.subr.bf16.mxu0 0
          %3244 = vmatpush1.bf16.msra.mxu0 %v2895
          %3245 = vmatprep.subr.bf16.mxu0 0
          %3246 = vmatpush1.bf16.msra.mxu0 %v2894
          %3247 = vmatprep.subr.bf16.mxu0 0
          %3248 = vmatpush1.bf16.msra.mxu0 %v2893
          %3249 = vmatprep.subr.bf16.mxu0 0
          %3250 = vmatpush1.bf16.msra.mxu0 %v2892
          %3251 = vmatprep.subr.bf16.mxu0 0
          %3252 = vmatpush1.bf16.msra.mxu0 %v2891
          %3253 = vmatprep.subr.bf16.mxu0 0
          %3254 = vmatpush1.bf16.msra.mxu0 %v2890
          %3255 = vmatprep.subr.bf16.mxu0 0
          %3256 = vmatpush1.bf16.msra.mxu0 %v2889
          %3257 = vmatprep.subr.bf16.mxu0 0
          %3258 = vmatpush2.bf16.msra.mxu0 %v2904
          %3259 = vmatprep.subr.bf16.mxu0 0
          %3260 = vmatpush2.bf16.msra.mxu0 %v2903
          %3261 = vmatprep.subr.bf16.mxu0 0
          %3262 = vmatpush2.bf16.msra.mxu0 %v2902
          %3263 = vmatprep.subr.bf16.mxu0 0
          %3264 = vmatpush2.bf16.msra.mxu0 %v2901
          %3265 = vmatprep.subr.bf16.mxu0 0
          %3266 = vmatpush2.bf16.msra.mxu0 %v2900
          %3267 = vmatprep.subr.bf16.mxu0 0
          %3268 = vmatpush2.bf16.msra.mxu0 %v2899
          %3269 = vmatprep.subr.bf16.mxu0 0
          %3270 = vmatpush2.bf16.msra.mxu0 %v2898
          %3271 = vmatprep.subr.bf16.mxu0 0
          %3272 = vmatpush2.bf16.msra.mxu0 %v2897
          %3273 = vmatprep.mubr.bf16.mxu0 %v2039
          %3274 = vmatmul.mubr.bf16.gmra.mxu0 %v2038
          %v3275 = vpop.f32.mrf.mxu0
          %v3276 = vadd.f32 %v3236, %v3275
          %v3277 = vpop.f32.mrf.mxu0
          %v3278 = vpop.f32.mrf.mxu0
          %v3279 = vpop.f32.mrf.mxu0
          %3280 = vdwg.mxu0
          %3281 = vmatprep.subr.bf16.mxu0 0
          %3282 = vmatpush1.bf16.msra.mxu0 %v2912
          %3283 = vmatprep.subr.bf16.mxu0 0
          %3284 = vmatpush1.bf16.msra.mxu0 %v2911
          %3285 = vmatprep.subr.bf16.mxu0 0
          %3286 = vmatpush1.bf16.msra.mxu0 %v2910
          %3287 = vmatprep.subr.bf16.mxu0 0
          %3288 = vmatpush1.bf16.msra.mxu0 %v2909
          %3289 = vmatprep.subr.bf16.mxu0 0
          %3290 = vmatpush1.bf16.msra.mxu0 %v2908
          %3291 = vmatprep.subr.bf16.mxu0 0
          %3292 = vmatpush1.bf16.msra.mxu0 %v2907
          %3293 = vmatprep.subr.bf16.mxu0 0
          %3294 = vmatpush1.bf16.msra.mxu0 %v2906
          %3295 = vmatprep.subr.bf16.mxu0 0
          %3296 = vmatpush1.bf16.msra.mxu0 %v2905
          %3297 = vmatprep.subr.bf16.mxu0 0
          %3298 = vmatpush2.bf16.msra.mxu0 %v2920
          %3299 = vmatprep.subr.bf16.mxu0 0
          %3300 = vmatpush2.bf16.msra.mxu0 %v2919
          %3301 = vmatprep.subr.bf16.mxu0 0
          %3302 = vmatpush2.bf16.msra.mxu0 %v2918
          %3303 = vmatprep.subr.bf16.mxu0 0
          %3304 = vmatpush2.bf16.msra.mxu0 %v2917
          %3305 = vmatprep.subr.bf16.mxu0 0
          %3306 = vmatpush2.bf16.msra.mxu0 %v2916
          %3307 = vmatprep.subr.bf16.mxu0 0
          %3308 = vmatpush2.bf16.msra.mxu0 %v2915
          %3309 = vmatprep.subr.bf16.mxu0 0
          %3310 = vmatpush2.bf16.msra.mxu0 %v2914
          %3311 = vmatprep.subr.bf16.mxu0 0
          %3312 = vmatpush2.bf16.msra.mxu0 %v2913
          %3313 = vmatprep.mubr.bf16.mxu0 %v2041
          %3314 = vmatmul.mubr.bf16.gmra.mxu0 %v2040
          %v3315 = vpop.f32.mrf.mxu0
          %v3316 = vadd.f32 %v3276, %v3315
          %v3317 = vpop.f32.mrf.mxu0
          %v3318 = vpop.f32.mrf.mxu0
          %v3319 = vpop.f32.mrf.mxu0
          %3320 = vdwg.mxu0
          %3321 = vmatprep.subr.bf16.mxu0 0
          %3322 = vmatpush1.bf16.msra.mxu0 %v2928
          %3323 = vmatprep.subr.bf16.mxu0 0
          %3324 = vmatpush1.bf16.msra.mxu0 %v2927
          %3325 = vmatprep.subr.bf16.mxu0 0
          %3326 = vmatpush1.bf16.msra.mxu0 %v2926
          %3327 = vmatprep.subr.bf16.mxu0 0
          %3328 = vmatpush1.bf16.msra.mxu0 %v2925
          %3329 = vmatprep.subr.bf16.mxu0 0
          %3330 = vmatpush1.bf16.msra.mxu0 %v2924
          %3331 = vmatprep.subr.bf16.mxu0 0
          %3332 = vmatpush1.bf16.msra.mxu0 %v2923
          %3333 = vmatprep.subr.bf16.mxu0 0
          %3334 = vmatpush1.bf16.msra.mxu0 %v2922
          %3335 = vmatprep.subr.bf16.mxu0 0
          %3336 = vmatpush1.bf16.msra.mxu0 %v2921
          %3337 = vmatprep.subr.bf16.mxu0 0
          %3338 = vmatpush2.bf16.msra.mxu0 %v2936
          %3339 = vmatprep.subr.bf16.mxu0 0
          %3340 = vmatpush2.bf16.msra.mxu0 %v2935
          %3341 = vmatprep.subr.bf16.mxu0 0
          %3342 = vmatpush2.bf16.msra.mxu0 %v2934
          %3343 = vmatprep.subr.bf16.mxu0 0
          %3344 = vmatpush2.bf16.msra.mxu0 %v2933
          %3345 = vmatprep.subr.bf16.mxu0 0
          %3346 = vmatpush2.bf16.msra.mxu0 %v2932
          %3347 = vmatprep.subr.bf16.mxu0 0
          %3348 = vmatpush2.bf16.msra.mxu0 %v2931
          %3349 = vmatprep.subr.bf16.mxu0 0
          %3350 = vmatpush2.bf16.msra.mxu0 %v2930
          %3351 = vmatprep.subr.bf16.mxu0 0
          %3352 = vmatpush2.bf16.msra.mxu0 %v2929
          %3353 = vmatprep.mubr.bf16.mxu0 %v2043
          %3354 = vmatmul.mubr.bf16.gmra.mxu0 %v2042
          %v3355 = vpop.f32.mrf.mxu0
          %v3356 = vadd.f32 %v3316, %v3355
          %v3357 = vpop.f32.mrf.mxu0
          %v3358 = vpop.f32.mrf.mxu0
          %v3359 = vpop.f32.mrf.mxu0
          %3360 = vdwg.mxu0
          %3361 = vmatprep.subr.bf16.mxu0 0
          %3362 = vmatpush1.bf16.msra.mxu0 %v2944
          %3363 = vmatprep.subr.bf16.mxu0 0
          %3364 = vmatpush1.bf16.msra.mxu0 %v2943
          %3365 = vmatprep.subr.bf16.mxu0 0
          %3366 = vmatpush1.bf16.msra.mxu0 %v2942
          %3367 = vmatprep.subr.bf16.mxu0 0
          %3368 = vmatpush1.bf16.msra.mxu0 %v2941
          %3369 = vmatprep.subr.bf16.mxu0 0
          %3370 = vmatpush1.bf16.msra.mxu0 %v2940
          %3371 = vmatprep.subr.bf16.mxu0 0
          %3372 = vmatpush1.bf16.msra.mxu0 %v2939
          %3373 = vmatprep.subr.bf16.mxu0 0
          %3374 = vmatpush1.bf16.msra.mxu0 %v2938
          %3375 = vmatprep.subr.bf16.mxu0 0
          %3376 = vmatpush1.bf16.msra.mxu0 %v2937
          %3377 = vmatprep.subr.bf16.mxu0 0
          %3378 = vmatpush2.bf16.msra.mxu0 %v2952
          %3379 = vmatprep.subr.bf16.mxu0 0
          %3380 = vmatpush2.bf16.msra.mxu0 %v2951
          %3381 = vmatprep.subr.bf16.mxu0 0
          %3382 = vmatpush2.bf16.msra.mxu0 %v2950
          %3383 = vmatprep.subr.bf16.mxu0 0
          %3384 = vmatpush2.bf16.msra.mxu0 %v2949
          %3385 = vmatprep.subr.bf16.mxu0 0
          %3386 = vmatpush2.bf16.msra.mxu0 %v2948
          %3387 = vmatprep.subr.bf16.mxu0 0
          %3388 = vmatpush2.bf16.msra.mxu0 %v2947
          %3389 = vmatprep.subr.bf16.mxu0 0
          %3390 = vmatpush2.bf16.msra.mxu0 %v2946
          %3391 = vmatprep.subr.bf16.mxu0 0
          %3392 = vmatpush2.bf16.msra.mxu0 %v2945
          %3393 = vmatprep.mubr.bf16.mxu0 %v2045
          %3394 = vmatmul.mubr.bf16.gmra.mxu0 %v2044
          %v3395 = vpop.f32.mrf.mxu0
          %v3396 = vadd.f32 %v3356, %v3395
          %v3397 = vpop.f32.mrf.mxu0
          %v3398 = vpop.f32.mrf.mxu0
          %v3399 = vpop.f32.mrf.mxu0
          %3400 = vdwg.mxu0
          %v3401 = vadd.f32 %v1400, %v3396
          %s3402 = scalar_lea.vmem %s16, %s629
          %v3403 = vld [vmem:[%s3402] sm:$0x1]
          %s3404 = scalar_lea.vmem %s17, %s629
          %v3405 = vld [vmem:[%s3404] sm:$0x1]
          %v3406 = vsel %vm663, %v3401, 0.0
          %3407 = vadd.xlane.f32.xlu0 %v3406
          %v3408 = vpop.xlane.xlu0 %3407
          %v3409 = vmul.f32 %v3408, %v1376
          %v3410 = vsub.f32 %v3401, %v3409
          %v3411 = vmul.f32 %v3410, %v3410
          %v3412 = vsel %vm663, %v3411, 0.0
          %3413 = vadd.xlane.f32.xlu0 %v3412
          %v3414 = vpop.xlane.xlu0 %3413
          %v3415 = vmul.f32 %v3414, %v1376
          %v3416 = vadd.f32 %v3415, 1e-05
          %v3417 = vrsqrt.pop %v3416
          %v3418 = vmul.f32 %v3410, %v3417
          %v3420 = vlaneseq
          %v3421 = vshrl.u32 %v3420, 7
          %v3422 = vsub.s32 0, %v3421
          %v3423 = vrot.slane %v3403, %v3422
          %v3425 = vmul.f32 %v3418, %v3423
          %v3427 = vlaneseq
          %v3428 = vshrl.u32 %v3427, 7
          %v3429 = vsub.s32 0, %v3428
          %v3430 = vrot.slane %v3405, %v3429
          %v3432 = vadd.f32 %v3425, %v3430
        $region105: #{tpu_custom_call.1} parent=99 // loop_footer
          %s633 = sadd.s32 1, %s629
        $region106: #{tpu_custom_call.1} parent=99 // loop_footer_branch
          %628 = sbr.rel target = $region102
        $region107: #{tpu_custom_call.1} parent=99 // loop_exit
          _
        %vm3433 = vcmask 261120
        %v3434 = vsel %vm3433, %v634, 0.0
        %v3435 = vrot.slane %v3434, 4
        %v3436 = vadd.f32 %v3434, %v3435
        %v3437 = vrot.slane %v3436, 2
        %v3438 = vadd.f32 %v3436, %v3437
        %v3439 = vrot.slane %v3438, 1
        %v3440 = vadd.f32 %v3438, %v3439
        %v3441 = vpack.c.bf16 %v3440, %v3440
        %v3442 = vld [vmem:[%s18] sm:$0xf]
        %v3443 = vld [vmem:[%s18 + $0x4] sm:$0xf]
        %v3444 = vld [vmem:[%s18 + $0x8] sm:$0xf]
        %v3445 = vld [vmem:[%s18 + $0xc] sm:$0xf]
        %v3446 = vld [vmem:[%s19] sm:$0x1]
        %v3451 = vunpack.c.l.b16 %v3442
        %v3452 = vunpack.c.l.b16 %v3443
        %v3453 = vunpack.c.l.b16 %v3444
        %v3454 = vunpack.c.l.b16 %v3445
        %v3455 = vpack.c.b16 %v3452, %v3451
        %v3456 = vpack.c.b16 %v3454, %v3453
        %v3460 = vsel %vm3433, %v3441, 0
        %3462 = vmatprep.subr.bf16.mxu0 0
        %3463 = vmatpush1.bf16.msra.mxu0 0
        %3464 = vmatprep.subr.bf16.mxu0 0
        %3465 = vmatpush1.bf16.msra.mxu0 0
        %3466 = vmatprep.subr.bf16.mxu0 0
        %3467 = vmatpush1.bf16.msra.mxu0 0
        %3468 = vmatprep.subr.bf16.mxu0 0
        %3469 = vmatpush1.bf16.msra.mxu0 0
        %3470 = vmatprep.subr.bf16.mxu0 0
        %3471 = vmatpush1.bf16.msra.mxu0 0
        %3472 = vmatprep.subr.bf16.mxu0 0
        %3473 = vmatpush1.bf16.msra.mxu0 0
        %3474 = vmatprep.subr.bf16.mxu0 0
        %3475 = vmatpush1.bf16.msra.mxu0 %v3456
        %3476 = vmatprep.subr.bf16.mxu0 0
        %3477 = vmatpush1.bf16.msra.mxu0 %v3455
        %3478 = vmatprep.subr.bf16.mxu0 0
        %3479 = vmatpush2.bf16.msra.mxu0 0
        %3480 = vmatprep.subr.bf16.mxu0 0
        %3481 = vmatpush2.bf16.msra.mxu0 0
        %3482 = vmatprep.subr.bf16.mxu0 0
        %3483 = vmatpush2.bf16.msra.mxu0 0
        %3484 = vmatprep.subr.bf16.mxu0 0
        %3485 = vmatpush2.bf16.msra.mxu0 0
        %3486 = vmatprep.subr.bf16.mxu0 0
        %3487 = vmatpush2.bf16.msra.mxu0 0
        %3488 = vmatprep.subr.bf16.mxu0 0
        %3489 = vmatpush2.bf16.msra.mxu0 0
        %3490 = vmatprep.subr.bf16.mxu0 0
        %3491 = vmatpush2.bf16.msra.mxu0 0
        %3492 = vmatprep.subr.bf16.mxu0 0
        %3493 = vmatpush2.bf16.msra.mxu0 0
        %3494 = vmatprep.mubr.bf16.mxu0 0
        %3495 = vmatmul.mubr.bf16.gmra.mxu0 %v3460
        %v3496 = vpop.f32.mrf.mxu0
        %v3497 = vadd.f32 %v3446, %v3496
        %v3498 = vpop.f32.mrf.mxu0
        %v3499 = vpop.f32.mrf.mxu0
        %v3500 = vpop.f32.mrf.mxu0
        %3501 = vdwg.mxu0
        %3502 = vst [vmem:[%s619] sm:$0x1] %v3497
        %s3503 = sand.u32 %s467, 1
        %s3504 = scalar_lea.sflag [#allocation3], %s3503
        %s3505 = sand.u32 %s467, 1
        %s3506 = scalar_lea.vmem [#allocation2], %s3505
        // Predicated region
        $region108: #{tpu_custom_call.1} parent=99 // pred_check
          %p3507 = pneg %p477
        $region109: #{tpu_custom_call.1} parent=99 // pred_check_branch
          %3509 = sbr.rel (%p3507) target = $region111
        $region110: #{tpu_custom_call.1} parent=99 // pred_region
          %s3511 = ssub.s32 16, 16
          %3512 = vsyncadd %s3504, %s3511
          %s3513 = smul.addr %s34, 16
          %s3514 = scalar_lea.hbm %s20, %s3513
          %s3516 = sshll.u32 %s3506, 4
          %s3517 = int_to_ptr.vmem [resolvable:$true] %s3516
          %3519 = dma.vmem_to_hbm [thread:$0]  %s3517, 16, %s3514, %s3504
        $region111: #{tpu_custom_call.1} parent=99 // pred_fallthru
          _
      $region100: #{tpu_custom_call.1} parent=5 // pred_fallthru
        _
      %p3520 = scmp.le.s32.totalorder 2, %s29
      // Predicated region
      $region112: #{tpu_custom_call.1} parent=5 // pred_check
        %p3521 = pneg %p3520
      $region113: #{tpu_custom_call.1} parent=5 // pred_check_branch
        %3523 = sbr.rel (%p3521) target = $region115
      $region114: #{tpu_custom_call.1} parent=5 // pred_region
        %s3524 = ssub.s32 %s29, 2
        // Predicated region
        $region116: #{tpu_custom_call.1} parent=114 // pred_check
          %p3525 = pneg %p483
        $region117: #{tpu_custom_call.1} parent=114 // pred_check_branch
          %3527 = sbr.rel (%p3525) target = $region119
        $region118: #{tpu_custom_call.1} parent=114 // pred_region
          %s3528 = sand.u32 %s468, 1
          %s3529 = scalar_lea.sflag [#allocation3], %s3528
          %s3530 = sand.u32 %s468, 1
          %s3531 = scalar_lea.vmem [#allocation2], %s3530
          %3532 = dma.done %s3529, 16
        $region119: #{tpu_custom_call.1} parent=114 // pred_fallthru
          _
      $region115: #{tpu_custom_call.1} parent=5 // pred_fallthru
        _
    $region6: #{tpu_custom_call.1} parent=1 // loop_footer
      %s33 = sadd.s32 1, %s29
    $region7: #{tpu_custom_call.1} parent=1 // loop_footer_branch
      %28 = sbr.rel target = $region3
    $region8: #{tpu_custom_call.1} parent=1 // loop_exit
      _
    %3533 = vsyncpa [#allocation3], 1
    %s3534 = scalar_lea.sflag [#allocation3], 1
    %3535 = vsyncpa %s3534, 1

</llo_original>
